<compile_context>
chip_gen: v5e
topology: v5e:2x2
jax: 0.10.0
libtpu: 0.0.40
codegen_flags: <defaults>
</compile_context>

<pallas_src>
import numpy as np

import jax
import jax.numpy as jnp
from jax import lax
from jax.experimental import pallas as pl
from jax.experimental.pallas import tpu as pltpu

TB = 8           # images processed per grid step
EPS = 1e-5       # BatchNorm eps (PyTorch default)
OUT_LANES = 128  # lane-dense padded logits width (valid logits = first 10)


# ---------------------------------------------------------------------------
# The fused kernel: one grid step = TB images, everything in VMEM.
# ---------------------------------------------------------------------------
def _fused_cnn_kernel(x_ref,
                      wb1, sf1, sel1, s21,
                      wb2, sf2, sel2, s22,
                      wb3, sf3, sel3,
                      w1s, shsel, b1, w2t, b2,
                      out_ref):
    f32 = jnp.float32

    def conv(slab, rows, wb_ref, shift_ref):
        # 3x3 conv (pad=1) + folded BN + ReLU: 3 row-shifted banded matmuls.
        acc = jnp.dot(slab[0:rows, :], wb_ref[0], preferred_element_type=f32)
        acc = acc + jnp.dot(slab[1:rows + 1, :], wb_ref[1], preferred_element_type=f32)
        acc = acc + jnp.dot(slab[2:rows + 2, :], wb_ref[2], preferred_element_type=f32)
        return jnp.maximum(acc + shift_ref[...], 0.0)

    def pool_w(out, sel_ref, o_ch):
        # MaxPool 2x2: h-direction row-shift max, w-direction lane-shift max,
        # then ONE 0/1 selection matmul that also lays columns out for the next
        # stage (re-pad for the next conv, or channel-major flatten at the end).
        mh = jnp.maximum(out[:-1, :], out[1:, :])
        mw = jnp.maximum(mh[:, :mh.shape[1] - o_ch], mh[:, o_ch:])
        return jnp.dot(mw, sel_ref[...], preferred_element_type=f32)

    slab1 = x_ref[0]                                                 # (TB*30+8, 30)

    out1 = conv(slab1, TB * 30, wb1, sf1)                            # (TB*30, 28*8)
    slab2 = jnp.dot(s21[...], pool_w(out1, sel1, 8),
                    preferred_element_type=f32)                      # (TB*16+2, 16*8)

    # TODO(synk): Dropout(0.2) is identity at inference; training-mode masking
    #             (and BatchNorm batch statistics) are not implemented.
    out2 = conv(slab2, TB * 16, wb2, sf2)                            # (TB*16, 14*16)
    slab3 = jnp.dot(s22[...], pool_w(out2, sel2, 16),
                    preferred_element_type=f32)                      # (TB*9+2, 9*16)

    out3 = conv(slab3, TB * 9, wb3, sf3)                             # (TB*9, 7*24)
    mw3 = pool_w(out3, sel3, 24)                                     # (TB*9-1, 24*3)

    # fc1 (pre-permuted so rows match the pooled (c*3+wo) layout); the three
    # 0/1 row selections pick pooled row ho of each image and sum over ho.
    y3 = jnp.dot(mw3, w1s[...], preferred_element_type=f32)          # (TB*9-1, 3*32)
    h = (jnp.dot(shsel[0], y3[:, 0:32], preferred_element_type=f32)
         + jnp.dot(shsel[1], y3[:, 32:64], preferred_element_type=f32)
         + jnp.dot(shsel[2], y3[:, 64:96], preferred_element_type=f32))
    h = jnp.maximum(h + b1[...], 0.0)                                # (TB, 32)
    # TODO(synk): Dropout(0.3) is identity at inference.
    out_ref[...] = (jnp.dot(h, w2t[...], preferred_element_type=f32)
                    + b2[...]).astype(out_ref.dtype)                 # (TB, 128) lane-dense


# ---------------------------------------------------------------------------
# Host-side constant preparation (all tiny; param-dependent parts are pure jnp
# so the whole wrapper can be jitted).
# ---------------------------------------------------------------------------
def _conv_banded_weights(w_oihw, conv_b, bn, H, W):
    """Fold conv bias + BatchNorm(eval) into banded matmul operands.

    Returns wb: (3, (W+2)*Cin, W*Cout) with wb[dh, wp*Cin+c, w*Cout+o]
    = scale[o]*K[o,c,dh,wp-w] (0 outside the 3-tap band), and the additive
    row shift (1, W*Cout)."""
    gamma, beta, mean, var = bn
    Wp = W + 2
    scale = gamma / jnp.sqrt(var + EPS)                           # (O,)
    shift = (conv_b - mean) * scale + beta                        # (O,)
    wsc = w_oihw.astype(jnp.float32) * scale[:, None, None, None]  # (O,C,3,3)
    bands = []
    for dh in range(3):
        m = 0.0
        for dw in range(3):
            m = m + jnp.kron(jnp.eye(Wp, W, -dw, dtype=jnp.float32),
                             jnp.transpose(wsc[:, :, dh, dw]))    # (Wp*C, W*O)
        bands.append(m)
    wb = jnp.stack(bands)                                         # (3, Wp*C, W*O)
    shift_row = jnp.tile(shift.astype(jnp.float32), (W,))[None, :]  # (1, W*O)
    return wb, shift_row


def _pool_select_pad(W, O, Wo):
    """((W-1)*O, (Wo+2)*O) 0/1: w-pool gather (post lane-shift max) + re-pad."""
    wp2 = Wo + 2
    sel = np.zeros(((W - 1) * O, wp2 * O), np.float32)
    for wo in range(Wo):
        for o in range(O):
            sel[(2 * wo) * O + o, (wo + 1) * O + o] = 1.0
    return jnp.asarray(sel)


def _pool_select_flatten(W, O, Wo):
    """((W-1)*O, O*Wo) 0/1: final w-pool gather into channel-major (c*Wo+wo)."""
    sel = np.zeros(((W - 1) * O, O * Wo), np.float32)
    for wo in range(Wo):
        for o in range(O):
            sel[(2 * wo) * O + o, o * Wo + wo] = 1.0
    return jnp.asarray(sel)


def _row_compact_pad(hp_in, hp_out, ho_count):
    """(TB*hp_out+2, TB*hp_in-1) 0/1: h-direction pool row gather + re-pad."""
    s2 = np.zeros((TB * hp_out + 2, TB * hp_in - 1), np.float32)
    for n in range(TB):
        for ho in range(ho_count):
            s2[n * hp_out + 1 + ho, n * hp_in + 2 * ho] = 1.0
    return jnp.asarray(s2)


def _fc1_row_select():
    """(3, TB, TB*9-1) 0/1: picks pooled row ho of each image for the fc1 sum."""
    sh = np.zeros((3, TB, TB * 9 - 1), np.float32)
    for ho in range(3):
        for n in range(TB):
            sh[ho, n, n * 9 + 2 * ho] = 1.0
    return jnp.asarray(sh)


# ---------------------------------------------------------------------------
# Full forward pass (input NCHW, parameters in PyTorch layout).
# ---------------------------------------------------------------------------
def mnist_cnn_forward(x_nchw, params):
    N = x_nchw.shape[0]
    G = (N + TB - 1) // TB
    npad = G * TB

    # Single cheap input prep: conv-1 zero padding + batch padding + per-tile
    # margin rows (so the in-kernel row-shifted taps never go out of bounds).
    x = x_nchw.reshape(N, 28, 28).astype(jnp.float32)
    x = jnp.pad(x, ((0, npad - N), (1, 1), (1, 1)))              # (npad, 30, 30)
    x = x.reshape(G, TB * 30, 30)
    x = jnp.pad(x, ((0, 0), (0, 8), (0, 0)))                     # (G, TB*30+8, 30)

    # Folded conv+BN weights (BN scale folded into the matmul, bias+BN into shift).
    wb1, sf1 = _conv_banded_weights(params["conv1_w"], params["conv1_b"], params["bn1"], 28, 28)
    wb2, sf2 = _conv_banded_weights(params["conv2_w"], params["conv2_b"], params["bn2"], 14, 14)
    wb3, sf3 = _conv_banded_weights(params["conv3_w"], params["conv3_b"], params["bn3"], 7, 7)

    # Structural 0/1 pooling / repacking matrices (parameter independent).
    sel1 = _pool_select_pad(28, 8, 14)       # (216, 128)
    sel2 = _pool_select_pad(14, 16, 7)       # (208, 144)
    sel3 = _pool_select_flatten(7, 24, 3)    # (144, 72)
    s21 = _row_compact_pad(30, 16, 14)
    s22 = _row_compact_pad(16, 9, 7)
    shsel = _fc1_row_select()

    # fc1 weight (32, 216) regrouped so rows match the kernel's (c*3+wo) layout
    # and columns are (ho, out) pairs; exactly reproduces nn.Flatten on NCHW.
    w1s = jnp.transpose(params["fc1_w"].astype(jnp.float32).reshape(32, 24, 3, 3),
                        (1, 3, 2, 0)).reshape(72, 96)
    b1 = params["fc1_b"].astype(jnp.float32)[None, :]
    # fc2 weight/bias zero-padded to 128 lanes for unmasked lane-dense stores.
    w2t = jnp.zeros((32, OUT_LANES), jnp.float32).at[:, :10].set(
        jnp.transpose(params["fc2_w"].astype(jnp.float32)))
    b2 = jnp.zeros((1, OUT_LANES), jnp.float32).at[:, :10].set(
        params["fc2_b"].astype(jnp.float32))

    consts = (wb1, sf1, sel1, s21,
              wb2, sf2, sel2, s22,
              wb3, sf3, sel3,
              w1s, shsel, b1, w2t, b2)

    def const_spec(a):
        nd = a.ndim
        return pl.BlockSpec(a.shape, lambda t, _nd=nd: (0,) * _nd)

    out = pl.pallas_call(
        _fused_cnn_kernel,
        out_shape=jax.ShapeDtypeStruct((npad, OUT_LANES), jnp.float32),
        grid=(G,),
        in_specs=[pl.BlockSpec((1, TB * 30 + 8, 30), lambda t: (t, 0, 0))]
                 + [const_spec(a) for a in consts],
        out_specs=pl.BlockSpec((TB, OUT_LANES), lambda t: (t, 0)),
        compiler_params=pltpu.CompilerParams(
            dimension_semantics=("parallel",),
            vmem_limit_bytes=32 * 1024 * 1024),
    )(x, *consts)
    return out[:N, :10]


# ---------------------------------------------------------------------------
# Pure JAX/XLA reference (same semantics as the PyTorch module in eval mode).
# ---------------------------------------------------------------------------
def reference_forward(x_nchw, params):
    hp = lax.Precision.HIGHEST

    def conv_bn_relu(x, w, b, bn):
        gamma, beta, mean, var = bn
        y = lax.conv_general_dilated(
            x, w, window_strides=(1, 1), padding=((1, 1), (1, 1)),
            dimension_numbers=("NCHW", "OIHW", "NCHW"), precision=hp)
        y = y + b[None, :, None, None]
        y = ((y - mean[None, :, None, None])
             / jnp.sqrt(var[None, :, None, None] + EPS)
             * gamma[None, :, None, None] + beta[None, :, None, None])
        return jnp.maximum(y, 0.0)

    def pool(x):
        return lax.reduce_window(x, -jnp.inf, lax.max,
                                 (1, 1, 2, 2), (1, 1, 2, 2), "VALID")

    x = x_nchw.astype(jnp.float32)
    x = pool(conv_bn_relu(x, params["conv1_w"], params["conv1_b"], params["bn1"]))
    x = pool(conv_bn_relu(x, params["conv2_w"], params["conv2_b"], params["bn2"]))
    x = pool(conv_bn_relu(x, params["conv3_w"], params["conv3_b"], params["bn3"]))
    feats = x.reshape(x.shape[0], -1)                             # NCHW flatten -> (N, 216)
    h = jnp.maximum(jnp.dot(feats, params["fc1_w"].T, precision=hp) + params["fc1_b"], 0.0)
    return jnp.dot(h, params["fc2_w"].T, precision=hp) + params["fc2_b"]


# ---------------------------------------------------------------------------
# Deterministic synthetic parameters (PyTorch layouts: OIHW conv, (out,in) fc).
# ---------------------------------------------------------------------------
def init_params(key):
    ks = jax.random.split(key, 13)

    def conv_w(k, cout, cin):
        return jax.random.normal(k, (cout, cin, 3, 3), jnp.float32) / jnp.sqrt(cin * 9.0)

    def bn_params(k, c):
        k1, k2, k3, k4 = jax.random.split(k, 4)
        return (1.0 + 0.1 * jax.random.normal(k1, (c,), jnp.float32),   # gamma
                0.1 * jax.random.normal(k2, (c,), jnp.float32),         # beta
                0.1 * jax.random.normal(k3, (c,), jnp.float32),         # running_mean
                jax.random.uniform(k4, (c,), jnp.float32, 0.5, 1.5))    # running_var

    return dict(
        conv1_w=conv_w(ks[0], 8, 1),
        conv1_b=0.05 * jax.random.normal(ks[1], (8,), jnp.float32),
        bn1=bn_params(ks[2], 8),
        conv2_w=conv_w(ks[3], 16, 8),
        conv2_b=0.05 * jax.random.normal(ks[4], (16,), jnp.float32),
        bn2=bn_params(ks[5], 16),
        conv3_w=conv_w(ks[6], 24, 16),
        conv3_b=0.05 * jax.random.normal(ks[7], (24,), jnp.float32),
        bn3=bn_params(ks[8], 24),
        fc1_w=jax.random.normal(ks[9], (32, 216), jnp.float32) / jnp.sqrt(216.0),
        fc1_b=0.05 * jax.random.normal(ks[10], (32,), jnp.float32),
        fc2_w=jax.random.normal(ks[11], (10, 32), jnp.float32) / jnp.sqrt(32.0),
        fc2_b=0.05 * jax.random.normal(ks[12], (10,), jnp.float32),
    )


if __name__ == "__main__":
    key = jax.random.PRNGKey(0)
    pkey, xkey = jax.random.split(key)
    params = init_params(pkey)
    # MNIST-sized input (NCHW) — Flatten -> Linear(216, 32) requires 28x28 spatial.
    x = jax.random.normal(xkey, (2, 1, 28, 28), jnp.float32)

    logits = jax.jit(mnist_cnn_forward)(x, params)
    logits = jax.block_until_ready(logits)

    assert logits.shape == (2, 10), logits.shape
    assert bool(jnp.all(jnp.isfinite(logits)))

    ref = reference_forward(x, params)
    err = float(jnp.max(jnp.abs(logits - ref)))
    assert err < 5e-2, f"max |pallas - reference| = {err}"

    print("KERNEL_OK")
</pallas_src>

<mosaic_0001>
module attributes {stable_mosaic.version = 11 : i64} {
  func.func @_fused_cnn_kernel(%arg0: i32, %arg1: memref<1x248x30xf32, #tpu.memory_space<vmem>>, %arg2: memref<3x30x224xf32, #tpu.memory_space<vmem>>, %arg3: memref<1x224xf32, #tpu.memory_space<vmem>>, %arg4: memref<216x128xf32, #tpu.memory_space<vmem>>, %arg5: memref<130x239xf32, #tpu.memory_space<vmem>>, %arg6: memref<3x128x224xf32, #tpu.memory_space<vmem>>, %arg7: memref<1x224xf32, #tpu.memory_space<vmem>>, %arg8: memref<208x144xf32, #tpu.memory_space<vmem>>, %arg9: memref<74x127xf32, #tpu.memory_space<vmem>>, %arg10: memref<3x144x168xf32, #tpu.memory_space<vmem>>, %arg11: memref<1x168xf32, #tpu.memory_space<vmem>>, %arg12: memref<144x72xf32, #tpu.memory_space<vmem>>, %arg13: memref<72x96xf32, #tpu.memory_space<vmem>>, %arg14: memref<3x8x71xf32, #tpu.memory_space<vmem>>, %arg15: memref<1x32xf32, #tpu.memory_space<vmem>>, %arg16: memref<32x128xf32, #tpu.memory_space<vmem>>, %arg17: memref<1x128xf32, #tpu.memory_space<vmem>>, %arg18: memref<8x128xf32, #tpu.memory_space<vmem>>) attributes {dimension_semantics = [#tpu.dimension_semantics<parallel>], iteration_bounds = array<i64: 1>, scalar_prefetch = 0 : i64, scratch_operands = 0 : i64, tpu.core_type = #tpu.core_type<tc>, window_params = [{transform_indices = @transform_0, window_bounds = array<i64: 1, 248, 30>}, {pipeline_mode = #tpu.pipeline_mode<synchronous>, transform_indices = @transform_1, window_bounds = array<i64: 3, 30, 224>}, {pipeline_mode = #tpu.pipeline_mode<synchronous>, transform_indices = @transform_2, window_bounds = array<i64: 1, 224>}, {pipeline_mode = #tpu.pipeline_mode<synchronous>, transform_indices = @transform_3, window_bounds = array<i64: 216, 128>}, {pipeline_mode = #tpu.pipeline_mode<synchronous>, transform_indices = @transform_4, window_bounds = array<i64: 130, 239>}, {pipeline_mode = #tpu.pipeline_mode<synchronous>, transform_indices = @transform_5, window_bounds = array<i64: 3, 128, 224>}, {pipeline_mode = #tpu.pipeline_mode<synchronous>, transform_indices = @transform_6, window_bounds = array<i64: 1, 224>}, {pipeline_mode = #tpu.pipeline_mode<synchronous>, transform_indices = @transform_7, window_bounds = array<i64: 208, 144>}, {pipeline_mode = #tpu.pipeline_mode<synchronous>, transform_indices = @transform_8, window_bounds = array<i64: 74, 127>}, {pipeline_mode = #tpu.pipeline_mode<synchronous>, transform_indices = @transform_9, window_bounds = array<i64: 3, 144, 168>}, {pipeline_mode = #tpu.pipeline_mode<synchronous>, transform_indices = @transform_10, window_bounds = array<i64: 1, 168>}, {pipeline_mode = #tpu.pipeline_mode<synchronous>, transform_indices = @transform_11, window_bounds = array<i64: 144, 72>}, {pipeline_mode = #tpu.pipeline_mode<synchronous>, transform_indices = @transform_12, window_bounds = array<i64: 72, 96>}, {pipeline_mode = #tpu.pipeline_mode<synchronous>, transform_indices = @transform_13, window_bounds = array<i64: 3, 8, 71>}, {pipeline_mode = #tpu.pipeline_mode<synchronous>, transform_indices = @transform_14, window_bounds = array<i64: 1, 32>}, {pipeline_mode = #tpu.pipeline_mode<synchronous>, transform_indices = @transform_15, window_bounds = array<i64: 32, 128>}, {pipeline_mode = #tpu.pipeline_mode<synchronous>, transform_indices = @transform_16, window_bounds = array<i64: 1, 128>}, {transform_indices = @transform_17, window_bounds = array<i64: 8, 128>}]} {
    %c0 = arith.constant 0 : index
    %c0_0 = arith.constant 0 : index
    %c0_1 = arith.constant 0 : index
    %0 = vector.load %arg1[%c0, %c0_0, %c0_1] : memref<1x248x30xf32, #tpu.memory_space<vmem>>, vector<1x248x30xf32>
    %1 = vector.shape_cast %0 : vector<1x248x30xf32> to vector<248x30xf32>
    %2 = vector.extract_strided_slice %1 {offsets = [0, 0], sizes = [240, 30], strides = [1, 1]} : vector<248x30xf32> to vector<240x30xf32>
    %c0_2 = arith.constant 0 : index
    %c0_3 = arith.constant 0 : index
    %c0_4 = arith.constant 0 : index
    %3 = vector.load %arg2[%c0_2, %c0_3, %c0_4] : memref<3x30x224xf32, #tpu.memory_space<vmem>>, vector<1x30x224xf32>
    %4 = vector.shape_cast %3 : vector<1x30x224xf32> to vector<30x224xf32>
    %cst = arith.constant dense<0.000000e+00> : vector<240x224xf32>
    %5 = tpu.matmul %2, %4, %cst {dimension_numbers = #tpu.dot_dimension_numbers<[1], [0], [0], [1], [0, 0, 1, 1], [], []>} : vector<240x30xf32>, vector<30x224xf32>, vector<240x224xf32> -> vector<240x224xf32>
    %6 = vector.extract_strided_slice %1 {offsets = [1, 0], sizes = [240, 30], strides = [1, 1]} : vector<248x30xf32> to vector<240x30xf32>
    %c1 = arith.constant 1 : index
    %c0_5 = arith.constant 0 : index
    %c0_6 = arith.constant 0 : index
    %7 = vector.load %arg2[%c1, %c0_5, %c0_6] : memref<3x30x224xf32, #tpu.memory_space<vmem>>, vector<1x30x224xf32>
    %8 = vector.shape_cast %7 : vector<1x30x224xf32> to vector<30x224xf32>
    %cst_7 = arith.constant dense<0.000000e+00> : vector<240x224xf32>
    %9 = tpu.matmul %6, %8, %cst_7 {dimension_numbers = #tpu.dot_dimension_numbers<[1], [0], [0], [1], [0, 0, 1, 1], [], []>} : vector<240x30xf32>, vector<30x224xf32>, vector<240x224xf32> -> vector<240x224xf32>
    %10 = arith.addf %5, %9 : vector<240x224xf32>
    %11 = vector.extract_strided_slice %1 {offsets = [2, 0], sizes = [240, 30], strides = [1, 1]} : vector<248x30xf32> to vector<240x30xf32>
    %c2 = arith.constant 2 : index
    %c0_8 = arith.constant 0 : index
    %c0_9 = arith.constant 0 : index
    %12 = vector.load %arg2[%c2, %c0_8, %c0_9] : memref<3x30x224xf32, #tpu.memory_space<vmem>>, vector<1x30x224xf32>
    %13 = vector.shape_cast %12 : vector<1x30x224xf32> to vector<30x224xf32>
    %cst_10 = arith.constant dense<0.000000e+00> : vector<240x224xf32>
    %14 = tpu.matmul %11, %13, %cst_10 {dimension_numbers = #tpu.dot_dimension_numbers<[1], [0], [0], [1], [0, 0, 1, 1], [], []>} : vector<240x30xf32>, vector<30x224xf32>, vector<240x224xf32> -> vector<240x224xf32>
    %15 = arith.addf %10, %14 : vector<240x224xf32>
    %c0_11 = arith.constant 0 : index
    %c0_12 = arith.constant 0 : index
    %16 = vector.load %arg3[%c0_11, %c0_12] : memref<1x224xf32, #tpu.memory_space<vmem>>, vector<1x224xf32>
    %17 = vector.broadcast %16 : vector<1x224xf32> to vector<240x224xf32>
    %18 = arith.addf %15, %17 : vector<240x224xf32>
    %cst_13 = arith.constant 0.000000e+00 : f32
    %19 = vector.broadcast %cst_13 : f32 to vector<240x224xf32>
    %20 = arith.maximumf %18, %19 : vector<240x224xf32>
    %c0_14 = arith.constant 0 : index
    %c0_15 = arith.constant 0 : index
    %21 = vector.load %arg5[%c0_14, %c0_15] : memref<130x239xf32, #tpu.memory_space<vmem>>, vector<130x239xf32>
    %22 = vector.extract_strided_slice %20 {offsets = [0, 0], sizes = [239, 224], strides = [1, 1]} : vector<240x224xf32> to vector<239x224xf32>
    %23 = vector.extract_strided_slice %20 {offsets = [1, 0], sizes = [239, 224], strides = [1, 1]} : vector<240x224xf32> to vector<239x224xf32>
    %24 = arith.maximumf %22, %23 : vector<239x224xf32>
    %25 = vector.extract_strided_slice %24 {offsets = [0, 0], sizes = [239, 216], strides = [1, 1]} : vector<239x224xf32> to vector<239x216xf32>
    %26 = vector.extract_strided_slice %24 {offsets = [0, 8], sizes = [239, 216], strides = [1, 1]} : vector<239x224xf32> to vector<239x216xf32>
    %27 = arith.maximumf %25, %26 : vector<239x216xf32>
    %c0_16 = arith.constant 0 : index
    %c0_17 = arith.constant 0 : index
    %28 = vector.load %arg4[%c0_16, %c0_17] : memref<216x128xf32, #tpu.memory_space<vmem>>, vector<216x128xf32>
    %cst_18 = arith.constant dense<0.000000e+00> : vector<239x128xf32>
    %29 = tpu.matmul %27, %28, %cst_18 {dimension_numbers = #tpu.dot_dimension_numbers<[1], [0], [0], [1], [0, 0, 1, 1], [], []>} : vector<239x216xf32>, vector<216x128xf32>, vector<239x128xf32> -> vector<239x128xf32>
    %cst_19 = arith.constant dense<0.000000e+00> : vector<130x128xf32>
    %30 = tpu.matmul %21, %29, %cst_19 {dimension_numbers = #tpu.dot_dimension_numbers<[1], [0], [0], [1], [0, 0, 1, 1], [], []>} : vector<130x239xf32>, vector<239x128xf32>, vector<130x128xf32> -> vector<130x128xf32>
    %31 = vector.extract_strided_slice %30 {offsets = [0, 0], sizes = [128, 128], strides = [1, 1]} : vector<130x128xf32> to vector<128x128xf32>
    %c0_20 = arith.constant 0 : index
    %c0_21 = arith.constant 0 : index
    %c0_22 = arith.constant 0 : index
    %32 = vector.load %arg6[%c0_20, %c0_21, %c0_22] : memref<3x128x224xf32, #tpu.memory_space<vmem>>, vector<1x128x224xf32>
    %33 = vector.shape_cast %32 : vector<1x128x224xf32> to vector<128x224xf32>
    %cst_23 = arith.constant dense<0.000000e+00> : vector<128x224xf32>
    %34 = tpu.matmul %31, %33, %cst_23 {dimension_numbers = #tpu.dot_dimension_numbers<[1], [0], [0], [1], [0, 0, 1, 1], [], []>} : vector<128x128xf32>, vector<128x224xf32>, vector<128x224xf32> -> vector<128x224xf32>
    %35 = vector.extract_strided_slice %30 {offsets = [1, 0], sizes = [128, 128], strides = [1, 1]} : vector<130x128xf32> to vector<128x128xf32>
    %c1_24 = arith.constant 1 : index
    %c0_25 = arith.constant 0 : index
    %c0_26 = arith.constant 0 : index
    %36 = vector.load %arg6[%c1_24, %c0_25, %c0_26] : memref<3x128x224xf32, #tpu.memory_space<vmem>>, vector<1x128x224xf32>
    %37 = vector.shape_cast %36 : vector<1x128x224xf32> to vector<128x224xf32>
    %cst_27 = arith.constant dense<0.000000e+00> : vector<128x224xf32>
    %38 = tpu.matmul %35, %37, %cst_27 {dimension_numbers = #tpu.dot_dimension_numbers<[1], [0], [0], [1], [0, 0, 1, 1], [], []>} : vector<128x128xf32>, vector<128x224xf32>, vector<128x224xf32> -> vector<128x224xf32>
    %39 = arith.addf %34, %38 : vector<128x224xf32>
    %40 = vector.extract_strided_slice %30 {offsets = [2, 0], sizes = [128, 128], strides = [1, 1]} : vector<130x128xf32> to vector<128x128xf32>
    %c2_28 = arith.constant 2 : index
    %c0_29 = arith.constant 0 : index
    %c0_30 = arith.constant 0 : index
    %41 = vector.load %arg6[%c2_28, %c0_29, %c0_30] : memref<3x128x224xf32, #tpu.memory_space<vmem>>, vector<1x128x224xf32>
    %42 = vector.shape_cast %41 : vector<1x128x224xf32> to vector<128x224xf32>
    %cst_31 = arith.constant dense<0.000000e+00> : vector<128x224xf32>
    %43 = tpu.matmul %40, %42, %cst_31 {dimension_numbers = #tpu.dot_dimension_numbers<[1], [0], [0], [1], [0, 0, 1, 1], [], []>} : vector<128x128xf32>, vector<128x224xf32>, vector<128x224xf32> -> vector<128x224xf32>
    %44 = arith.addf %39, %43 : vector<128x224xf32>
    %c0_32 = arith.constant 0 : index
    %c0_33 = arith.constant 0 : index
    %45 = vector.load %arg7[%c0_32, %c0_33] : memref<1x224xf32, #tpu.memory_space<vmem>>, vector<1x224xf32>
    %46 = vector.broadcast %45 : vector<1x224xf32> to vector<128x224xf32>
    %47 = arith.addf %44, %46 : vector<128x224xf32>
    %cst_34 = arith.constant 0.000000e+00 : f32
    %48 = vector.broadcast %cst_34 : f32 to vector<128x224xf32>
    %49 = arith.maximumf %47, %48 : vector<128x224xf32>
    %c0_35 = arith.constant 0 : index
    %c0_36 = arith.constant 0 : index
    %50 = vector.load %arg9[%c0_35, %c0_36] : memref<74x127xf32, #tpu.memory_space<vmem>>, vector<74x127xf32>
    %51 = vector.extract_strided_slice %49 {offsets = [0, 0], sizes = [127, 224], strides = [1, 1]} : vector<128x224xf32> to vector<127x224xf32>
    %52 = vector.extract_strided_slice %49 {offsets = [1, 0], sizes = [127, 224], strides = [1, 1]} : vector<128x224xf32> to vector<127x224xf32>
    %53 = arith.maximumf %51, %52 : vector<127x224xf32>
    %54 = vector.extract_strided_slice %53 {offsets = [0, 0], sizes = [127, 208], strides = [1, 1]} : vector<127x224xf32> to vector<127x208xf32>
    %55 = vector.extract_strided_slice %53 {offsets = [0, 16], sizes = [127, 208], strides = [1, 1]} : vector<127x224xf32> to vector<127x208xf32>
    %56 = arith.maximumf %54, %55 : vector<127x208xf32>
    %c0_37 = arith.constant 0 : index
    %c0_38 = arith.constant 0 : index
    %57 = vector.load %arg8[%c0_37, %c0_38] : memref<208x144xf32, #tpu.memory_space<vmem>>, vector<208x144xf32>
    %cst_39 = arith.constant dense<0.000000e+00> : vector<127x144xf32>
    %58 = tpu.matmul %56, %57, %cst_39 {dimension_numbers = #tpu.dot_dimension_numbers<[1], [0], [0], [1], [0, 0, 1, 1], [], []>} : vector<127x208xf32>, vector<208x144xf32>, vector<127x144xf32> -> vector<127x144xf32>
    %cst_40 = arith.constant dense<0.000000e+00> : vector<74x144xf32>
    %59 = tpu.matmul %50, %58, %cst_40 {dimension_numbers = #tpu.dot_dimension_numbers<[1], [0], [0], [1], [0, 0, 1, 1], [], []>} : vector<74x127xf32>, vector<127x144xf32>, vector<74x144xf32> -> vector<74x144xf32>
    %60 = vector.extract_strided_slice %59 {offsets = [0, 0], sizes = [72, 144], strides = [1, 1]} : vector<74x144xf32> to vector<72x144xf32>
    %c0_41 = arith.constant 0 : index
    %c0_42 = arith.constant 0 : index
    %c0_43 = arith.constant 0 : index
    %61 = vector.load %arg10[%c0_41, %c0_42, %c0_43] : memref<3x144x168xf32, #tpu.memory_space<vmem>>, vector<1x144x168xf32>
    %62 = vector.shape_cast %61 : vector<1x144x168xf32> to vector<144x168xf32>
    %cst_44 = arith.constant dense<0.000000e+00> : vector<72x168xf32>
    %63 = tpu.matmul %60, %62, %cst_44 {dimension_numbers = #tpu.dot_dimension_numbers<[1], [0], [0], [1], [0, 0, 1, 1], [], []>} : vector<72x144xf32>, vector<144x168xf32>, vector<72x168xf32> -> vector<72x168xf32>
    %64 = vector.extract_strided_slice %59 {offsets = [1, 0], sizes = [72, 144], strides = [1, 1]} : vector<74x144xf32> to vector<72x144xf32>
    %c1_45 = arith.constant 1 : index
    %c0_46 = arith.constant 0 : index
    %c0_47 = arith.constant 0 : index
    %65 = vector.load %arg10[%c1_45, %c0_46, %c0_47] : memref<3x144x168xf32, #tpu.memory_space<vmem>>, vector<1x144x168xf32>
    %66 = vector.shape_cast %65 : vector<1x144x168xf32> to vector<144x168xf32>
    %cst_48 = arith.constant dense<0.000000e+00> : vector<72x168xf32>
    %67 = tpu.matmul %64, %66, %cst_48 {dimension_numbers = #tpu.dot_dimension_numbers<[1], [0], [0], [1], [0, 0, 1, 1], [], []>} : vector<72x144xf32>, vector<144x168xf32>, vector<72x168xf32> -> vector<72x168xf32>
    %68 = arith.addf %63, %67 : vector<72x168xf32>
    %69 = vector.extract_strided_slice %59 {offsets = [2, 0], sizes = [72, 144], strides = [1, 1]} : vector<74x144xf32> to vector<72x144xf32>
    %c2_49 = arith.constant 2 : index
    %c0_50 = arith.constant 0 : index
    %c0_51 = arith.constant 0 : index
    %70 = vector.load %arg10[%c2_49, %c0_50, %c0_51] : memref<3x144x168xf32, #tpu.memory_space<vmem>>, vector<1x144x168xf32>
    %71 = vector.shape_cast %70 : vector<1x144x168xf32> to vector<144x168xf32>
    %cst_52 = arith.constant dense<0.000000e+00> : vector<72x168xf32>
    %72 = tpu.matmul %69, %71, %cst_52 {dimension_numbers = #tpu.dot_dimension_numbers<[1], [0], [0], [1], [0, 0, 1, 1], [], []>} : vector<72x144xf32>, vector<144x168xf32>, vector<72x168xf32> -> vector<72x168xf32>
    %73 = arith.addf %68, %72 : vector<72x168xf32>
    %c0_53 = arith.constant 0 : index
    %c0_54 = arith.constant 0 : index
    %74 = vector.load %arg11[%c0_53, %c0_54] : memref<1x168xf32, #tpu.memory_space<vmem>>, vector<1x168xf32>
    %75 = vector.broadcast %74 : vector<1x168xf32> to vector<72x168xf32>
    %76 = arith.addf %73, %75 : vector<72x168xf32>
    %cst_55 = arith.constant 0.000000e+00 : f32
    %77 = vector.broadcast %cst_55 : f32 to vector<72x168xf32>
    %78 = arith.maximumf %76, %77 : vector<72x168xf32>
    %79 = vector.extract_strided_slice %78 {offsets = [0, 0], sizes = [71, 168], strides = [1, 1]} : vector<72x168xf32> to vector<71x168xf32>
    %80 = vector.extract_strided_slice %78 {offsets = [1, 0], sizes = [71, 168], strides = [1, 1]} : vector<72x168xf32> to vector<71x168xf32>
    %81 = arith.maximumf %79, %80 : vector<71x168xf32>
    %82 = vector.extract_strided_slice %81 {offsets = [0, 0], sizes = [71, 144], strides = [1, 1]} : vector<71x168xf32> to vector<71x144xf32>
    %83 = vector.extract_strided_slice %81 {offsets = [0, 24], sizes = [71, 144], strides = [1, 1]} : vector<71x168xf32> to vector<71x144xf32>
    %84 = arith.maximumf %82, %83 : vector<71x144xf32>
    %c0_56 = arith.constant 0 : index
    %c0_57 = arith.constant 0 : index
    %85 = vector.load %arg12[%c0_56, %c0_57] : memref<144x72xf32, #tpu.memory_space<vmem>>, vector<144x72xf32>
    %cst_58 = arith.constant dense<0.000000e+00> : vector<71x72xf32>
    %86 = tpu.matmul %84, %85, %cst_58 {dimension_numbers = #tpu.dot_dimension_numbers<[1], [0], [0], [1], [0, 0, 1, 1], [], []>} : vector<71x144xf32>, vector<144x72xf32>, vector<71x72xf32> -> vector<71x72xf32>
    %c0_59 = arith.constant 0 : index
    %c0_60 = arith.constant 0 : index
    %87 = vector.load %arg13[%c0_59, %c0_60] : memref<72x96xf32, #tpu.memory_space<vmem>>, vector<72x96xf32>
    %cst_61 = arith.constant dense<0.000000e+00> : vector<71x96xf32>
    %88 = tpu.matmul %86, %87, %cst_61 {dimension_numbers = #tpu.dot_dimension_numbers<[1], [0], [0], [1], [0, 0, 1, 1], [], []>} : vector<71x72xf32>, vector<72x96xf32>, vector<71x96xf32> -> vector<71x96xf32>
    %c0_62 = arith.constant 0 : index
    %c0_63 = arith.constant 0 : index
    %c0_64 = arith.constant 0 : index
    %89 = vector.load %arg14[%c0_62, %c0_63, %c0_64] : memref<3x8x71xf32, #tpu.memory_space<vmem>>, vector<1x8x71xf32>
    %90 = vector.shape_cast %89 : vector<1x8x71xf32> to vector<8x71xf32>
    %91 = vector.extract_strided_slice %88 {offsets = [0, 0], sizes = [71, 32], strides = [1, 1]} : vector<71x96xf32> to vector<71x32xf32>
    %cst_65 = arith.constant dense<0.000000e+00> : vector<8x32xf32>
    %92 = tpu.matmul %90, %91, %cst_65 {dimension_numbers = #tpu.dot_dimension_numbers<[1], [0], [0], [1], [0, 0, 1, 1], [], []>} : vector<8x71xf32>, vector<71x32xf32>, vector<8x32xf32> -> vector<8x32xf32>
    %c1_66 = arith.constant 1 : index
    %c0_67 = arith.constant 0 : index
    %c0_68 = arith.constant 0 : index
    %93 = vector.load %arg14[%c1_66, %c0_67, %c0_68] : memref<3x8x71xf32, #tpu.memory_space<vmem>>, vector<1x8x71xf32>
    %94 = vector.shape_cast %93 : vector<1x8x71xf32> to vector<8x71xf32>
    %95 = vector.extract_strided_slice %88 {offsets = [0, 32], sizes = [71, 32], strides = [1, 1]} : vector<71x96xf32> to vector<71x32xf32>
    %cst_69 = arith.constant dense<0.000000e+00> : vector<8x32xf32>
    %96 = tpu.matmul %94, %95, %cst_69 {dimension_numbers = #tpu.dot_dimension_numbers<[1], [0], [0], [1], [0, 0, 1, 1], [], []>} : vector<8x71xf32>, vector<71x32xf32>, vector<8x32xf32> -> vector<8x32xf32>
    %97 = arith.addf %92, %96 : vector<8x32xf32>
    %c2_70 = arith.constant 2 : index
    %c0_71 = arith.constant 0 : index
    %c0_72 = arith.constant 0 : index
    %98 = vector.load %arg14[%c2_70, %c0_71, %c0_72] : memref<3x8x71xf32, #tpu.memory_space<vmem>>, vector<1x8x71xf32>
    %99 = vector.shape_cast %98 : vector<1x8x71xf32> to vector<8x71xf32>
    %100 = vector.extract_strided_slice %88 {offsets = [0, 64], sizes = [71, 32], strides = [1, 1]} : vector<71x96xf32> to vector<71x32xf32>
    %cst_73 = arith.constant dense<0.000000e+00> : vector<8x32xf32>
    %101 = tpu.matmul %99, %100, %cst_73 {dimension_numbers = #tpu.dot_dimension_numbers<[1], [0], [0], [1], [0, 0, 1, 1], [], []>} : vector<8x71xf32>, vector<71x32xf32>, vector<8x32xf32> -> vector<8x32xf32>
    %102 = arith.addf %97, %101 : vector<8x32xf32>
    %c0_74 = arith.constant 0 : index
    %c0_75 = arith.constant 0 : index
    %103 = vector.load %arg15[%c0_74, %c0_75] : memref<1x32xf32, #tpu.memory_space<vmem>>, vector<1x32xf32>
    %104 = vector.broadcast %103 : vector<1x32xf32> to vector<8x32xf32>
    %105 = arith.addf %102, %104 : vector<8x32xf32>
    %cst_76 = arith.constant 0.000000e+00 : f32
    %106 = vector.broadcast %cst_76 : f32 to vector<8x32xf32>
    %107 = arith.maximumf %105, %106 : vector<8x32xf32>
    %c0_77 = arith.constant 0 : index
    %c0_78 = arith.constant 0 : index
    %108 = vector.load %arg16[%c0_77, %c0_78] : memref<32x128xf32, #tpu.memory_space<vmem>>, vector<32x128xf32>
    %cst_79 = arith.constant dense<0.000000e+00> : vector<8x128xf32>
    %109 = tpu.matmul %107, %108, %cst_79 {dimension_numbers = #tpu.dot_dimension_numbers<[1], [0], [0], [1], [0, 0, 1, 1], [], []>} : vector<8x32xf32>, vector<32x128xf32>, vector<8x128xf32> -> vector<8x128xf32>
    %c0_80 = arith.constant 0 : index
    %c0_81 = arith.constant 0 : index
    %110 = vector.load %arg17[%c0_80, %c0_81] : memref<1x128xf32, #tpu.memory_space<vmem>>, vector<1x128xf32>
    %111 = vector.broadcast %110 : vector<1x128xf32> to vector<8x128xf32>
    %112 = arith.addf %109, %111 : vector<8x128xf32>
    %c0_82 = arith.constant 0 : index
    %c0_83 = arith.constant 0 : index
    %113 = vector.load %arg18[%c0_82, %c0_83] : memref<8x128xf32, #tpu.memory_space<vmem>>, vector<8x128xf32>
    tpu.vector_store %arg18[%c0_82, %c0_83], %112 {strides = array<i32>} : memref<8x128xf32, #tpu.memory_space<vmem>>, vector<8x128xf32>,
    return
  }
  func.func @transform_0(%arg0: i32) -> (i32, i32, i32) {
    %c0_i32 = arith.constant 0 : i32
    %c0_i32_0 = arith.constant 0 : i32
    %c0_i32_1 = arith.constant 0 : i32
    return %arg0, %c0_i32, %c0_i32_0 : i32, i32, i32
  }
  func.func @transform_1(%arg0: i32) -> (i32, i32, i32) {
    %c0_i32 = arith.constant 0 : i32
    %c0_i32_0 = arith.constant 0 : i32
    %c0_i32_1 = arith.constant 0 : i32
    %c0_i32_2 = arith.constant 0 : i32
    return %c0_i32, %c0_i32_0, %c0_i32_1 : i32, i32, i32
  }
  func.func @transform_2(%arg0: i32) -> (i32, i32) {
    %c0_i32 = arith.constant 0 : i32
    %c0_i32_0 = arith.constant 0 : i32
    %c0_i32_1 = arith.constant 0 : i32
    return %c0_i32, %c0_i32_0 : i32, i32
  }
  func.func @transform_3(%arg0: i32) -> (i32, i32) {
    %c0_i32 = arith.constant 0 : i32
    %c0_i32_0 = arith.constant 0 : i32
    %c0_i32_1 = arith.constant 0 : i32
    return %c0_i32, %c0_i32_0 : i32, i32
  }
  func.func @transform_4(%arg0: i32) -> (i32, i32) {
    %c0_i32 = arith.constant 0 : i32
    %c0_i32_0 = arith.constant 0 : i32
    %c0_i32_1 = arith.constant 0 : i32
    return %c0_i32, %c0_i32_0 : i32, i32
  }
  func.func @transform_5(%arg0: i32) -> (i32, i32, i32) {
    %c0_i32 = arith.constant 0 : i32
    %c0_i32_0 = arith.constant 0 : i32
    %c0_i32_1 = arith.constant 0 : i32
    %c0_i32_2 = arith.constant 0 : i32
    return %c0_i32, %c0_i32_0, %c0_i32_1 : i32, i32, i32
  }
  func.func @transform_6(%arg0: i32) -> (i32, i32) {
    %c0_i32 = arith.constant 0 : i32
    %c0_i32_0 = arith.constant 0 : i32
    %c0_i32_1 = arith.constant 0 : i32
    return %c0_i32, %c0_i32_0 : i32, i32
  }
  func.func @transform_7(%arg0: i32) -> (i32, i32) {
    %c0_i32 = arith.constant 0 : i32
    %c0_i32_0 = arith.constant 0 : i32
    %c0_i32_1 = arith.constant 0 : i32
    return %c0_i32, %c0_i32_0 : i32, i32
  }
  func.func @transform_8(%arg0: i32) -> (i32, i32) {
    %c0_i32 = arith.constant 0 : i32
    %c0_i32_0 = arith.constant 0 : i32
    %c0_i32_1 = arith.constant 0 : i32
    return %c0_i32, %c0_i32_0 : i32, i32
  }
  func.func @transform_9(%arg0: i32) -> (i32, i32, i32) {
    %c0_i32 = arith.constant 0 : i32
    %c0_i32_0 = arith.constant 0 : i32
    %c0_i32_1 = arith.constant 0 : i32
    %c0_i32_2 = arith.constant 0 : i32
    return %c0_i32, %c0_i32_0, %c0_i32_1 : i32, i32, i32
  }
  func.func @transform_10(%arg0: i32) -> (i32, i32) {
    %c0_i32 = arith.constant 0 : i32
    %c0_i32_0 = arith.constant 0 : i32
    %c0_i32_1 = arith.constant 0 : i32
    return %c0_i32, %c0_i32_0 : i32, i32
  }
  func.func @transform_11(%arg0: i32) -> (i32, i32) {
    %c0_i32 = arith.constant 0 : i32
    %c0_i32_0 = arith.constant 0 : i32
    %c0_i32_1 = arith.constant 0 : i32
    return %c0_i32, %c0_i32_0 : i32, i32
  }
  func.func @transform_12(%arg0: i32) -> (i32, i32) {
    %c0_i32 = arith.constant 0 : i32
    %c0_i32_0 = arith.constant 0 : i32
    %c0_i32_1 = arith.constant 0 : i32
    return %c0_i32, %c0_i32_0 : i32, i32
  }
  func.func @transform_13(%arg0: i32) -> (i32, i32, i32) {
    %c0_i32 = arith.constant 0 : i32
    %c0_i32_0 = arith.constant 0 : i32
    %c0_i32_1 = arith.constant 0 : i32
    %c0_i32_2 = arith.constant 0 : i32
    return %c0_i32, %c0_i32_0, %c0_i32_1 : i32, i32, i32
  }
  func.func @transform_14(%arg0: i32) -> (i32, i32) {
    %c0_i32 = arith.constant 0 : i32
    %c0_i32_0 = arith.constant 0 : i32
    %c0_i32_1 = arith.constant 0 : i32
    return %c0_i32, %c0_i32_0 : i32, i32
  }
  func.func @transform_15(%arg0: i32) -> (i32, i32) {
    %c0_i32 = arith.constant 0 : i32
    %c0_i32_0 = arith.constant 0 : i32
    %c0_i32_1 = arith.constant 0 : i32
    return %c0_i32, %c0_i32_0 : i32, i32
  }
  func.func @transform_16(%arg0: i32) -> (i32, i32) {
    %c0_i32 = arith.constant 0 : i32
    %c0_i32_0 = arith.constant 0 : i32
    %c0_i32_1 = arith.constant 0 : i32
    return %c0_i32, %c0_i32_0 : i32, i32
  }
  func.func @transform_17(%arg0: i32) -> (i32, i32) {
    %c0_i32 = arith.constant 0 : i32
    %c0_i32_0 = arith.constant 0 : i32
    return %arg0, %c0_i32 : i32, i32
  }
}

</mosaic_0001>

<llo_original>
// kernel: tile.19
$region0: #{tile.19}
  %s0 = inlined_call_operand.vmem [shape: f32[28,8], index: 0, kind: input, shape index: {}]
  %s1 = inlined_call_operand.vmem [shape: f32[1,224], index: 1, kind: output, shape index: {}]
  $region1: #{tile.19} parent=0
    #allocation0 [shape = 'u8[8192]{0}', space=vmem, size = 0x2000, scoped, tag = 'scoped mem for output reshape']
    %s2 = smov 3
    %v3 = vld [vmem:[%s0] ss:$16 sm:%s2]
    %vm4 = vcmask 64512
    %5 = vst.msk [vmem:[#allocation0] ss:$8 sm:$0x3] %vm4, %v3
    %s6 = scalar_lea.vmem %s0, 15
    %v7 = vld [vmem:[%s6] sm:$0x1]
    %8 = vrot.lane.b32.xlu0 %v7, 120
    %v9 = vpop.permute.xlu0 %8
    %vm10 = vcmask 1048512
    %11 = vst.msk [vmem:[#allocation0] sm:$0x1] %vm10, %v9
    %s12 = scalar_lea.vmem %s0, 14
    %v13 = vld [vmem:[%s12] sm:$0x1]
    %14 = vrot.lane.b32.xlu0 %v13, 112
    %v15 = vpop.permute.xlu0 %14
    %vm16 = vcmask 982912
    %17 = vst.msk [vmem:[#allocation0] sm:$0x1] %vm16, %v15
    %s18 = scalar_lea.vmem %s0, 13
    %v19 = vld [vmem:[%s18] sm:$0x1]
    %20 = vrot.lane.b32.xlu0 %v19, 104
    %v21 = vpop.permute.xlu0 %20
    %vm22 = vcmask 917312
    %23 = vst.msk [vmem:[#allocation0] sm:$0x1] %vm22, %v21
    %s24 = scalar_lea.vmem %s0, 12
    %v25 = vld [vmem:[%s24] sm:$0x1]
    %26 = vrot.lane.b32.xlu0 %v25, 96
    %v27 = vpop.permute.xlu0 %26
    %vm28 = vcmask 851712
    %29 = vst.msk [vmem:[#allocation0] sm:$0x1] %vm28, %v27
    %s30 = scalar_lea.vmem %s0, 11
    %s31 = smov 3
    %v32 = vld [vmem:[%s30] ss:$16 sm:%s31]
    %33 = vrot.lane.b32.xlu0 %v32, 88
    %v34 = vpop.permute.xlu0 %33
    %vm35 = vcmask 786112
    %36 = vst.msk [vmem:[#allocation0] ss:$8 sm:$0x3] %vm35, %v34
    %s37 = scalar_lea.vmem %s0, 10
    %s38 = smov 3
    %v39 = vld [vmem:[%s37] ss:$16 sm:%s38]
    %40 = vrot.lane.b32.xlu0 %v39, 80
    %v41 = vpop.permute.xlu0 %40
    %vm42 = vcmask 720512
    %43 = vst.msk [vmem:[#allocation0] ss:$8 sm:$0x3] %vm42, %v41
    %s44 = scalar_lea.vmem %s0, 9
    %s45 = smov 3
    %v46 = vld [vmem:[%s44] ss:$16 sm:%s45]
    %47 = vrot.lane.b32.xlu0 %v46, 72
    %v48 = vpop.permute.xlu0 %47
    %vm49 = vcmask 654912
    %50 = vst.msk [vmem:[#allocation0] ss:$8 sm:$0x3] %vm49, %v48
    %s51 = scalar_lea.vmem %s0, 8
    %s52 = smov 3
    %v53 = vld [vmem:[%s51] ss:$16 sm:%s52]
    %54 = vrot.lane.b32.xlu0 %v53, 64
    %v55 = vpop.permute.xlu0 %54
    %vm56 = vcmask 589312
    %57 = vst.msk [vmem:[#allocation0] ss:$8 sm:$0x3] %vm56, %v55
    %s58 = scalar_lea.vmem %s0, 7
    %s59 = smov 3
    %v60 = vld [vmem:[%s58] ss:$16 sm:%s59]
    %61 = vrot.lane.b32.xlu0 %v60, 56
    %v62 = vpop.permute.xlu0 %61
    %vm63 = vcmask 523712
    %64 = vst.msk [vmem:[#allocation0] ss:$8 sm:$0x3] %vm63, %v62
    %s65 = scalar_lea.vmem %s0, 6
    %s66 = smov 3
    %v67 = vld [vmem:[%s65] ss:$16 sm:%s66]
    %68 = vrot.lane.b32.xlu0 %v67, 48
    %v69 = vpop.permute.xlu0 %68
    %vm70 = vcmask 458112
    %71 = vst.msk [vmem:[#allocation0] ss:$8 sm:$0x3] %vm70, %v69
    %s72 = scalar_lea.vmem %s0, 5
    %s73 = smov 3
    %v74 = vld [vmem:[%s72] ss:$16 sm:%s73]
    %75 = vrot.lane.b32.xlu0 %v74, 40
    %v76 = vpop.permute.xlu0 %75
    %vm77 = vcmask 392512
    %78 = vst.msk [vmem:[#allocation0] ss:$8 sm:$0x3] %vm77, %v76
    %s79 = scalar_lea.vmem %s0, 4
    %s80 = smov 3
    %v81 = vld [vmem:[%s79] ss:$16 sm:%s80]
    %82 = vrot.lane.b32.xlu0 %v81, 32
    %v83 = vpop.permute.xlu0 %82
    %vm84 = vcmask 326912
    %85 = vst.msk [vmem:[#allocation0] ss:$8 sm:$0x3] %vm84, %v83
    %s86 = scalar_lea.vmem %s0, 3
    %s87 = smov 3
    %v88 = vld [vmem:[%s86] ss:$16 sm:%s87]
    %89 = vrot.lane.b32.xlu0 %v88, 24
    %v90 = vpop.permute.xlu0 %89
    %vm91 = vcmask 261312
    %92 = vst.msk [vmem:[#allocation0] ss:$8 sm:$0x3] %vm91, %v90
    %s93 = scalar_lea.vmem %s0, 2
    %s94 = smov 3
    %v95 = vld [vmem:[%s93] ss:$16 sm:%s94]
    %96 = vrot.lane.b32.xlu0 %v95, 16
    %v97 = vpop.permute.xlu0 %96
    %vm98 = vcmask 195712
    %99 = vst.msk [vmem:[#allocation0] ss:$8 sm:$0x3] %vm98, %v97
    %s100 = scalar_lea.vmem %s0, 1
    %s101 = smov 3
    %v102 = vld [vmem:[%s100] ss:$16 sm:%s101]
    %103 = vrot.lane.b32.xlu0 %v102, 8
    %v104 = vpop.permute.xlu0 %103
    %vm105 = vcmask 130112
    %106 = vst.msk [vmem:[#allocation0] ss:$8 sm:$0x3] %vm105, %v104
    %s108 = ssub.s32 2, 1
    %v109 = vld [vmem:[#allocation0] sm:%s108]
    %s111 = ssub.s32 2, 1
    %112 = vst [vmem:[%s1] sm:%s111] %v109
    %s113 = scalar_lea.vmem [#allocation0], 8
    %v114 = vld [vmem:[%s113] sm:%s108]
    %s116 = ssub.s32 2, 1
    %s117 = scalar_lea.vmem %s1, 1
    %118 = vst [vmem:[%s117] sm:%s116] %v114

// kernel: tile.23
$region0: #{tile.23}
  #allocation0 [shape = 's32[1]{0}', space=sflag, size = 0x4, scoped, tag = 'scoped memory for tile.23']
  %s0 = inlined_call_operand.vmem [shape: f32[16], index: 0, kind: input, shape index: {}]
  %s1 = inlined_call_operand.vmem [shape: f32[14,16], index: 1, kind: output, shape index: {}]
  // Predicated region
  $region2: #{tile.23} parent=0 // pred_check
    _
  $region3: #{tile.23} parent=0 // pred_check_branch
    %3 = sbr.rel (0) target = $region5
  $region4: #{tile.23} parent=0 // pred_region
    _
  $region5: #{tile.23} parent=0 // pred_fallthru
    _
  %v4 = vld [vmem:[%s0] ss:$0 sm:$0xff]
  %5 = vst [vmem:[%s1] sm:$0xff] %v4
  %s6 = scalar_lea.vmem %s1, 8
  %7 = vst [vmem:[%s6] sm:$0xff] %v4

// kernel: tile.24
$region0: #{tile.24}
  %s0 = inlined_call_operand.vmem [shape: f32[14,16], index: 0, kind: input, shape index: {}]
  %s1 = inlined_call_operand.vmem [shape: f32[1,224], index: 1, kind: output, shape index: {}]
  $region1: #{tile.24} parent=0
    #allocation0 [shape = 'u8[8192]{0}', space=vmem, size = 0x2000, scoped, tag = 'scoped mem for output reshape']
    %s2 = smov 3
    %v3 = vld [vmem:[%s0] ss:$8 sm:%s2]
    %vm4 = vcmask 130048
    %5 = vst.msk [vmem:[#allocation0] ss:$8 sm:$0x3] %vm4, %v3
    %s6 = scalar_lea.vmem %s0, 7
    %v7 = vld [vmem:[%s6] sm:$0x1]
    %8 = vrot.lane.b32.xlu0 %v7, 112
    %v9 = vpop.permute.xlu0 %8
    %vm10 = vcmask 1048448
    %11 = vst.msk [vmem:[#allocation0] sm:$0x1] %vm10, %v9
    %s12 = scalar_lea.vmem %s0, 6
    %v13 = vld [vmem:[%s12] sm:$0x1]
    %14 = vrot.lane.b32.xlu0 %v13, 96
    %v15 = vpop.permute.xlu0 %14
    %vm16 = vcmask 917248
    %17 = vst.msk [vmem:[#allocation0] sm:$0x1] %vm16, %v15
    %s18 = scalar_lea.vmem %s0, 5
    %s19 = smov 3
    %v20 = vld [vmem:[%s18] ss:$8 sm:%s19]
    %21 = vrot.lane.b32.xlu0 %v20, 80
    %v22 = vpop.permute.xlu0 %21
    %vm23 = vcmask 786048
    %24 = vst.msk [vmem:[#allocation0] ss:$8 sm:$0x3] %vm23, %v22
    %s25 = scalar_lea.vmem %s0, 4
    %s26 = smov 3
    %v27 = vld [vmem:[%s25] ss:$8 sm:%s26]
    %28 = vrot.lane.b32.xlu0 %v27, 64
    %v29 = vpop.permute.xlu0 %28
    %vm30 = vcmask 654848
    %31 = vst.msk [vmem:[#allocation0] ss:$8 sm:$0x3] %vm30, %v29
    %s32 = scalar_lea.vmem %s0, 3
    %s33 = smov 3
    %v34 = vld [vmem:[%s32] ss:$8 sm:%s33]
    %35 = vrot.lane.b32.xlu0 %v34, 48
    %v36 = vpop.permute.xlu0 %35
    %vm37 = vcmask 523648
    %38 = vst.msk [vmem:[#allocation0] ss:$8 sm:$0x3] %vm37, %v36
    %s39 = scalar_lea.vmem %s0, 2
    %s40 = smov 3
    %v41 = vld [vmem:[%s39] ss:$8 sm:%s40]
    %42 = vrot.lane.b32.xlu0 %v41, 32
    %v43 = vpop.permute.xlu0 %42
    %vm44 = vcmask 392448
    %45 = vst.msk [vmem:[#allocation0] ss:$8 sm:$0x3] %vm44, %v43
    %s46 = scalar_lea.vmem %s0, 1
    %s47 = smov 3
    %v48 = vld [vmem:[%s46] ss:$8 sm:%s47]
    %49 = vrot.lane.b32.xlu0 %v48, 16
    %v50 = vpop.permute.xlu0 %49
    %vm51 = vcmask 261248
    %52 = vst.msk [vmem:[#allocation0] ss:$8 sm:$0x3] %vm51, %v50
    %s54 = ssub.s32 2, 1
    %v55 = vld [vmem:[#allocation0] sm:%s54]
    %s57 = ssub.s32 2, 1
    %58 = vst [vmem:[%s1] sm:%s57] %v55
    %s59 = scalar_lea.vmem [#allocation0], 8
    %v60 = vld [vmem:[%s59] sm:%s54]
    %s62 = ssub.s32 2, 1
    %s63 = scalar_lea.vmem %s1, 1
    %64 = vst [vmem:[%s63] sm:%s62] %v60

// kernel: tile.28
$region0: #{tile.28}
  #allocation0 [shape = 's32[1]{0}', space=sflag, size = 0x4, scoped, tag = 'scoped memory for tile.28']
  %s0 = inlined_call_operand.vmem [shape: f32[24], index: 0, kind: input, shape index: {}]
  %s1 = inlined_call_operand.vmem [shape: f32[7,24], index: 1, kind: output, shape index: {}]
  // Predicated region
  $region2: #{tile.28} parent=0 // pred_check
    _
  $region3: #{tile.28} parent=0 // pred_check_branch
    %3 = sbr.rel (0) target = $region5
  $region4: #{tile.28} parent=0 // pred_region
    _
  $region5: #{tile.28} parent=0 // pred_fallthru
    _
  %v4 = vld [vmem:[%s0] ss:$0 sm:$0xff]
  %5 = vst [vmem:[%s1] sm:$0xff] %v4

// kernel: tile.29
$region0: #{tile.29}
  %s0 = inlined_call_operand.vmem [shape: f32[7,24], index: 0, kind: input, shape index: {}]
  %s1 = inlined_call_operand.vmem [shape: f32[1,168], index: 1, kind: output, shape index: {}]
  $region1: #{tile.29} parent=0
    #allocation0 [shape = 'u8[8192]{0}', space=vmem, size = 0x2000, scoped, tag = 'scoped mem for output reshape']
    %v2 = vld [vmem:[%s0] sm:$0x1]
    %vm3 = vcmask 195584
    %4 = vst.msk [vmem:[#allocation0] sm:$0x1] %vm3, %v2
    %s5 = scalar_lea.vmem %s0, 5
    %v6 = vld [vmem:[%s5] sm:$0x1]
    %s7 = scalar_lea.vmem %s0, 5
    %v8 = vld [vmem:[%s7] sm:$0x1]
    %vm9 = vcmask 64512
    %v10 = vsel %vm9, %v8, %v6
    %11 = vrot.lane.b32.xlu0 %v10, 120
    %v12 = vpop.permute.xlu0 %11
    %vm13 = vcmask 130048
    %s14 = scalar_lea.vmem [#allocation0], 8
    %15 = vst.msk [vmem:[%s14] sm:$0x1] %vm13, %v12
    %vm16 = vcmask 1048512
    %17 = vst.msk [vmem:[#allocation0] sm:$0x1] %vm16, %v12
    %s18 = scalar_lea.vmem %s0, 4
    %v19 = vld [vmem:[%s18] sm:$0x1]
    %20 = vrot.lane.b32.xlu0 %v19, 96
    %v21 = vpop.permute.xlu0 %20
    %vm22 = vcmask 982784
    %23 = vst.msk [vmem:[#allocation0] sm:$0x1] %vm22, %v21
    %s24 = scalar_lea.vmem %s0, 3
    %v25 = vld [vmem:[%s24] sm:$0x1]
    %26 = vrot.lane.b32.xlu0 %v25, 72
    %v27 = vpop.permute.xlu0 %26
    %vm28 = vcmask 785984
    %29 = vst.msk [vmem:[#allocation0] sm:$0x1] %vm28, %v27
    %s30 = scalar_lea.vmem %s0, 2
    %v31 = vld [vmem:[%s30] sm:$0x1]
    %32 = vrot.lane.b32.xlu0 %v31, 48
    %v33 = vpop.permute.xlu0 %32
    %vm34 = vcmask 589184
    %35 = vst.msk [vmem:[#allocation0] sm:$0x1] %vm34, %v33
    %s36 = scalar_lea.vmem %s0, 1
    %v37 = vld [vmem:[%s36] sm:$0x1]
    %38 = vrot.lane.b32.xlu0 %v37, 24
    %v39 = vpop.permute.xlu0 %38
    %vm40 = vcmask 392384
    %41 = vst.msk [vmem:[#allocation0] sm:$0x1] %vm40, %v39
    %s42 = scalar_lea.vmem %s0, 6
    %v43 = vld [vmem:[%s42] sm:$0x1]
    %44 = vrot.lane.b32.xlu0 %v43, 16
    %v45 = vpop.permute.xlu0 %44
    %vm46 = vcmask 326784
    %s47 = scalar_lea.vmem [#allocation0], 8
    %48 = vst.msk [vmem:[%s47] sm:$0x1] %vm46, %v45
    %s50 = ssub.s32 2, 1
    %v51 = vld [vmem:[#allocation0] sm:%s50]
    %s53 = ssub.s32 2, 1
    %54 = vst [vmem:[%s1] sm:%s53] %v51
    %s55 = scalar_lea.vmem [#allocation0], 8
    %v56 = vld [vmem:[%s55] sm:%s50]
    %s58 = ssub.s32 2, 1
    %s59 = scalar_lea.vmem %s1, 1
    %60 = vst [vmem:[%s59] sm:%s58] %v56

// kernel: mnist_cnn_forward.1
$region0: #{mnist_cnn_forward.1}
  #allocation0 [shape = 'u32[]', space=smem, size = 0x4, offset = 0x4, fixed_abs, tag = 'smem constant byte address 0x4 - core index']
  #allocation1 [shape = 'u32[72,128]{1,0:T(1,128)}', space=vmem, size = 0x9000, scoped, tag = 'internal scratch']
  %s0 = inlined_call_operand.vmem [shape: f32[1,248,30], index: 0, kind: input, shape index: {}]
  %s1 = inlined_call_operand.vmem [shape: f32[3,30,224], index: 1, kind: input, shape index: {}]
  %s2 = inlined_call_operand.vmem [shape: f32[1,224], index: 2, kind: input, shape index: {}]
  %s3 = inlined_call_operand.vmem [shape: f32[216,128], index: 3, kind: input, shape index: {}]
  %s4 = inlined_call_operand.vmem [shape: f32[130,239], index: 4, kind: input, shape index: {}]
  %s5 = inlined_call_operand.vmem [shape: f32[3,128,224], index: 5, kind: input, shape index: {}]
  %s6 = inlined_call_operand.vmem [shape: f32[1,224], index: 6, kind: input, shape index: {}]
  %s7 = inlined_call_operand.vmem [shape: f32[208,144], index: 7, kind: input, shape index: {}]
  %s8 = inlined_call_operand.vmem [shape: f32[74,127], index: 8, kind: input, shape index: {}]
  %s9 = inlined_call_operand.vmem [shape: f32[3,144,168], index: 9, kind: input, shape index: {}]
  %s10 = inlined_call_operand.vmem [shape: f32[1,168], index: 10, kind: input, shape index: {}]
  %s11 = inlined_call_operand.vmem [shape: f32[144,72], index: 11, kind: input, shape index: {}]
  %s12 = inlined_call_operand.vmem [shape: f32[72,96], index: 12, kind: input, shape index: {}]
  %s13 = inlined_call_operand.vmem [shape: f32[3,8,71], index: 13, kind: input, shape index: {}]
  %s14 = inlined_call_operand.vmem [shape: f32[1,32], index: 14, kind: input, shape index: {}]
  %s15 = inlined_call_operand.vmem [shape: f32[32,128], index: 15, kind: input, shape index: {}]
  %s16 = inlined_call_operand.vmem [shape: f32[1,128], index: 16, kind: input, shape index: {}]
  %s17 = inlined_call_operand.vmem [shape: f32[8,128], index: 17, kind: output, shape index: {}]
  %s18 = sld [smem:[#allocation0]]
  $region78: #{mnist_cnn_forward.1} parent=0
    _
  %s20 = ssub.s32 1, %s18
  %s21 = scalar_select 0, %s20, %s18
  // Predicated region
  $region2: #{mnist_cnn_forward.1} parent=0 // pred_check
    _
  $region3: #{mnist_cnn_forward.1} parent=0 // pred_check_branch
    %23 = sbr.rel (0) target = $region5
  $region4: #{mnist_cnn_forward.1} parent=0 // pred_region
    _
  $region5: #{mnist_cnn_forward.1} parent=0 // pred_fallthru
    _
  // Predicated region
  $region6: #{mnist_cnn_forward.1} parent=0 // pred_check
    _
  $region7: #{mnist_cnn_forward.1} parent=0 // pred_check_branch
    %25 = sbr.rel (0) target = $region9
  $region8: #{mnist_cnn_forward.1} parent=0 // pred_region
    _
  $region9: #{mnist_cnn_forward.1} parent=0 // pred_fallthru
    _
  // Predicated region
  $region10: #{mnist_cnn_forward.1} parent=0 // pred_check
    _
  $region11: #{mnist_cnn_forward.1} parent=0 // pred_check_branch
    %27 = sbr.rel (0) target = $region13
  $region12: #{mnist_cnn_forward.1} parent=0 // pred_region
    _
  $region13: #{mnist_cnn_forward.1} parent=0 // pred_fallthru
    _
  // Predicated region
  $region14: #{mnist_cnn_forward.1} parent=0 // pred_check
    _
  $region15: #{mnist_cnn_forward.1} parent=0 // pred_check_branch
    %29 = sbr.rel (0) target = $region17
  $region16: #{mnist_cnn_forward.1} parent=0 // pred_region
    _
  $region17: #{mnist_cnn_forward.1} parent=0 // pred_fallthru
    _
  // Predicated region
  $region18: #{mnist_cnn_forward.1} parent=0 // pred_check
    _
  $region19: #{mnist_cnn_forward.1} parent=0 // pred_check_branch
    %31 = sbr.rel (0) target = $region21
  $region20: #{mnist_cnn_forward.1} parent=0 // pred_region
    _
  $region21: #{mnist_cnn_forward.1} parent=0 // pred_fallthru
    _
  // Predicated region
  $region22: #{mnist_cnn_forward.1} parent=0 // pred_check
    _
  $region23: #{mnist_cnn_forward.1} parent=0 // pred_check_branch
    %33 = sbr.rel (0) target = $region25
  $region24: #{mnist_cnn_forward.1} parent=0 // pred_region
    _
  $region25: #{mnist_cnn_forward.1} parent=0 // pred_fallthru
    _
  // Predicated region
  $region26: #{mnist_cnn_forward.1} parent=0 // pred_check
    _
  $region27: #{mnist_cnn_forward.1} parent=0 // pred_check_branch
    %35 = sbr.rel (0) target = $region29
  $region28: #{mnist_cnn_forward.1} parent=0 // pred_region
    _
  $region29: #{mnist_cnn_forward.1} parent=0 // pred_fallthru
    _
  // Predicated region
  $region30: #{mnist_cnn_forward.1} parent=0 // pred_check
    _
  $region31: #{mnist_cnn_forward.1} parent=0 // pred_check_branch
    %37 = sbr.rel (0) target = $region33
  $region32: #{mnist_cnn_forward.1} parent=0 // pred_region
    _
  $region33: #{mnist_cnn_forward.1} parent=0 // pred_fallthru
    _
  // Predicated region
  $region34: #{mnist_cnn_forward.1} parent=0 // pred_check
    _
  $region35: #{mnist_cnn_forward.1} parent=0 // pred_check_branch
    %39 = sbr.rel (0) target = $region37
  $region36: #{mnist_cnn_forward.1} parent=0 // pred_region
    _
  $region37: #{mnist_cnn_forward.1} parent=0 // pred_fallthru
    _
  // Predicated region
  $region38: #{mnist_cnn_forward.1} parent=0 // pred_check
    _
  $region39: #{mnist_cnn_forward.1} parent=0 // pred_check_branch
    %41 = sbr.rel (0) target = $region41
  $region40: #{mnist_cnn_forward.1} parent=0 // pred_region
    _
  $region41: #{mnist_cnn_forward.1} parent=0 // pred_fallthru
    _
  // Predicated region
  $region42: #{mnist_cnn_forward.1} parent=0 // pred_check
    _
  $region43: #{mnist_cnn_forward.1} parent=0 // pred_check_branch
    %43 = sbr.rel (0) target = $region45
  $region44: #{mnist_cnn_forward.1} parent=0 // pred_region
    _
  $region45: #{mnist_cnn_forward.1} parent=0 // pred_fallthru
    _
  // Predicated region
  $region46: #{mnist_cnn_forward.1} parent=0 // pred_check
    _
  $region47: #{mnist_cnn_forward.1} parent=0 // pred_check_branch
    %45 = sbr.rel (0) target = $region49
  $region48: #{mnist_cnn_forward.1} parent=0 // pred_region
    _
  $region49: #{mnist_cnn_forward.1} parent=0 // pred_fallthru
    _
  // Predicated region
  $region50: #{mnist_cnn_forward.1} parent=0 // pred_check
    _
  $region51: #{mnist_cnn_forward.1} parent=0 // pred_check_branch
    %47 = sbr.rel (0) target = $region53
  $region52: #{mnist_cnn_forward.1} parent=0 // pred_region
    _
  $region53: #{mnist_cnn_forward.1} parent=0 // pred_fallthru
    _
  // Predicated region
  $region54: #{mnist_cnn_forward.1} parent=0 // pred_check
    _
  $region55: #{mnist_cnn_forward.1} parent=0 // pred_check_branch
    %49 = sbr.rel (0) target = $region57
  $region56: #{mnist_cnn_forward.1} parent=0 // pred_region
    _
  $region57: #{mnist_cnn_forward.1} parent=0 // pred_fallthru
    _
  // Predicated region
  $region58: #{mnist_cnn_forward.1} parent=0 // pred_check
    _
  $region59: #{mnist_cnn_forward.1} parent=0 // pred_check_branch
    %51 = sbr.rel (0) target = $region61
  $region60: #{mnist_cnn_forward.1} parent=0 // pred_region
    _
  $region61: #{mnist_cnn_forward.1} parent=0 // pred_fallthru
    _
  // Predicated region
  $region62: #{mnist_cnn_forward.1} parent=0 // pred_check
    _
  $region63: #{mnist_cnn_forward.1} parent=0 // pred_check_branch
    %53 = sbr.rel (0) target = $region65
  $region64: #{mnist_cnn_forward.1} parent=0 // pred_region
    _
  $region65: #{mnist_cnn_forward.1} parent=0 // pred_fallthru
    _
  // Predicated region
  $region66: #{mnist_cnn_forward.1} parent=0 // pred_check
    _
  $region67: #{mnist_cnn_forward.1} parent=0 // pred_check_branch
    %55 = sbr.rel (0) target = $region69
  $region68: #{mnist_cnn_forward.1} parent=0 // pred_region
    _
  $region69: #{mnist_cnn_forward.1} parent=0 // pred_fallthru
    _
  %v56 = vld [vmem:[%s0] sm:$0xff]
  %v57 = vld [vmem:[%s0 + $0x8] sm:$0xff]
  %v58 = vld [vmem:[%s0 + $0x10] sm:$0xff]
  %v59 = vld [vmem:[%s0 + $0x18] sm:$0xff]
  %v60 = vld [vmem:[%s0 + $0x20] sm:$0xff]
  %v61 = vld [vmem:[%s0 + $0x28] sm:$0xff]
  %v62 = vld [vmem:[%s0 + $0x30] sm:$0xff]
  %v63 = vld [vmem:[%s0 + $0x38] sm:$0xff]
  %v64 = vld [vmem:[%s0 + $0x40] sm:$0xff]
  %v65 = vld [vmem:[%s0 + $0x48] sm:$0xff]
  %v66 = vld [vmem:[%s0 + $0x50] sm:$0xff]
  %v67 = vld [vmem:[%s0 + $0x58] sm:$0xff]
  %v68 = vld [vmem:[%s0 + $0x60] sm:$0xff]
  %v69 = vld [vmem:[%s0 + $0x68] sm:$0xff]
  %v70 = vld [vmem:[%s0 + $0x70] sm:$0xff]
  %v71 = vld [vmem:[%s0 + $0x78] sm:$0xff]
  %v72 = vld [vmem:[%s0 + $0x80] sm:$0xff]
  %v73 = vld [vmem:[%s0 + $0x88] sm:$0xff]
  %v74 = vld [vmem:[%s0 + $0x90] sm:$0xff]
  %v75 = vld [vmem:[%s0 + $0x98] sm:$0xff]
  %v76 = vld [vmem:[%s0 + $0xa0] sm:$0xff]
  %v77 = vld [vmem:[%s0 + $0xa8] sm:$0xff]
  %v78 = vld [vmem:[%s0 + $0xb0] sm:$0xff]
  %v79 = vld [vmem:[%s0 + $0xb8] sm:$0xff]
  %v80 = vld [vmem:[%s0 + $0xc0] sm:$0xff]
  %v81 = vld [vmem:[%s0 + $0xc8] sm:$0xff]
  %v82 = vld [vmem:[%s0 + $0xd0] sm:$0xff]
  %v83 = vld [vmem:[%s0 + $0xd8] sm:$0xff]
  %v84 = vld [vmem:[%s0 + $0xe0] sm:$0xff]
  %v85 = vld [vmem:[%s0 + $0xe8] sm:$0xff]
  %v86 = vld [vmem:[%s0 + $0xf0] sm:$0xff]
  %v87 = vld [vmem:[%s1] sm:$0xff]
  %v88 = vld [vmem:[%s1 + $0x8] sm:$0xff]
  %v89 = vld [vmem:[%s1 + $0x10] sm:$0xff]
  %v90 = vld [vmem:[%s1 + $0x18] sm:$0xff]
  %v91 = vld [vmem:[%s1 + $0x20] sm:$0xff]
  %v92 = vld [vmem:[%s1 + $0x28] sm:$0xff]
  %v93 = vld [vmem:[%s1 + $0x30] sm:$0x3f]
  %v94 = vld [vmem:[%s1 + $0x38] sm:$0x3f]
  %s95 = scalar_lea.vmem %s1, 64
  %v96 = vld [vmem:[%s95] sm:$0xff]
  %v97 = vld [vmem:[%s95 + $0x8] sm:$0xff]
  %v98 = vld [vmem:[%s95 + $0x10] sm:$0xff]
  %v99 = vld [vmem:[%s95 + $0x18] sm:$0xff]
  %v100 = vld [vmem:[%s95 + $0x20] sm:$0xff]
  %v101 = vld [vmem:[%s95 + $0x28] sm:$0xff]
  %v102 = vld [vmem:[%s95 + $0x30] sm:$0x3f]
  %v103 = vld [vmem:[%s95 + $0x38] sm:$0x3f]
  %vm135 = vcmask 1046528
  %v136 = vrot.slane %v56, 1
  %v137 = vrot.slane %v57, 1
  %v138 = vsel %vm135, %v136, %v137
  %v139 = vrot.slane %v58, 1
  %v140 = vsel %vm135, %v137, %v139
  %v141 = vrot.slane %v59, 1
  %v142 = vsel %vm135, %v139, %v141
  %v143 = vrot.slane %v60, 1
  %v144 = vsel %vm135, %v141, %v143
  %v145 = vrot.slane %v61, 1
  %v146 = vsel %vm135, %v143, %v145
  %v147 = vrot.slane %v62, 1
  %v148 = vsel %vm135, %v145, %v147
  %v149 = vrot.slane %v63, 1
  %v150 = vsel %vm135, %v147, %v149
  %v151 = vrot.slane %v64, 1
  %v152 = vsel %vm135, %v149, %v151
  %v153 = vrot.slane %v65, 1
  %v154 = vsel %vm135, %v151, %v153
  %v155 = vrot.slane %v66, 1
  %v156 = vsel %vm135, %v153, %v155
  %v157 = vrot.slane %v67, 1
  %v158 = vsel %vm135, %v155, %v157
  %v159 = vrot.slane %v68, 1
  %v160 = vsel %vm135, %v157, %v159
  %v161 = vrot.slane %v69, 1
  %v162 = vsel %vm135, %v159, %v161
  %v163 = vrot.slane %v70, 1
  %v164 = vsel %vm135, %v161, %v163
  %v165 = vrot.slane %v71, 1
  %v166 = vsel %vm135, %v163, %v165
  %v167 = vrot.slane %v72, 1
  %v168 = vsel %vm135, %v165, %v167
  %v169 = vrot.slane %v73, 1
  %v170 = vsel %vm135, %v167, %v169
  %v171 = vrot.slane %v74, 1
  %v172 = vsel %vm135, %v169, %v171
  %v173 = vrot.slane %v75, 1
  %v174 = vsel %vm135, %v171, %v173
  %v175 = vrot.slane %v76, 1
  %v176 = vsel %vm135, %v173, %v175
  %v177 = vrot.slane %v77, 1
  %v178 = vsel %vm135, %v175, %v177
  %v179 = vrot.slane %v78, 1
  %v180 = vsel %vm135, %v177, %v179
  %v181 = vrot.slane %v79, 1
  %v182 = vsel %vm135, %v179, %v181
  %v183 = vrot.slane %v80, 1
  %v184 = vsel %vm135, %v181, %v183
  %v185 = vrot.slane %v81, 1
  %v186 = vsel %vm135, %v183, %v185
  %v187 = vrot.slane %v82, 1
  %v188 = vsel %vm135, %v185, %v187
  %v189 = vrot.slane %v83, 1
  %v190 = vsel %vm135, %v187, %v189
  %v191 = vrot.slane %v84, 1
  %v192 = vsel %vm135, %v189, %v191
  %v193 = vrot.slane %v85, 1
  %v194 = vsel %vm135, %v191, %v193
  %v195 = vrot.slane %v86, 1
  %v196 = vsel %vm135, %v193, %v195
  %vm197 = vcmask 244736
  %v198 = vsel %vm197, %v138, 0
  %v200 = vsel %vm197, %v140, 0
  %v202 = vsel %vm197, %v142, 0
  %v204 = vsel %vm197, %v144, 0
  %v206 = vsel %vm197, %v146, 0
  %v208 = vsel %vm197, %v148, 0
  %v210 = vsel %vm197, %v150, 0
  %v212 = vsel %vm197, %v152, 0
  %v214 = vsel %vm197, %v154, 0
  %v216 = vsel %vm197, %v156, 0
  %v218 = vsel %vm197, %v158, 0
  %v220 = vsel %vm197, %v160, 0
  %v222 = vsel %vm197, %v162, 0
  %v224 = vsel %vm197, %v164, 0
  %v226 = vsel %vm197, %v166, 0
  %v228 = vsel %vm197, %v168, 0
  %v230 = vsel %vm197, %v170, 0
  %v232 = vsel %vm197, %v172, 0
  %v234 = vsel %vm197, %v174, 0
  %v236 = vsel %vm197, %v176, 0
  %v238 = vsel %vm197, %v178, 0
  %v240 = vsel %vm197, %v180, 0
  %v242 = vsel %vm197, %v182, 0
  %v244 = vsel %vm197, %v184, 0
  %v246 = vsel %vm197, %v186, 0
  %v248 = vsel %vm197, %v188, 0
  %v250 = vsel %vm197, %v190, 0
  %v252 = vsel %vm197, %v192, 0
  %v254 = vsel %vm197, %v194, 0
  %v256 = vsel %vm197, %v196, 0
  %vm258 = vcmask 1045504
  %v260 = vsel %vm258, %v102, 0
  %v263 = vsel %vm258, %v103, 0
  %265 = vmatpush.msra.mxu0 0.0
  %266 = vmatpush.msra.mxu0 0.0
  %267 = vmatpush.msra.mxu0 0.0
  %268 = vmatpush.msra.mxu0 0.0
  %269 = vmatpush.msra.mxu0 0.0
  %270 = vmatpush.msra.mxu0 0.0
  %271 = vmatpush.msra.mxu0 0.0
  %272 = vmatpush.msra.mxu0 0.0
  %273 = vmatpush.msra.mxu0 0.0
  %274 = vmatpush.msra.mxu0 0.0
  %275 = vmatpush.msra.mxu0 0.0
  %276 = vmatpush.msra.mxu0 0.0
  %277 = vmatpush.msra.mxu0 %v260
  %278 = vmatpush.msra.mxu0 %v100
  %279 = vmatpush.msra.mxu0 %v98
  %280 = vmatpush.msra.mxu0 %v96
  %281 = vmatmul.f32.gmra.mxu0 %v198
  %v282 = vpop.f32.mrf.mxu0
  %v283 = vadd.f32 0.0, %v282
  %284 = vmatmul.f32.gmra.mxu0 %v200
  %v285 = vpop.f32.mrf.mxu0
  %v286 = vadd.f32 0.0, %v285
  %287 = vmatmul.f32.gmra.mxu0 %v202
  %v288 = vpop.f32.mrf.mxu0
  %v289 = vadd.f32 0.0, %v288
  %290 = vmatmul.f32.gmra.mxu0 %v204
  %v291 = vpop.f32.mrf.mxu0
  %v292 = vadd.f32 0.0, %v291
  %293 = vmatmul.f32.gmra.mxu0 %v206
  %v294 = vpop.f32.mrf.mxu0
  %v295 = vadd.f32 0.0, %v294
  %296 = vmatmul.f32.gmra.mxu0 %v208
  %v297 = vpop.f32.mrf.mxu0
  %v298 = vadd.f32 0.0, %v297
  %299 = vmatmul.f32.gmra.mxu0 %v210
  %v300 = vpop.f32.mrf.mxu0
  %v301 = vadd.f32 0.0, %v300
  %302 = vmatmul.f32.gmra.mxu0 %v212
  %v303 = vpop.f32.mrf.mxu0
  %v304 = vadd.f32 0.0, %v303
  %305 = vmatmul.f32.gmra.mxu0 %v214
  %v306 = vpop.f32.mrf.mxu0
  %v307 = vadd.f32 0.0, %v306
  %308 = vmatmul.f32.gmra.mxu0 %v216
  %v309 = vpop.f32.mrf.mxu0
  %v310 = vadd.f32 0.0, %v309
  %311 = vmatmul.f32.gmra.mxu0 %v218
  %v312 = vpop.f32.mrf.mxu0
  %v313 = vadd.f32 0.0, %v312
  %314 = vmatmul.f32.gmra.mxu0 %v220
  %v315 = vpop.f32.mrf.mxu0
  %v316 = vadd.f32 0.0, %v315
  %317 = vmatmul.f32.gmra.mxu0 %v222
  %v318 = vpop.f32.mrf.mxu0
  %v319 = vadd.f32 0.0, %v318
  %320 = vmatmul.f32.gmra.mxu0 %v224
  %v321 = vpop.f32.mrf.mxu0
  %v322 = vadd.f32 0.0, %v321
  %323 = vmatmul.f32.gmra.mxu0 %v226
  %v324 = vpop.f32.mrf.mxu0
  %v325 = vadd.f32 0.0, %v324
  %326 = vmatmul.f32.gmra.mxu0 %v228
  %v327 = vpop.f32.mrf.mxu0
  %v328 = vadd.f32 0.0, %v327
  %329 = vmatmul.f32.gmra.mxu0 %v230
  %v330 = vpop.f32.mrf.mxu0
  %v331 = vadd.f32 0.0, %v330
  %332 = vmatmul.f32.gmra.mxu0 %v232
  %v333 = vpop.f32.mrf.mxu0
  %v334 = vadd.f32 0.0, %v333
  %335 = vmatmul.f32.gmra.mxu0 %v234
  %v336 = vpop.f32.mrf.mxu0
  %v337 = vadd.f32 0.0, %v336
  %338 = vmatmul.f32.gmra.mxu0 %v236
  %v339 = vpop.f32.mrf.mxu0
  %v340 = vadd.f32 0.0, %v339
  %341 = vmatmul.f32.gmra.mxu0 %v238
  %v342 = vpop.f32.mrf.mxu0
  %v343 = vadd.f32 0.0, %v342
  %344 = vmatmul.f32.gmra.mxu0 %v240
  %v345 = vpop.f32.mrf.mxu0
  %v346 = vadd.f32 0.0, %v345
  %347 = vmatmul.f32.gmra.mxu0 %v242
  %v348 = vpop.f32.mrf.mxu0
  %v349 = vadd.f32 0.0, %v348
  %350 = vmatmul.f32.gmra.mxu0 %v244
  %v351 = vpop.f32.mrf.mxu0
  %v352 = vadd.f32 0.0, %v351
  %353 = vmatmul.f32.gmra.mxu0 %v246
  %v354 = vpop.f32.mrf.mxu0
  %v355 = vadd.f32 0.0, %v354
  %356 = vmatmul.f32.gmra.mxu0 %v248
  %v357 = vpop.f32.mrf.mxu0
  %v358 = vadd.f32 0.0, %v357
  %359 = vmatmul.f32.gmra.mxu0 %v250
  %v360 = vpop.f32.mrf.mxu0
  %v361 = vadd.f32 0.0, %v360
  %362 = vmatmul.f32.gmra.mxu0 %v252
  %v363 = vpop.f32.mrf.mxu0
  %v364 = vadd.f32 0.0, %v363
  %365 = vmatmul.f32.gmra.mxu0 %v254
  %v366 = vpop.f32.mrf.mxu0
  %v367 = vadd.f32 0.0, %v366
  %368 = vmatmul.f32.gmra.mxu0 %v256
  %v369 = vpop.f32.mrf.mxu0
  %v370 = vadd.f32 0.0, %v369
  %371 = vdwg.mxu0
  %372 = vmatpush.msra.mxu0 0.0
  %373 = vmatpush.msra.mxu0 0.0
  %374 = vmatpush.msra.mxu0 0.0
  %375 = vmatpush.msra.mxu0 0.0
  %376 = vmatpush.msra.mxu0 0.0
  %377 = vmatpush.msra.mxu0 0.0
  %378 = vmatpush.msra.mxu0 0.0
  %379 = vmatpush.msra.mxu0 0.0
  %380 = vmatpush.msra.mxu0 0.0
  %381 = vmatpush.msra.mxu0 0.0
  %382 = vmatpush.msra.mxu0 0.0
  %383 = vmatpush.msra.mxu0 0.0
  %384 = vmatpush.msra.mxu0 %v263
  %385 = vmatpush.msra.mxu0 %v101
  %386 = vmatpush.msra.mxu0 %v99
  %387 = vmatpush.msra.mxu0 %v97
  %388 = vmatmul.f32.gmra.mxu0 %v198
  %v389 = vpop.f32.mrf.mxu0
  %v390 = vadd.f32 0.0, %v389
  %391 = vmatmul.f32.gmra.mxu0 %v200
  %v392 = vpop.f32.mrf.mxu0
  %v393 = vadd.f32 0.0, %v392
  %394 = vmatmul.f32.gmra.mxu0 %v202
  %v395 = vpop.f32.mrf.mxu0
  %v396 = vadd.f32 0.0, %v395
  %397 = vmatmul.f32.gmra.mxu0 %v204
  %v398 = vpop.f32.mrf.mxu0
  %v399 = vadd.f32 0.0, %v398
  %400 = vmatmul.f32.gmra.mxu0 %v206
  %v401 = vpop.f32.mrf.mxu0
  %v402 = vadd.f32 0.0, %v401
  %403 = vmatmul.f32.gmra.mxu0 %v208
  %v404 = vpop.f32.mrf.mxu0
  %v405 = vadd.f32 0.0, %v404
  %406 = vmatmul.f32.gmra.mxu0 %v210
  %v407 = vpop.f32.mrf.mxu0
  %v408 = vadd.f32 0.0, %v407
  %409 = vmatmul.f32.gmra.mxu0 %v212
  %v410 = vpop.f32.mrf.mxu0
  %v411 = vadd.f32 0.0, %v410
  %412 = vmatmul.f32.gmra.mxu0 %v214
  %v413 = vpop.f32.mrf.mxu0
  %v414 = vadd.f32 0.0, %v413
  %415 = vmatmul.f32.gmra.mxu0 %v216
  %v416 = vpop.f32.mrf.mxu0
  %v417 = vadd.f32 0.0, %v416
  %418 = vmatmul.f32.gmra.mxu0 %v218
  %v419 = vpop.f32.mrf.mxu0
  %v420 = vadd.f32 0.0, %v419
  %421 = vmatmul.f32.gmra.mxu0 %v220
  %v422 = vpop.f32.mrf.mxu0
  %v423 = vadd.f32 0.0, %v422
  %424 = vmatmul.f32.gmra.mxu0 %v222
  %v425 = vpop.f32.mrf.mxu0
  %v426 = vadd.f32 0.0, %v425
  %427 = vmatmul.f32.gmra.mxu0 %v224
  %v428 = vpop.f32.mrf.mxu0
  %v429 = vadd.f32 0.0, %v428
  %430 = vmatmul.f32.gmra.mxu0 %v226
  %v431 = vpop.f32.mrf.mxu0
  %v432 = vadd.f32 0.0, %v431
  %433 = vmatmul.f32.gmra.mxu0 %v228
  %v434 = vpop.f32.mrf.mxu0
  %v435 = vadd.f32 0.0, %v434
  %436 = vmatmul.f32.gmra.mxu0 %v230
  %v437 = vpop.f32.mrf.mxu0
  %v438 = vadd.f32 0.0, %v437
  %439 = vmatmul.f32.gmra.mxu0 %v232
  %v440 = vpop.f32.mrf.mxu0
  %v441 = vadd.f32 0.0, %v440
  %442 = vmatmul.f32.gmra.mxu0 %v234
  %v443 = vpop.f32.mrf.mxu0
  %v444 = vadd.f32 0.0, %v443
  %445 = vmatmul.f32.gmra.mxu0 %v236
  %v446 = vpop.f32.mrf.mxu0
  %v447 = vadd.f32 0.0, %v446
  %448 = vmatmul.f32.gmra.mxu0 %v238
  %v449 = vpop.f32.mrf.mxu0
  %v450 = vadd.f32 0.0, %v449
  %451 = vmatmul.f32.gmra.mxu0 %v240
  %v452 = vpop.f32.mrf.mxu0
  %v453 = vadd.f32 0.0, %v452
  %454 = vmatmul.f32.gmra.mxu0 %v242
  %v455 = vpop.f32.mrf.mxu0
  %v456 = vadd.f32 0.0, %v455
  %457 = vmatmul.f32.gmra.mxu0 %v244
  %v458 = vpop.f32.mrf.mxu0
  %v459 = vadd.f32 0.0, %v458
  %460 = vmatmul.f32.gmra.mxu0 %v246
  %v461 = vpop.f32.mrf.mxu0
  %v462 = vadd.f32 0.0, %v461
  %463 = vmatmul.f32.gmra.mxu0 %v248
  %v464 = vpop.f32.mrf.mxu0
  %v465 = vadd.f32 0.0, %v464
  %466 = vmatmul.f32.gmra.mxu0 %v250
  %v467 = vpop.f32.mrf.mxu0
  %v468 = vadd.f32 0.0, %v467
  %469 = vmatmul.f32.gmra.mxu0 %v252
  %v470 = vpop.f32.mrf.mxu0
  %v471 = vadd.f32 0.0, %v470
  %472 = vmatmul.f32.gmra.mxu0 %v254
  %v473 = vpop.f32.mrf.mxu0
  %v474 = vadd.f32 0.0, %v473
  %475 = vmatmul.f32.gmra.mxu0 %v256
  %v476 = vpop.f32.mrf.mxu0
  %v477 = vadd.f32 0.0, %v476
  %478 = vdwg.mxu0
  %v479 = vsel %vm197, %v56, 0
  %v481 = vsel %vm197, %v57, 0
  %v483 = vsel %vm197, %v58, 0
  %v485 = vsel %vm197, %v59, 0
  %v487 = vsel %vm197, %v60, 0
  %v489 = vsel %vm197, %v61, 0
  %v491 = vsel %vm197, %v62, 0
  %v493 = vsel %vm197, %v63, 0
  %v495 = vsel %vm197, %v64, 0
  %v497 = vsel %vm197, %v65, 0
  %v499 = vsel %vm197, %v66, 0
  %v501 = vsel %vm197, %v67, 0
  %v503 = vsel %vm197, %v68, 0
  %v505 = vsel %vm197, %v69, 0
  %v507 = vsel %vm197, %v70, 0
  %v509 = vsel %vm197, %v71, 0
  %v511 = vsel %vm197, %v72, 0
  %v513 = vsel %vm197, %v73, 0
  %v515 = vsel %vm197, %v74, 0
  %v517 = vsel %vm197, %v75, 0
  %v519 = vsel %vm197, %v76, 0
  %v521 = vsel %vm197, %v77, 0
  %v523 = vsel %vm197, %v78, 0
  %v525 = vsel %vm197, %v79, 0
  %v527 = vsel %vm197, %v80, 0
  %v529 = vsel %vm197, %v81, 0
  %v531 = vsel %vm197, %v82, 0
  %v533 = vsel %vm197, %v83, 0
  %v535 = vsel %vm197, %v84, 0
  %v537 = vsel %vm197, %v85, 0
  %v540 = vsel %vm258, %v93, 0
  %v543 = vsel %vm258, %v94, 0
  %545 = vmatpush.msra.mxu0 0.0
  %546 = vmatpush.msra.mxu0 0.0
  %547 = vmatpush.msra.mxu0 0.0
  %548 = vmatpush.msra.mxu0 0.0
  %549 = vmatpush.msra.mxu0 0.0
  %550 = vmatpush.msra.mxu0 0.0
  %551 = vmatpush.msra.mxu0 0.0
  %552 = vmatpush.msra.mxu0 0.0
  %553 = vmatpush.msra.mxu0 0.0
  %554 = vmatpush.msra.mxu0 0.0
  %555 = vmatpush.msra.mxu0 0.0
  %556 = vmatpush.msra.mxu0 0.0
  %557 = vmatpush.msra.mxu0 %v540
  %558 = vmatpush.msra.mxu0 %v91
  %559 = vmatpush.msra.mxu0 %v89
  %560 = vmatpush.msra.mxu0 %v87
  %561 = vmatmul.f32.gmra.mxu0 %v479
  %v562 = vpop.f32.mrf.mxu0
  %v563 = vadd.f32 %v283, %v562
  %564 = vmatmul.f32.gmra.mxu0 %v481
  %v565 = vpop.f32.mrf.mxu0
  %v566 = vadd.f32 %v286, %v565
  %567 = vmatmul.f32.gmra.mxu0 %v483
  %v568 = vpop.f32.mrf.mxu0
  %v569 = vadd.f32 %v289, %v568
  %570 = vmatmul.f32.gmra.mxu0 %v485
  %v571 = vpop.f32.mrf.mxu0
  %v572 = vadd.f32 %v292, %v571
  %573 = vmatmul.f32.gmra.mxu0 %v487
  %v574 = vpop.f32.mrf.mxu0
  %v575 = vadd.f32 %v295, %v574
  %576 = vmatmul.f32.gmra.mxu0 %v489
  %v577 = vpop.f32.mrf.mxu0
  %v578 = vadd.f32 %v298, %v577
  %579 = vmatmul.f32.gmra.mxu0 %v491
  %v580 = vpop.f32.mrf.mxu0
  %v581 = vadd.f32 %v301, %v580
  %582 = vmatmul.f32.gmra.mxu0 %v493
  %v583 = vpop.f32.mrf.mxu0
  %v584 = vadd.f32 %v304, %v583
  %585 = vmatmul.f32.gmra.mxu0 %v495
  %v586 = vpop.f32.mrf.mxu0
  %v587 = vadd.f32 %v307, %v586
  %588 = vmatmul.f32.gmra.mxu0 %v497
  %v589 = vpop.f32.mrf.mxu0
  %v590 = vadd.f32 %v310, %v589
  %591 = vmatmul.f32.gmra.mxu0 %v499
  %v592 = vpop.f32.mrf.mxu0
  %v593 = vadd.f32 %v313, %v592
  %594 = vmatmul.f32.gmra.mxu0 %v501
  %v595 = vpop.f32.mrf.mxu0
  %v596 = vadd.f32 %v316, %v595
  %597 = vmatmul.f32.gmra.mxu0 %v503
  %v598 = vpop.f32.mrf.mxu0
  %v599 = vadd.f32 %v319, %v598
  %600 = vmatmul.f32.gmra.mxu0 %v505
  %v601 = vpop.f32.mrf.mxu0
  %v602 = vadd.f32 %v322, %v601
  %603 = vmatmul.f32.gmra.mxu0 %v507
  %v604 = vpop.f32.mrf.mxu0
  %v605 = vadd.f32 %v325, %v604
  %606 = vmatmul.f32.gmra.mxu0 %v509
  %v607 = vpop.f32.mrf.mxu0
  %v608 = vadd.f32 %v328, %v607
  %609 = vmatmul.f32.gmra.mxu0 %v511
  %v610 = vpop.f32.mrf.mxu0
  %v611 = vadd.f32 %v331, %v610
  %612 = vmatmul.f32.gmra.mxu0 %v513
  %v613 = vpop.f32.mrf.mxu0
  %v614 = vadd.f32 %v334, %v613
  %615 = vmatmul.f32.gmra.mxu0 %v515
  %v616 = vpop.f32.mrf.mxu0
  %v617 = vadd.f32 %v337, %v616
  %618 = vmatmul.f32.gmra.mxu0 %v517
  %v619 = vpop.f32.mrf.mxu0
  %v620 = vadd.f32 %v340, %v619
  %621 = vmatmul.f32.gmra.mxu0 %v519
  %v622 = vpop.f32.mrf.mxu0
  %v623 = vadd.f32 %v343, %v622
  %624 = vmatmul.f32.gmra.mxu0 %v521
  %v625 = vpop.f32.mrf.mxu0
  %v626 = vadd.f32 %v346, %v625
  %627 = vmatmul.f32.gmra.mxu0 %v523
  %v628 = vpop.f32.mrf.mxu0
  %v629 = vadd.f32 %v349, %v628
  %630 = vmatmul.f32.gmra.mxu0 %v525
  %v631 = vpop.f32.mrf.mxu0
  %v632 = vadd.f32 %v352, %v631
  %633 = vmatmul.f32.gmra.mxu0 %v527
  %v634 = vpop.f32.mrf.mxu0
  %v635 = vadd.f32 %v355, %v634
  %636 = vmatmul.f32.gmra.mxu0 %v529
  %v637 = vpop.f32.mrf.mxu0
  %v638 = vadd.f32 %v358, %v637
  %639 = vmatmul.f32.gmra.mxu0 %v531
  %v640 = vpop.f32.mrf.mxu0
  %v641 = vadd.f32 %v361, %v640
  %642 = vmatmul.f32.gmra.mxu0 %v533
  %v643 = vpop.f32.mrf.mxu0
  %v644 = vadd.f32 %v364, %v643
  %645 = vmatmul.f32.gmra.mxu0 %v535
  %v646 = vpop.f32.mrf.mxu0
  %v647 = vadd.f32 %v367, %v646
  %648 = vmatmul.f32.gmra.mxu0 %v537
  %v649 = vpop.f32.mrf.mxu0
  %v650 = vadd.f32 %v370, %v649
  %651 = vdwg.mxu0
  %652 = vmatpush.msra.mxu0 0.0
  %653 = vmatpush.msra.mxu0 0.0
  %654 = vmatpush.msra.mxu0 0.0
  %655 = vmatpush.msra.mxu0 0.0
  %656 = vmatpush.msra.mxu0 0.0
  %657 = vmatpush.msra.mxu0 0.0
  %658 = vmatpush.msra.mxu0 0.0
  %659 = vmatpush.msra.mxu0 0.0
  %660 = vmatpush.msra.mxu0 0.0
  %661 = vmatpush.msra.mxu0 0.0
  %662 = vmatpush.msra.mxu0 0.0
  %663 = vmatpush.msra.mxu0 0.0
  %664 = vmatpush.msra.mxu0 %v543
  %665 = vmatpush.msra.mxu0 %v92
  %666 = vmatpush.msra.mxu0 %v90
  %667 = vmatpush.msra.mxu0 %v88
  %668 = vmatmul.f32.gmra.mxu0 %v479
  %v669 = vpop.f32.mrf.mxu0
  %v670 = vadd.f32 %v390, %v669
  %671 = vmatmul.f32.gmra.mxu0 %v481
  %v672 = vpop.f32.mrf.mxu0
  %v673 = vadd.f32 %v393, %v672
  %674 = vmatmul.f32.gmra.mxu0 %v483
  %v675 = vpop.f32.mrf.mxu0
  %v676 = vadd.f32 %v396, %v675
  %677 = vmatmul.f32.gmra.mxu0 %v485
  %v678 = vpop.f32.mrf.mxu0
  %v679 = vadd.f32 %v399, %v678
  %680 = vmatmul.f32.gmra.mxu0 %v487
  %v681 = vpop.f32.mrf.mxu0
  %v682 = vadd.f32 %v402, %v681
  %683 = vmatmul.f32.gmra.mxu0 %v489
  %v684 = vpop.f32.mrf.mxu0
  %v685 = vadd.f32 %v405, %v684
  %686 = vmatmul.f32.gmra.mxu0 %v491
  %v687 = vpop.f32.mrf.mxu0
  %v688 = vadd.f32 %v408, %v687
  %689 = vmatmul.f32.gmra.mxu0 %v493
  %v690 = vpop.f32.mrf.mxu0
  %v691 = vadd.f32 %v411, %v690
  %692 = vmatmul.f32.gmra.mxu0 %v495
  %v693 = vpop.f32.mrf.mxu0
  %v694 = vadd.f32 %v414, %v693
  %695 = vmatmul.f32.gmra.mxu0 %v497
  %v696 = vpop.f32.mrf.mxu0
  %v697 = vadd.f32 %v417, %v696
  %698 = vmatmul.f32.gmra.mxu0 %v499
  %v699 = vpop.f32.mrf.mxu0
  %v700 = vadd.f32 %v420, %v699
  %701 = vmatmul.f32.gmra.mxu0 %v501
  %v702 = vpop.f32.mrf.mxu0
  %v703 = vadd.f32 %v423, %v702
  %704 = vmatmul.f32.gmra.mxu0 %v503
  %v705 = vpop.f32.mrf.mxu0
  %v706 = vadd.f32 %v426, %v705
  %707 = vmatmul.f32.gmra.mxu0 %v505
  %v708 = vpop.f32.mrf.mxu0
  %v709 = vadd.f32 %v429, %v708
  %710 = vmatmul.f32.gmra.mxu0 %v507
  %v711 = vpop.f32.mrf.mxu0
  %v712 = vadd.f32 %v432, %v711
  %713 = vmatmul.f32.gmra.mxu0 %v509
  %v714 = vpop.f32.mrf.mxu0
  %v715 = vadd.f32 %v435, %v714
  %716 = vmatmul.f32.gmra.mxu0 %v511
  %v717 = vpop.f32.mrf.mxu0
  %v718 = vadd.f32 %v438, %v717
  %719 = vmatmul.f32.gmra.mxu0 %v513
  %v720 = vpop.f32.mrf.mxu0
  %v721 = vadd.f32 %v441, %v720
  %722 = vmatmul.f32.gmra.mxu0 %v515
  %v723 = vpop.f32.mrf.mxu0
  %v724 = vadd.f32 %v444, %v723
  %725 = vmatmul.f32.gmra.mxu0 %v517
  %v726 = vpop.f32.mrf.mxu0
  %v727 = vadd.f32 %v447, %v726
  %728 = vmatmul.f32.gmra.mxu0 %v519
  %v729 = vpop.f32.mrf.mxu0
  %v730 = vadd.f32 %v450, %v729
  %731 = vmatmul.f32.gmra.mxu0 %v521
  %v732 = vpop.f32.mrf.mxu0
  %v733 = vadd.f32 %v453, %v732
  %734 = vmatmul.f32.gmra.mxu0 %v523
  %v735 = vpop.f32.mrf.mxu0
  %v736 = vadd.f32 %v456, %v735
  %737 = vmatmul.f32.gmra.mxu0 %v525
  %v738 = vpop.f32.mrf.mxu0
  %v739 = vadd.f32 %v459, %v738
  %740 = vmatmul.f32.gmra.mxu0 %v527
  %v741 = vpop.f32.mrf.mxu0
  %v742 = vadd.f32 %v462, %v741
  %743 = vmatmul.f32.gmra.mxu0 %v529
  %v744 = vpop.f32.mrf.mxu0
  %v745 = vadd.f32 %v465, %v744
  %746 = vmatmul.f32.gmra.mxu0 %v531
  %v747 = vpop.f32.mrf.mxu0
  %v748 = vadd.f32 %v468, %v747
  %749 = vmatmul.f32.gmra.mxu0 %v533
  %v750 = vpop.f32.mrf.mxu0
  %v751 = vadd.f32 %v471, %v750
  %752 = vmatmul.f32.gmra.mxu0 %v535
  %v753 = vpop.f32.mrf.mxu0
  %v754 = vadd.f32 %v474, %v753
  %755 = vmatmul.f32.gmra.mxu0 %v537
  %v756 = vpop.f32.mrf.mxu0
  %v757 = vadd.f32 %v477, %v756
  %758 = vdwg.mxu0
  %s759 = scalar_lea.vmem %s1, 128
  %v760 = vld [vmem:[%s759] sm:$0xff]
  %v761 = vld [vmem:[%s759 + $0x8] sm:$0xff]
  %v762 = vld [vmem:[%s759 + $0x10] sm:$0xff]
  %v763 = vld [vmem:[%s759 + $0x18] sm:$0xff]
  %v764 = vld [vmem:[%s759 + $0x20] sm:$0xff]
  %v765 = vld [vmem:[%s759 + $0x28] sm:$0xff]
  %v766 = vld [vmem:[%s759 + $0x30] sm:$0x3f]
  %v767 = vld [vmem:[%s759 + $0x38] sm:$0x3f]
  %v768 = vrot.slane %v56, 2
  %v769 = vrot.slane %v57, 2
  %v770 = vsel %vm258, %v768, %v769
  %v771 = vrot.slane %v58, 2
  %v772 = vsel %vm258, %v769, %v771
  %v773 = vrot.slane %v59, 2
  %v774 = vsel %vm258, %v771, %v773
  %v775 = vrot.slane %v60, 2
  %v776 = vsel %vm258, %v773, %v775
  %v777 = vrot.slane %v61, 2
  %v778 = vsel %vm258, %v775, %v777
  %v779 = vrot.slane %v62, 2
  %v780 = vsel %vm258, %v777, %v779
  %v781 = vrot.slane %v63, 2
  %v782 = vsel %vm258, %v779, %v781
  %v783 = vrot.slane %v64, 2
  %v784 = vsel %vm258, %v781, %v783
  %v785 = vrot.slane %v65, 2
  %v786 = vsel %vm258, %v783, %v785
  %v787 = vrot.slane %v66, 2
  %v788 = vsel %vm258, %v785, %v787
  %v789 = vrot.slane %v67, 2
  %v790 = vsel %vm258, %v787, %v789
  %v791 = vrot.slane %v68, 2
  %v792 = vsel %vm258, %v789, %v791
  %v793 = vrot.slane %v69, 2
  %v794 = vsel %vm258, %v791, %v793
  %v795 = vrot.slane %v70, 2
  %v796 = vsel %vm258, %v793, %v795
  %v797 = vrot.slane %v71, 2
  %v798 = vsel %vm258, %v795, %v797
  %v799 = vrot.slane %v72, 2
  %v800 = vsel %vm258, %v797, %v799
  %v801 = vrot.slane %v73, 2
  %v802 = vsel %vm258, %v799, %v801
  %v803 = vrot.slane %v74, 2
  %v804 = vsel %vm258, %v801, %v803
  %v805 = vrot.slane %v75, 2
  %v806 = vsel %vm258, %v803, %v805
  %v807 = vrot.slane %v76, 2
  %v808 = vsel %vm258, %v805, %v807
  %v809 = vrot.slane %v77, 2
  %v810 = vsel %vm258, %v807, %v809
  %v811 = vrot.slane %v78, 2
  %v812 = vsel %vm258, %v809, %v811
  %v813 = vrot.slane %v79, 2
  %v814 = vsel %vm258, %v811, %v813
  %v815 = vrot.slane %v80, 2
  %v816 = vsel %vm258, %v813, %v815
  %v817 = vrot.slane %v81, 2
  %v818 = vsel %vm258, %v815, %v817
  %v819 = vrot.slane %v82, 2
  %v820 = vsel %vm258, %v817, %v819
  %v821 = vrot.slane %v83, 2
  %v822 = vsel %vm258, %v819, %v821
  %v823 = vrot.slane %v84, 2
  %v824 = vsel %vm258, %v821, %v823
  %v825 = vrot.slane %v85, 2
  %v826 = vsel %vm258, %v823, %v825
  %v827 = vrot.slane %v86, 2
  %v828 = vsel %vm258, %v825, %v827
  %v829 = vsel %vm197, %v770, 0
  %v831 = vsel %vm197, %v772, 0
  %v833 = vsel %vm197, %v774, 0
  %v835 = vsel %vm197, %v776, 0
  %v837 = vsel %vm197, %v778, 0
  %v839 = vsel %vm197, %v780, 0
  %v841 = vsel %vm197, %v782, 0
  %v843 = vsel %vm197, %v784, 0
  %v845 = vsel %vm197, %v786, 0
  %v847 = vsel %vm197, %v788, 0
  %v849 = vsel %vm197, %v790, 0
  %v851 = vsel %vm197, %v792, 0
  %v853 = vsel %vm197, %v794, 0
  %v855 = vsel %vm197, %v796, 0
  %v857 = vsel %vm197, %v798, 0
  %v859 = vsel %vm197, %v800, 0
  %v861 = vsel %vm197, %v802, 0
  %v863 = vsel %vm197, %v804, 0
  %v865 = vsel %vm197, %v806, 0
  %v867 = vsel %vm197, %v808, 0
  %v869 = vsel %vm197, %v810, 0
  %v871 = vsel %vm197, %v812, 0
  %v873 = vsel %vm197, %v814, 0
  %v875 = vsel %vm197, %v816, 0
  %v877 = vsel %vm197, %v818, 0
  %v879 = vsel %vm197, %v820, 0
  %v881 = vsel %vm197, %v822, 0
  %v883 = vsel %vm197, %v824, 0
  %v885 = vsel %vm197, %v826, 0
  %v887 = vsel %vm197, %v828, 0
  %v890 = vsel %vm258, %v766, 0
  %v893 = vsel %vm258, %v767, 0
  %895 = vmatpush.msra.mxu0 0.0
  %896 = vmatpush.msra.mxu0 0.0
  %897 = vmatpush.msra.mxu0 0.0
  %898 = vmatpush.msra.mxu0 0.0
  %899 = vmatpush.msra.mxu0 0.0
  %900 = vmatpush.msra.mxu0 0.0
  %901 = vmatpush.msra.mxu0 0.0
  %902 = vmatpush.msra.mxu0 0.0
  %903 = vmatpush.msra.mxu0 0.0
  %904 = vmatpush.msra.mxu0 0.0
  %905 = vmatpush.msra.mxu0 0.0
  %906 = vmatpush.msra.mxu0 0.0
  %907 = vmatpush.msra.mxu0 %v890
  %908 = vmatpush.msra.mxu0 %v764
  %909 = vmatpush.msra.mxu0 %v762
  %910 = vmatpush.msra.mxu0 %v760
  %911 = vmatmul.f32.gmra.mxu0 %v829
  %v912 = vpop.f32.mrf.mxu0
  %v913 = vadd.f32 0.0, %v912
  %914 = vmatmul.f32.gmra.mxu0 %v831
  %v915 = vpop.f32.mrf.mxu0
  %v916 = vadd.f32 0.0, %v915
  %917 = vmatmul.f32.gmra.mxu0 %v833
  %v918 = vpop.f32.mrf.mxu0
  %v919 = vadd.f32 0.0, %v918
  %920 = vmatmul.f32.gmra.mxu0 %v835
  %v921 = vpop.f32.mrf.mxu0
  %v922 = vadd.f32 0.0, %v921
  %923 = vmatmul.f32.gmra.mxu0 %v837
  %v924 = vpop.f32.mrf.mxu0
  %v925 = vadd.f32 0.0, %v924
  %926 = vmatmul.f32.gmra.mxu0 %v839
  %v927 = vpop.f32.mrf.mxu0
  %v928 = vadd.f32 0.0, %v927
  %929 = vmatmul.f32.gmra.mxu0 %v841
  %v930 = vpop.f32.mrf.mxu0
  %v931 = vadd.f32 0.0, %v930
  %932 = vmatmul.f32.gmra.mxu0 %v843
  %v933 = vpop.f32.mrf.mxu0
  %v934 = vadd.f32 0.0, %v933
  %935 = vmatmul.f32.gmra.mxu0 %v845
  %v936 = vpop.f32.mrf.mxu0
  %v937 = vadd.f32 0.0, %v936
  %938 = vmatmul.f32.gmra.mxu0 %v847
  %v939 = vpop.f32.mrf.mxu0
  %v940 = vadd.f32 0.0, %v939
  %941 = vmatmul.f32.gmra.mxu0 %v849
  %v942 = vpop.f32.mrf.mxu0
  %v943 = vadd.f32 0.0, %v942
  %944 = vmatmul.f32.gmra.mxu0 %v851
  %v945 = vpop.f32.mrf.mxu0
  %v946 = vadd.f32 0.0, %v945
  %947 = vmatmul.f32.gmra.mxu0 %v853
  %v948 = vpop.f32.mrf.mxu0
  %v949 = vadd.f32 0.0, %v948
  %950 = vmatmul.f32.gmra.mxu0 %v855
  %v951 = vpop.f32.mrf.mxu0
  %v952 = vadd.f32 0.0, %v951
  %953 = vmatmul.f32.gmra.mxu0 %v857
  %v954 = vpop.f32.mrf.mxu0
  %v955 = vadd.f32 0.0, %v954
  %956 = vmatmul.f32.gmra.mxu0 %v859
  %v957 = vpop.f32.mrf.mxu0
  %v958 = vadd.f32 0.0, %v957
  %959 = vmatmul.f32.gmra.mxu0 %v861
  %v960 = vpop.f32.mrf.mxu0
  %v961 = vadd.f32 0.0, %v960
  %962 = vmatmul.f32.gmra.mxu0 %v863
  %v963 = vpop.f32.mrf.mxu0
  %v964 = vadd.f32 0.0, %v963
  %965 = vmatmul.f32.gmra.mxu0 %v865
  %v966 = vpop.f32.mrf.mxu0
  %v967 = vadd.f32 0.0, %v966
  %968 = vmatmul.f32.gmra.mxu0 %v867
  %v969 = vpop.f32.mrf.mxu0
  %v970 = vadd.f32 0.0, %v969
  %971 = vmatmul.f32.gmra.mxu0 %v869
  %v972 = vpop.f32.mrf.mxu0
  %v973 = vadd.f32 0.0, %v972
  %974 = vmatmul.f32.gmra.mxu0 %v871
  %v975 = vpop.f32.mrf.mxu0
  %v976 = vadd.f32 0.0, %v975
  %977 = vmatmul.f32.gmra.mxu0 %v873
  %v978 = vpop.f32.mrf.mxu0
  %v979 = vadd.f32 0.0, %v978
  %980 = vmatmul.f32.gmra.mxu0 %v875
  %v981 = vpop.f32.mrf.mxu0
  %v982 = vadd.f32 0.0, %v981
  %983 = vmatmul.f32.gmra.mxu0 %v877
  %v984 = vpop.f32.mrf.mxu0
  %v985 = vadd.f32 0.0, %v984
  %986 = vmatmul.f32.gmra.mxu0 %v879
  %v987 = vpop.f32.mrf.mxu0
  %v988 = vadd.f32 0.0, %v987
  %989 = vmatmul.f32.gmra.mxu0 %v881
  %v990 = vpop.f32.mrf.mxu0
  %v991 = vadd.f32 0.0, %v990
  %992 = vmatmul.f32.gmra.mxu0 %v883
  %v993 = vpop.f32.mrf.mxu0
  %v994 = vadd.f32 0.0, %v993
  %995 = vmatmul.f32.gmra.mxu0 %v885
  %v996 = vpop.f32.mrf.mxu0
  %v997 = vadd.f32 0.0, %v996
  %998 = vmatmul.f32.gmra.mxu0 %v887
  %v999 = vpop.f32.mrf.mxu0
  %v1000 = vadd.f32 0.0, %v999
  %1001 = vdwg.mxu0
  %1002 = vmatpush.msra.mxu0 0.0
  %1003 = vmatpush.msra.mxu0 0.0
  %1004 = vmatpush.msra.mxu0 0.0
  %1005 = vmatpush.msra.mxu0 0.0
  %1006 = vmatpush.msra.mxu0 0.0
  %1007 = vmatpush.msra.mxu0 0.0
  %1008 = vmatpush.msra.mxu0 0.0
  %1009 = vmatpush.msra.mxu0 0.0
  %1010 = vmatpush.msra.mxu0 0.0
  %1011 = vmatpush.msra.mxu0 0.0
  %1012 = vmatpush.msra.mxu0 0.0
  %1013 = vmatpush.msra.mxu0 0.0
  %1014 = vmatpush.msra.mxu0 %v893
  %1015 = vmatpush.msra.mxu0 %v765
  %1016 = vmatpush.msra.mxu0 %v763
  %1017 = vmatpush.msra.mxu0 %v761
  %1018 = vmatmul.f32.gmra.mxu0 %v829
  %v1019 = vpop.f32.mrf.mxu0
  %v1020 = vadd.f32 0.0, %v1019
  %1021 = vmatmul.f32.gmra.mxu0 %v831
  %v1022 = vpop.f32.mrf.mxu0
  %v1023 = vadd.f32 0.0, %v1022
  %1024 = vmatmul.f32.gmra.mxu0 %v833
  %v1025 = vpop.f32.mrf.mxu0
  %v1026 = vadd.f32 0.0, %v1025
  %1027 = vmatmul.f32.gmra.mxu0 %v835
  %v1028 = vpop.f32.mrf.mxu0
  %v1029 = vadd.f32 0.0, %v1028
  %1030 = vmatmul.f32.gmra.mxu0 %v837
  %v1031 = vpop.f32.mrf.mxu0
  %v1032 = vadd.f32 0.0, %v1031
  %1033 = vmatmul.f32.gmra.mxu0 %v839
  %v1034 = vpop.f32.mrf.mxu0
  %v1035 = vadd.f32 0.0, %v1034
  %1036 = vmatmul.f32.gmra.mxu0 %v841
  %v1037 = vpop.f32.mrf.mxu0
  %v1038 = vadd.f32 0.0, %v1037
  %1039 = vmatmul.f32.gmra.mxu0 %v843
  %v1040 = vpop.f32.mrf.mxu0
  %v1041 = vadd.f32 0.0, %v1040
  %1042 = vmatmul.f32.gmra.mxu0 %v845
  %v1043 = vpop.f32.mrf.mxu0
  %v1044 = vadd.f32 0.0, %v1043
  %1045 = vmatmul.f32.gmra.mxu0 %v847
  %v1046 = vpop.f32.mrf.mxu0
  %v1047 = vadd.f32 0.0, %v1046
  %1048 = vmatmul.f32.gmra.mxu0 %v849
  %v1049 = vpop.f32.mrf.mxu0
  %v1050 = vadd.f32 0.0, %v1049
  %1051 = vmatmul.f32.gmra.mxu0 %v851
  %v1052 = vpop.f32.mrf.mxu0
  %v1053 = vadd.f32 0.0, %v1052
  %1054 = vmatmul.f32.gmra.mxu0 %v853
  %v1055 = vpop.f32.mrf.mxu0
  %v1056 = vadd.f32 0.0, %v1055
  %1057 = vmatmul.f32.gmra.mxu0 %v855
  %v1058 = vpop.f32.mrf.mxu0
  %v1059 = vadd.f32 0.0, %v1058
  %1060 = vmatmul.f32.gmra.mxu0 %v857
  %v1061 = vpop.f32.mrf.mxu0
  %v1062 = vadd.f32 0.0, %v1061
  %1063 = vmatmul.f32.gmra.mxu0 %v859
  %v1064 = vpop.f32.mrf.mxu0
  %v1065 = vadd.f32 0.0, %v1064
  %1066 = vmatmul.f32.gmra.mxu0 %v861
  %v1067 = vpop.f32.mrf.mxu0
  %v1068 = vadd.f32 0.0, %v1067
  %1069 = vmatmul.f32.gmra.mxu0 %v863
  %v1070 = vpop.f32.mrf.mxu0
  %v1071 = vadd.f32 0.0, %v1070
  %1072 = vmatmul.f32.gmra.mxu0 %v865
  %v1073 = vpop.f32.mrf.mxu0
  %v1074 = vadd.f32 0.0, %v1073
  %1075 = vmatmul.f32.gmra.mxu0 %v867
  %v1076 = vpop.f32.mrf.mxu0
  %v1077 = vadd.f32 0.0, %v1076
  %1078 = vmatmul.f32.gmra.mxu0 %v869
  %v1079 = vpop.f32.mrf.mxu0
  %v1080 = vadd.f32 0.0, %v1079
  %1081 = vmatmul.f32.gmra.mxu0 %v871
  %v1082 = vpop.f32.mrf.mxu0
  %v1083 = vadd.f32 0.0, %v1082
  %1084 = vmatmul.f32.gmra.mxu0 %v873
  %v1085 = vpop.f32.mrf.mxu0
  %v1086 = vadd.f32 0.0, %v1085
  %1087 = vmatmul.f32.gmra.mxu0 %v875
  %v1088 = vpop.f32.mrf.mxu0
  %v1089 = vadd.f32 0.0, %v1088
  %1090 = vmatmul.f32.gmra.mxu0 %v877
  %v1091 = vpop.f32.mrf.mxu0
  %v1092 = vadd.f32 0.0, %v1091
  %1093 = vmatmul.f32.gmra.mxu0 %v879
  %v1094 = vpop.f32.mrf.mxu0
  %v1095 = vadd.f32 0.0, %v1094
  %1096 = vmatmul.f32.gmra.mxu0 %v881
  %v1097 = vpop.f32.mrf.mxu0
  %v1098 = vadd.f32 0.0, %v1097
  %1099 = vmatmul.f32.gmra.mxu0 %v883
  %v1100 = vpop.f32.mrf.mxu0
  %v1101 = vadd.f32 0.0, %v1100
  %1102 = vmatmul.f32.gmra.mxu0 %v885
  %v1103 = vpop.f32.mrf.mxu0
  %v1104 = vadd.f32 0.0, %v1103
  %1105 = vmatmul.f32.gmra.mxu0 %v887
  %v1106 = vpop.f32.mrf.mxu0
  %v1107 = vadd.f32 0.0, %v1106
  %1108 = vdwg.mxu0
  %v1109 = vadd.f32 %v563, %v913
  %v1110 = vadd.f32 %v670, %v1020
  %v1111 = vadd.f32 %v566, %v916
  %v1112 = vadd.f32 %v673, %v1023
  %v1113 = vadd.f32 %v569, %v919
  %v1114 = vadd.f32 %v676, %v1026
  %v1115 = vadd.f32 %v572, %v922
  %v1116 = vadd.f32 %v679, %v1029
  %v1117 = vadd.f32 %v575, %v925
  %v1118 = vadd.f32 %v682, %v1032
  %v1119 = vadd.f32 %v578, %v928
  %v1120 = vadd.f32 %v685, %v1035
  %v1121 = vadd.f32 %v581, %v931
  %v1122 = vadd.f32 %v688, %v1038
  %v1123 = vadd.f32 %v584, %v934
  %v1124 = vadd.f32 %v691, %v1041
  %v1125 = vadd.f32 %v587, %v937
  %v1126 = vadd.f32 %v694, %v1044
  %v1127 = vadd.f32 %v590, %v940
  %v1128 = vadd.f32 %v697, %v1047
  %v1129 = vadd.f32 %v593, %v943
  %v1130 = vadd.f32 %v700, %v1050
  %v1131 = vadd.f32 %v596, %v946
  %v1132 = vadd.f32 %v703, %v1053
  %v1133 = vadd.f32 %v599, %v949
  %v1134 = vadd.f32 %v706, %v1056
  %v1135 = vadd.f32 %v602, %v952
  %v1136 = vadd.f32 %v709, %v1059
  %v1137 = vadd.f32 %v605, %v955
  %v1138 = vadd.f32 %v712, %v1062
  %v1139 = vadd.f32 %v608, %v958
  %v1140 = vadd.f32 %v715, %v1065
  %v1141 = vadd.f32 %v611, %v961
  %v1142 = vadd.f32 %v718, %v1068
  %v1143 = vadd.f32 %v614, %v964
  %v1144 = vadd.f32 %v721, %v1071
  %v1145 = vadd.f32 %v617, %v967
  %v1146 = vadd.f32 %v724, %v1074
  %v1147 = vadd.f32 %v620, %v970
  %v1148 = vadd.f32 %v727, %v1077
  %v1149 = vadd.f32 %v623, %v973
  %v1150 = vadd.f32 %v730, %v1080
  %v1151 = vadd.f32 %v626, %v976
  %v1152 = vadd.f32 %v733, %v1083
  %v1153 = vadd.f32 %v629, %v979
  %v1154 = vadd.f32 %v736, %v1086
  %v1155 = vadd.f32 %v632, %v982
  %v1156 = vadd.f32 %v739, %v1089
  %v1157 = vadd.f32 %v635, %v985
  %v1158 = vadd.f32 %v742, %v1092
  %v1159 = vadd.f32 %v638, %v988
  %v1160 = vadd.f32 %v745, %v1095
  %v1161 = vadd.f32 %v641, %v991
  %v1162 = vadd.f32 %v748, %v1098
  %v1163 = vadd.f32 %v644, %v994
  %v1164 = vadd.f32 %v751, %v1101
  %v1165 = vadd.f32 %v647, %v997
  %v1166 = vadd.f32 %v754, %v1104
  %v1167 = vadd.f32 %v650, %v1000
  %v1168 = vadd.f32 %v757, %v1107
  %v1169 = vld [vmem:[%s2] sm:$0x3]
  %v1171 = vperm.slane %v1169, 0
  %v1172 = vperm.slane %v1169, 1
  %v1175 = vadd.f32 %v1109, %v1171
  %v1176 = vadd.f32 %v1110, %v1172
  %v1177 = vadd.f32 %v1111, %v1171
  %v1178 = vadd.f32 %v1112, %v1172
  %v1179 = vadd.f32 %v1113, %v1171
  %v1180 = vadd.f32 %v1114, %v1172
  %v1181 = vadd.f32 %v1115, %v1171
  %v1182 = vadd.f32 %v1116, %v1172
  %v1183 = vadd.f32 %v1117, %v1171
  %v1184 = vadd.f32 %v1118, %v1172
  %v1185 = vadd.f32 %v1119, %v1171
  %v1186 = vadd.f32 %v1120, %v1172
  %v1187 = vadd.f32 %v1121, %v1171
  %v1188 = vadd.f32 %v1122, %v1172
  %v1189 = vadd.f32 %v1123, %v1171
  %v1190 = vadd.f32 %v1124, %v1172
  %v1191 = vadd.f32 %v1125, %v1171
  %v1192 = vadd.f32 %v1126, %v1172
  %v1193 = vadd.f32 %v1127, %v1171
  %v1194 = vadd.f32 %v1128, %v1172
  %v1195 = vadd.f32 %v1129, %v1171
  %v1196 = vadd.f32 %v1130, %v1172
  %v1197 = vadd.f32 %v1131, %v1171
  %v1198 = vadd.f32 %v1132, %v1172
  %v1199 = vadd.f32 %v1133, %v1171
  %v1200 = vadd.f32 %v1134, %v1172
  %v1201 = vadd.f32 %v1135, %v1171
  %v1202 = vadd.f32 %v1136, %v1172
  %v1203 = vadd.f32 %v1137, %v1171
  %v1204 = vadd.f32 %v1138, %v1172
  %v1205 = vadd.f32 %v1139, %v1171
  %v1206 = vadd.f32 %v1140, %v1172
  %v1207 = vadd.f32 %v1141, %v1171
  %v1208 = vadd.f32 %v1142, %v1172
  %v1209 = vadd.f32 %v1143, %v1171
  %v1210 = vadd.f32 %v1144, %v1172
  %v1211 = vadd.f32 %v1145, %v1171
  %v1212 = vadd.f32 %v1146, %v1172
  %v1213 = vadd.f32 %v1147, %v1171
  %v1214 = vadd.f32 %v1148, %v1172
  %v1215 = vadd.f32 %v1149, %v1171
  %v1216 = vadd.f32 %v1150, %v1172
  %v1217 = vadd.f32 %v1151, %v1171
  %v1218 = vadd.f32 %v1152, %v1172
  %v1219 = vadd.f32 %v1153, %v1171
  %v1220 = vadd.f32 %v1154, %v1172
  %v1221 = vadd.f32 %v1155, %v1171
  %v1222 = vadd.f32 %v1156, %v1172
  %v1223 = vadd.f32 %v1157, %v1171
  %v1224 = vadd.f32 %v1158, %v1172
  %v1225 = vadd.f32 %v1159, %v1171
  %v1226 = vadd.f32 %v1160, %v1172
  %v1227 = vadd.f32 %v1161, %v1171
  %v1228 = vadd.f32 %v1162, %v1172
  %v1229 = vadd.f32 %v1163, %v1171
  %v1230 = vadd.f32 %v1164, %v1172
  %v1231 = vadd.f32 %v1165, %v1171
  %v1232 = vadd.f32 %v1166, %v1172
  %v1233 = vadd.f32 %v1167, %v1171
  %v1234 = vadd.f32 %v1168, %v1172
  %v1235 = vmax.f32 %v1175, 0.0
  %v1236 = vmax.f32 %v1176, 0.0
  %v1237 = vmax.f32 %v1177, 0.0
  %v1238 = vmax.f32 %v1178, 0.0
  %v1239 = vmax.f32 %v1179, 0.0
  %v1240 = vmax.f32 %v1180, 0.0
  %v1241 = vmax.f32 %v1181, 0.0
  %v1242 = vmax.f32 %v1182, 0.0
  %v1243 = vmax.f32 %v1183, 0.0
  %v1244 = vmax.f32 %v1184, 0.0
  %v1245 = vmax.f32 %v1185, 0.0
  %v1246 = vmax.f32 %v1186, 0.0
  %v1247 = vmax.f32 %v1187, 0.0
  %v1248 = vmax.f32 %v1188, 0.0
  %v1249 = vmax.f32 %v1189, 0.0
  %v1250 = vmax.f32 %v1190, 0.0
  %v1251 = vmax.f32 %v1191, 0.0
  %v1252 = vmax.f32 %v1192, 0.0
  %v1253 = vmax.f32 %v1193, 0.0
  %v1254 = vmax.f32 %v1194, 0.0
  %v1255 = vmax.f32 %v1195, 0.0
  %v1256 = vmax.f32 %v1196, 0.0
  %v1257 = vmax.f32 %v1197, 0.0
  %v1258 = vmax.f32 %v1198, 0.0
  %v1259 = vmax.f32 %v1199, 0.0
  %v1260 = vmax.f32 %v1200, 0.0
  %v1261 = vmax.f32 %v1201, 0.0
  %v1262 = vmax.f32 %v1202, 0.0
  %v1263 = vmax.f32 %v1203, 0.0
  %v1264 = vmax.f32 %v1204, 0.0
  %v1265 = vmax.f32 %v1205, 0.0
  %v1266 = vmax.f32 %v1206, 0.0
  %v1267 = vmax.f32 %v1207, 0.0
  %v1268 = vmax.f32 %v1208, 0.0
  %v1269 = vmax.f32 %v1209, 0.0
  %v1270 = vmax.f32 %v1210, 0.0
  %v1271 = vmax.f32 %v1211, 0.0
  %v1272 = vmax.f32 %v1212, 0.0
  %v1273 = vmax.f32 %v1213, 0.0
  %v1274 = vmax.f32 %v1214, 0.0
  %v1275 = vmax.f32 %v1215, 0.0
  %v1276 = vmax.f32 %v1216, 0.0
  %v1277 = vmax.f32 %v1217, 0.0
  %v1278 = vmax.f32 %v1218, 0.0
  %v1279 = vmax.f32 %v1219, 0.0
  %v1280 = vmax.f32 %v1220, 0.0
  %v1281 = vmax.f32 %v1221, 0.0
  %v1282 = vmax.f32 %v1222, 0.0
  %v1283 = vmax.f32 %v1223, 0.0
  %v1284 = vmax.f32 %v1224, 0.0
  %v1285 = vmax.f32 %v1225, 0.0
  %v1286 = vmax.f32 %v1226, 0.0
  %v1287 = vmax.f32 %v1227, 0.0
  %v1288 = vmax.f32 %v1228, 0.0
  %v1289 = vmax.f32 %v1229, 0.0
  %v1290 = vmax.f32 %v1230, 0.0
  %v1291 = vmax.f32 %v1231, 0.0
  %v1292 = vmax.f32 %v1232, 0.0
  %v1293 = vmax.f32 %v1233, 0.0
  %v1294 = vmax.f32 %v1234, 0.0
  %v1295 = vld [vmem:[%s4] sm:$0xff]
  %v1296 = vld [vmem:[%s4 + $0x8] sm:$0xff]
  %v1297 = vld [vmem:[%s4 + $0x10] sm:$0xff]
  %v1298 = vld [vmem:[%s4 + $0x18] sm:$0xff]
  %v1299 = vld [vmem:[%s4 + $0x20] sm:$0xff]
  %v1300 = vld [vmem:[%s4 + $0x28] sm:$0xff]
  %v1301 = vld [vmem:[%s4 + $0x30] sm:$0xff]
  %v1302 = vld [vmem:[%s4 + $0x38] sm:$0xff]
  %v1303 = vld [vmem:[%s4 + $0x40] sm:$0xff]
  %v1304 = vld [vmem:[%s4 + $0x48] sm:$0xff]
  %v1305 = vld [vmem:[%s4 + $0x50] sm:$0xff]
  %v1306 = vld [vmem:[%s4 + $0x58] sm:$0xff]
  %v1307 = vld [vmem:[%s4 + $0x60] sm:$0xff]
  %v1308 = vld [vmem:[%s4 + $0x68] sm:$0xff]
  %v1309 = vld [vmem:[%s4 + $0x70] sm:$0xff]
  %v1310 = vld [vmem:[%s4 + $0x78] sm:$0xff]
  %v1311 = vld [vmem:[%s4 + $0x80] sm:$0xff]
  %v1312 = vld [vmem:[%s4 + $0x88] sm:$0xff]
  %v1313 = vld [vmem:[%s4 + $0x90] sm:$0xff]
  %v1314 = vld [vmem:[%s4 + $0x98] sm:$0xff]
  %v1315 = vld [vmem:[%s4 + $0xa0] sm:$0xff]
  %v1316 = vld [vmem:[%s4 + $0xa8] sm:$0xff]
  %v1317 = vld [vmem:[%s4 + $0xb0] sm:$0xff]
  %v1318 = vld [vmem:[%s4 + $0xb8] sm:$0xff]
  %v1319 = vld [vmem:[%s4 + $0xc0] sm:$0xff]
  %v1320 = vld [vmem:[%s4 + $0xc8] sm:$0xff]
  %v1321 = vld [vmem:[%s4 + $0xd0] sm:$0xff]
  %v1322 = vld [vmem:[%s4 + $0xd8] sm:$0xff]
  %v1323 = vld [vmem:[%s4 + $0xe0] sm:$0xff]
  %v1324 = vld [vmem:[%s4 + $0xe8] sm:$0xff]
  %v1325 = vld [vmem:[%s4 + $0xf0] sm:$0xff]
  %v1326 = vld [vmem:[%s4 + $0xf8] sm:$0xff]
  %v1327 = vld [vmem:[%s4 + $0x100] sm:$0x3]
  %v1328 = vld [vmem:[%s4 + $0x108] sm:$0x3]
  %v1389 = vrot.slane %v1235, 1
  %v1390 = vrot.slane %v1237, 1
  %v1391 = vsel %vm135, %v1389, %v1390
  %v1392 = vrot.slane %v1236, 1
  %v1393 = vrot.slane %v1238, 1
  %v1394 = vsel %vm135, %v1392, %v1393
  %v1395 = vrot.slane %v1239, 1
  %v1396 = vsel %vm135, %v1390, %v1395
  %v1397 = vrot.slane %v1240, 1
  %v1398 = vsel %vm135, %v1393, %v1397
  %v1399 = vrot.slane %v1241, 1
  %v1400 = vsel %vm135, %v1395, %v1399
  %v1401 = vrot.slane %v1242, 1
  %v1402 = vsel %vm135, %v1397, %v1401
  %v1403 = vrot.slane %v1243, 1
  %v1404 = vsel %vm135, %v1399, %v1403
  %v1405 = vrot.slane %v1244, 1
  %v1406 = vsel %vm135, %v1401, %v1405
  %v1407 = vrot.slane %v1245, 1
  %v1408 = vsel %vm135, %v1403, %v1407
  %v1409 = vrot.slane %v1246, 1
  %v1410 = vsel %vm135, %v1405, %v1409
  %v1411 = vrot.slane %v1247, 1
  %v1412 = vsel %vm135, %v1407, %v1411
  %v1413 = vrot.slane %v1248, 1
  %v1414 = vsel %vm135, %v1409, %v1413
  %v1415 = vrot.slane %v1249, 1
  %v1416 = vsel %vm135, %v1411, %v1415
  %v1417 = vrot.slane %v1250, 1
  %v1418 = vsel %vm135, %v1413, %v1417
  %v1419 = vrot.slane %v1251, 1
  %v1420 = vsel %vm135, %v1415, %v1419
  %v1421 = vrot.slane %v1252, 1
  %v1422 = vsel %vm135, %v1417, %v1421
  %v1423 = vrot.slane %v1253, 1
  %v1424 = vsel %vm135, %v1419, %v1423
  %v1425 = vrot.slane %v1254, 1
  %v1426 = vsel %vm135, %v1421, %v1425
  %v1427 = vrot.slane %v1255, 1
  %v1428 = vsel %vm135, %v1423, %v1427
  %v1429 = vrot.slane %v1256, 1
  %v1430 = vsel %vm135, %v1425, %v1429
  %v1431 = vrot.slane %v1257, 1
  %v1432 = vsel %vm135, %v1427, %v1431
  %v1433 = vrot.slane %v1258, 1
  %v1434 = vsel %vm135, %v1429, %v1433
  %v1435 = vrot.slane %v1259, 1
  %v1436 = vsel %vm135, %v1431, %v1435
  %v1437 = vrot.slane %v1260, 1
  %v1438 = vsel %vm135, %v1433, %v1437
  %v1439 = vrot.slane %v1261, 1
  %v1440 = vsel %vm135, %v1435, %v1439
  %v1441 = vrot.slane %v1262, 1
  %v1442 = vsel %vm135, %v1437, %v1441
  %v1443 = vrot.slane %v1263, 1
  %v1444 = vsel %vm135, %v1439, %v1443
  %v1445 = vrot.slane %v1264, 1
  %v1446 = vsel %vm135, %v1441, %v1445
  %v1447 = vrot.slane %v1265, 1
  %v1448 = vsel %vm135, %v1443, %v1447
  %v1449 = vrot.slane %v1266, 1
  %v1450 = vsel %vm135, %v1445, %v1449
  %v1451 = vrot.slane %v1267, 1
  %v1452 = vsel %vm135, %v1447, %v1451
  %v1453 = vrot.slane %v1268, 1
  %v1454 = vsel %vm135, %v1449, %v1453
  %v1455 = vrot.slane %v1269, 1
  %v1456 = vsel %vm135, %v1451, %v1455
  %v1457 = vrot.slane %v1270, 1
  %v1458 = vsel %vm135, %v1453, %v1457
  %v1459 = vrot.slane %v1271, 1
  %v1460 = vsel %vm135, %v1455, %v1459
  %v1461 = vrot.slane %v1272, 1
  %v1462 = vsel %vm135, %v1457, %v1461
  %v1463 = vrot.slane %v1273, 1
  %v1464 = vsel %vm135, %v1459, %v1463
  %v1465 = vrot.slane %v1274, 1
  %v1466 = vsel %vm135, %v1461, %v1465
  %v1467 = vrot.slane %v1275, 1
  %v1468 = vsel %vm135, %v1463, %v1467
  %v1469 = vrot.slane %v1276, 1
  %v1470 = vsel %vm135, %v1465, %v1469
  %v1471 = vrot.slane %v1277, 1
  %v1472 = vsel %vm135, %v1467, %v1471
  %v1473 = vrot.slane %v1278, 1
  %v1474 = vsel %vm135, %v1469, %v1473
  %v1475 = vrot.slane %v1279, 1
  %v1476 = vsel %vm135, %v1471, %v1475
  %v1477 = vrot.slane %v1280, 1
  %v1478 = vsel %vm135, %v1473, %v1477
  %v1479 = vrot.slane %v1281, 1
  %v1480 = vsel %vm135, %v1475, %v1479
  %v1481 = vrot.slane %v1282, 1
  %v1482 = vsel %vm135, %v1477, %v1481
  %v1483 = vrot.slane %v1283, 1
  %v1484 = vsel %vm135, %v1479, %v1483
  %v1485 = vrot.slane %v1284, 1
  %v1486 = vsel %vm135, %v1481, %v1485
  %v1487 = vrot.slane %v1285, 1
  %v1488 = vsel %vm135, %v1483, %v1487
  %v1489 = vrot.slane %v1286, 1
  %v1490 = vsel %vm135, %v1485, %v1489
  %v1491 = vrot.slane %v1287, 1
  %v1492 = vsel %vm135, %v1487, %v1491
  %v1493 = vrot.slane %v1288, 1
  %v1494 = vsel %vm135, %v1489, %v1493
  %v1495 = vrot.slane %v1289, 1
  %v1496 = vsel %vm135, %v1491, %v1495
  %v1497 = vrot.slane %v1290, 1
  %v1498 = vsel %vm135, %v1493, %v1497
  %v1499 = vrot.slane %v1291, 1
  %v1500 = vsel %vm135, %v1495, %v1499
  %v1501 = vrot.slane %v1292, 1
  %v1502 = vsel %vm135, %v1497, %v1501
  %v1503 = vrot.slane %v1293, 1
  %v1504 = vsel %vm135, %v1499, %v1503
  %v1505 = vrot.slane %v1294, 1
  %v1506 = vsel %vm135, %v1501, %v1505
  %v1567 = vmax.f32 %v1235, %v1391
  %v1568 = vmax.f32 %v1236, %v1394
  %v1569 = vmax.f32 %v1237, %v1396
  %v1570 = vmax.f32 %v1238, %v1398
  %v1571 = vmax.f32 %v1239, %v1400
  %v1572 = vmax.f32 %v1240, %v1402
  %v1573 = vmax.f32 %v1241, %v1404
  %v1574 = vmax.f32 %v1242, %v1406
  %v1575 = vmax.f32 %v1243, %v1408
  %v1576 = vmax.f32 %v1244, %v1410
  %v1577 = vmax.f32 %v1245, %v1412
  %v1578 = vmax.f32 %v1246, %v1414
  %v1579 = vmax.f32 %v1247, %v1416
  %v1580 = vmax.f32 %v1248, %v1418
  %v1581 = vmax.f32 %v1249, %v1420
  %v1582 = vmax.f32 %v1250, %v1422
  %v1583 = vmax.f32 %v1251, %v1424
  %v1584 = vmax.f32 %v1252, %v1426
  %v1585 = vmax.f32 %v1253, %v1428
  %v1586 = vmax.f32 %v1254, %v1430
  %v1587 = vmax.f32 %v1255, %v1432
  %v1588 = vmax.f32 %v1256, %v1434
  %v1589 = vmax.f32 %v1257, %v1436
  %v1590 = vmax.f32 %v1258, %v1438
  %v1591 = vmax.f32 %v1259, %v1440
  %v1592 = vmax.f32 %v1260, %v1442
  %v1593 = vmax.f32 %v1261, %v1444
  %v1594 = vmax.f32 %v1262, %v1446
  %v1595 = vmax.f32 %v1263, %v1448
  %v1596 = vmax.f32 %v1264, %v1450
  %v1597 = vmax.f32 %v1265, %v1452
  %v1598 = vmax.f32 %v1266, %v1454
  %v1599 = vmax.f32 %v1267, %v1456
  %v1600 = vmax.f32 %v1268, %v1458
  %v1601 = vmax.f32 %v1269, %v1460
  %v1602 = vmax.f32 %v1270, %v1462
  %v1603 = vmax.f32 %v1271, %v1464
  %v1604 = vmax.f32 %v1272, %v1466
  %v1605 = vmax.f32 %v1273, %v1468
  %v1606 = vmax.f32 %v1274, %v1470
  %v1607 = vmax.f32 %v1275, %v1472
  %v1608 = vmax.f32 %v1276, %v1474
  %v1609 = vmax.f32 %v1277, %v1476
  %v1610 = vmax.f32 %v1278, %v1478
  %v1611 = vmax.f32 %v1279, %v1480
  %v1612 = vmax.f32 %v1280, %v1482
  %v1613 = vmax.f32 %v1281, %v1484
  %v1614 = vmax.f32 %v1282, %v1486
  %v1615 = vmax.f32 %v1283, %v1488
  %v1616 = vmax.f32 %v1284, %v1490
  %v1617 = vmax.f32 %v1285, %v1492
  %v1618 = vmax.f32 %v1286, %v1494
  %v1619 = vmax.f32 %v1287, %v1496
  %v1620 = vmax.f32 %v1288, %v1498
  %v1621 = vmax.f32 %v1289, %v1500
  %v1622 = vmax.f32 %v1290, %v1502
  %v1623 = vmax.f32 %v1291, %v1504
  %v1624 = vmax.f32 %v1292, %v1506
  %v1625 = vmax.f32 %v1293, %v1503
  %v1626 = vmax.f32 %v1294, %v1505
  %1687 = vrot.lane.b32.xlu0 %v1567, 120
  %v1688 = vpop.permute.xlu0 %1687
  %1689 = vrot.lane.b32.xlu0 %v1568, 120
  %v1690 = vpop.permute.xlu0 %1689
  %1691 = vrot.lane.b32.xlu0 %v1569, 120
  %v1692 = vpop.permute.xlu0 %1691
  %1693 = vrot.lane.b32.xlu0 %v1570, 120
  %v1694 = vpop.permute.xlu0 %1693
  %1695 = vrot.lane.b32.xlu0 %v1571, 120
  %v1696 = vpop.permute.xlu0 %1695
  %1697 = vrot.lane.b32.xlu0 %v1572, 120
  %v1698 = vpop.permute.xlu0 %1697
  %1699 = vrot.lane.b32.xlu0 %v1573, 120
  %v1700 = vpop.permute.xlu0 %1699
  %1701 = vrot.lane.b32.xlu0 %v1574, 120
  %v1702 = vpop.permute.xlu0 %1701
  %1703 = vrot.lane.b32.xlu0 %v1575, 120
  %v1704 = vpop.permute.xlu0 %1703
  %1705 = vrot.lane.b32.xlu0 %v1576, 120
  %v1706 = vpop.permute.xlu0 %1705
  %1707 = vrot.lane.b32.xlu0 %v1577, 120
  %v1708 = vpop.permute.xlu0 %1707
  %1709 = vrot.lane.b32.xlu0 %v1578, 120
  %v1710 = vpop.permute.xlu0 %1709
  %1711 = vrot.lane.b32.xlu0 %v1579, 120
  %v1712 = vpop.permute.xlu0 %1711
  %1713 = vrot.lane.b32.xlu0 %v1580, 120
  %v1714 = vpop.permute.xlu0 %1713
  %1715 = vrot.lane.b32.xlu0 %v1581, 120
  %v1716 = vpop.permute.xlu0 %1715
  %1717 = vrot.lane.b32.xlu0 %v1582, 120
  %v1718 = vpop.permute.xlu0 %1717
  %1719 = vrot.lane.b32.xlu0 %v1583, 120
  %v1720 = vpop.permute.xlu0 %1719
  %1721 = vrot.lane.b32.xlu0 %v1584, 120
  %v1722 = vpop.permute.xlu0 %1721
  %1723 = vrot.lane.b32.xlu0 %v1585, 120
  %v1724 = vpop.permute.xlu0 %1723
  %1725 = vrot.lane.b32.xlu0 %v1586, 120
  %v1726 = vpop.permute.xlu0 %1725
  %1727 = vrot.lane.b32.xlu0 %v1587, 120
  %v1728 = vpop.permute.xlu0 %1727
  %1729 = vrot.lane.b32.xlu0 %v1588, 120
  %v1730 = vpop.permute.xlu0 %1729
  %1731 = vrot.lane.b32.xlu0 %v1589, 120
  %v1732 = vpop.permute.xlu0 %1731
  %1733 = vrot.lane.b32.xlu0 %v1590, 120
  %v1734 = vpop.permute.xlu0 %1733
  %1735 = vrot.lane.b32.xlu0 %v1591, 120
  %v1736 = vpop.permute.xlu0 %1735
  %1737 = vrot.lane.b32.xlu0 %v1592, 120
  %v1738 = vpop.permute.xlu0 %1737
  %1739 = vrot.lane.b32.xlu0 %v1593, 120
  %v1740 = vpop.permute.xlu0 %1739
  %1741 = vrot.lane.b32.xlu0 %v1594, 120
  %v1742 = vpop.permute.xlu0 %1741
  %1743 = vrot.lane.b32.xlu0 %v1595, 120
  %v1744 = vpop.permute.xlu0 %1743
  %1745 = vrot.lane.b32.xlu0 %v1596, 120
  %v1746 = vpop.permute.xlu0 %1745
  %1747 = vrot.lane.b32.xlu0 %v1597, 120
  %v1748 = vpop.permute.xlu0 %1747
  %1749 = vrot.lane.b32.xlu0 %v1598, 120
  %v1750 = vpop.permute.xlu0 %1749
  %1751 = vrot.lane.b32.xlu0 %v1599, 120
  %v1752 = vpop.permute.xlu0 %1751
  %1753 = vrot.lane.b32.xlu0 %v1600, 120
  %v1754 = vpop.permute.xlu0 %1753
  %1755 = vrot.lane.b32.xlu0 %v1601, 120
  %v1756 = vpop.permute.xlu0 %1755
  %1757 = vrot.lane.b32.xlu0 %v1602, 120
  %v1758 = vpop.permute.xlu0 %1757
  %1759 = vrot.lane.b32.xlu0 %v1603, 120
  %v1760 = vpop.permute.xlu0 %1759
  %1761 = vrot.lane.b32.xlu0 %v1604, 120
  %v1762 = vpop.permute.xlu0 %1761
  %1763 = vrot.lane.b32.xlu0 %v1605, 120
  %v1764 = vpop.permute.xlu0 %1763
  %1765 = vrot.lane.b32.xlu0 %v1606, 120
  %v1766 = vpop.permute.xlu0 %1765
  %1767 = vrot.lane.b32.xlu0 %v1607, 120
  %v1768 = vpop.permute.xlu0 %1767
  %1769 = vrot.lane.b32.xlu0 %v1608, 120
  %v1770 = vpop.permute.xlu0 %1769
  %1771 = vrot.lane.b32.xlu0 %v1609, 120
  %v1772 = vpop.permute.xlu0 %1771
  %1773 = vrot.lane.b32.xlu0 %v1610, 120
  %v1774 = vpop.permute.xlu0 %1773
  %1775 = vrot.lane.b32.xlu0 %v1611, 120
  %v1776 = vpop.permute.xlu0 %1775
  %1777 = vrot.lane.b32.xlu0 %v1612, 120
  %v1778 = vpop.permute.xlu0 %1777
  %1779 = vrot.lane.b32.xlu0 %v1613, 120
  %v1780 = vpop.permute.xlu0 %1779
  %1781 = vrot.lane.b32.xlu0 %v1614, 120
  %v1782 = vpop.permute.xlu0 %1781
  %1783 = vrot.lane.b32.xlu0 %v1615, 120
  %v1784 = vpop.permute.xlu0 %1783
  %1785 = vrot.lane.b32.xlu0 %v1616, 120
  %v1786 = vpop.permute.xlu0 %1785
  %1787 = vrot.lane.b32.xlu0 %v1617, 120
  %v1788 = vpop.permute.xlu0 %1787
  %1789 = vrot.lane.b32.xlu0 %v1618, 120
  %v1790 = vpop.permute.xlu0 %1789
  %1791 = vrot.lane.b32.xlu0 %v1619, 120
  %v1792 = vpop.permute.xlu0 %1791
  %1793 = vrot.lane.b32.xlu0 %v1620, 120
  %v1794 = vpop.permute.xlu0 %1793
  %1795 = vrot.lane.b32.xlu0 %v1621, 120
  %v1796 = vpop.permute.xlu0 %1795
  %1797 = vrot.lane.b32.xlu0 %v1622, 120
  %v1798 = vpop.permute.xlu0 %1797
  %1799 = vrot.lane.b32.xlu0 %v1623, 120
  %v1800 = vpop.permute.xlu0 %1799
  %1801 = vrot.lane.b32.xlu0 %v1624, 120
  %v1802 = vpop.permute.xlu0 %1801
  %1803 = vrot.lane.b32.xlu0 %v1625, 120
  %v1804 = vpop.permute.xlu0 %1803
  %1805 = vrot.lane.b32.xlu0 %v1626, 120
  %v1806 = vpop.permute.xlu0 %1805
  %vm1807 = vcmask 982016
  %v1808 = vsel %vm1807, %v1688, %v1690
  %v1809 = vsel %vm1807, %v1692, %v1694
  %v1810 = vsel %vm1807, %v1696, %v1698
  %v1811 = vsel %vm1807, %v1700, %v1702
  %v1812 = vsel %vm1807, %v1704, %v1706
  %v1813 = vsel %vm1807, %v1708, %v1710
  %v1814 = vsel %vm1807, %v1712, %v1714
  %v1815 = vsel %vm1807, %v1716, %v1718
  %v1816 = vsel %vm1807, %v1720, %v1722
  %v1817 = vsel %vm1807, %v1724, %v1726
  %v1818 = vsel %vm1807, %v1728, %v1730
  %v1819 = vsel %vm1807, %v1732, %v1734
  %v1820 = vsel %vm1807, %v1736, %v1738
  %v1821 = vsel %vm1807, %v1740, %v1742
  %v1822 = vsel %vm1807, %v1744, %v1746
  %v1823 = vsel %vm1807, %v1748, %v1750
  %v1824 = vsel %vm1807, %v1752, %v1754
  %v1825 = vsel %vm1807, %v1756, %v1758
  %v1826 = vsel %vm1807, %v1760, %v1762
  %v1827 = vsel %vm1807, %v1764, %v1766
  %v1828 = vsel %vm1807, %v1768, %v1770
  %v1829 = vsel %vm1807, %v1772, %v1774
  %v1830 = vsel %vm1807, %v1776, %v1778
  %v1831 = vsel %vm1807, %v1780, %v1782
  %v1832 = vsel %vm1807, %v1784, %v1786
  %v1833 = vsel %vm1807, %v1788, %v1790
  %v1834 = vsel %vm1807, %v1792, %v1794
  %v1835 = vsel %vm1807, %v1796, %v1798
  %v1836 = vsel %vm1807, %v1800, %v1802
  %v1837 = vsel %vm1807, %v1804, %v1806
  %v1898 = vmax.f32 %v1567, %v1808
  %v1899 = vmax.f32 %v1568, %v1690
  %v1900 = vmax.f32 %v1569, %v1809
  %v1901 = vmax.f32 %v1570, %v1694
  %v1902 = vmax.f32 %v1571, %v1810
  %v1903 = vmax.f32 %v1572, %v1698
  %v1904 = vmax.f32 %v1573, %v1811
  %v1905 = vmax.f32 %v1574, %v1702
  %v1906 = vmax.f32 %v1575, %v1812
  %v1907 = vmax.f32 %v1576, %v1706
  %v1908 = vmax.f32 %v1577, %v1813
  %v1909 = vmax.f32 %v1578, %v1710
  %v1910 = vmax.f32 %v1579, %v1814
  %v1911 = vmax.f32 %v1580, %v1714
  %v1912 = vmax.f32 %v1581, %v1815
  %v1913 = vmax.f32 %v1582, %v1718
  %v1914 = vmax.f32 %v1583, %v1816
  %v1915 = vmax.f32 %v1584, %v1722
  %v1916 = vmax.f32 %v1585, %v1817
  %v1917 = vmax.f32 %v1586, %v1726
  %v1918 = vmax.f32 %v1587, %v1818
  %v1919 = vmax.f32 %v1588, %v1730
  %v1920 = vmax.f32 %v1589, %v1819
  %v1921 = vmax.f32 %v1590, %v1734
  %v1922 = vmax.f32 %v1591, %v1820
  %v1923 = vmax.f32 %v1592, %v1738
  %v1924 = vmax.f32 %v1593, %v1821
  %v1925 = vmax.f32 %v1594, %v1742
  %v1926 = vmax.f32 %v1595, %v1822
  %v1927 = vmax.f32 %v1596, %v1746
  %v1928 = vmax.f32 %v1597, %v1823
  %v1929 = vmax.f32 %v1598, %v1750
  %v1930 = vmax.f32 %v1599, %v1824
  %v1931 = vmax.f32 %v1600, %v1754
  %v1932 = vmax.f32 %v1601, %v1825
  %v1933 = vmax.f32 %v1602, %v1758
  %v1934 = vmax.f32 %v1603, %v1826
  %v1935 = vmax.f32 %v1604, %v1762
  %v1936 = vmax.f32 %v1605, %v1827
  %v1937 = vmax.f32 %v1606, %v1766
  %v1938 = vmax.f32 %v1607, %v1828
  %v1939 = vmax.f32 %v1608, %v1770
  %v1940 = vmax.f32 %v1609, %v1829
  %v1941 = vmax.f32 %v1610, %v1774
  %v1942 = vmax.f32 %v1611, %v1830
  %v1943 = vmax.f32 %v1612, %v1778
  %v1944 = vmax.f32 %v1613, %v1831
  %v1945 = vmax.f32 %v1614, %v1782
  %v1946 = vmax.f32 %v1615, %v1832
  %v1947 = vmax.f32 %v1616, %v1786
  %v1948 = vmax.f32 %v1617, %v1833
  %v1949 = vmax.f32 %v1618, %v1790
  %v1950 = vmax.f32 %v1619, %v1834
  %v1951 = vmax.f32 %v1620, %v1794
  %v1952 = vmax.f32 %v1621, %v1835
  %v1953 = vmax.f32 %v1622, %v1798
  %v1954 = vmax.f32 %v1623, %v1836
  %v1955 = vmax.f32 %v1624, %v1802
  %v1956 = vmax.f32 %v1625, %v1837
  %v1957 = vmax.f32 %v1626, %v1806
  %v1958 = vld [vmem:[%s3] sm:$0xff]
  %v1959 = vld [vmem:[%s3 + $0x8] sm:$0xff]
  %v1960 = vld [vmem:[%s3 + $0x10] sm:$0xff]
  %v1961 = vld [vmem:[%s3 + $0x18] sm:$0xff]
  %v1962 = vld [vmem:[%s3 + $0x20] sm:$0xff]
  %v1963 = vld [vmem:[%s3 + $0x28] sm:$0xff]
  %v1964 = vld [vmem:[%s3 + $0x30] sm:$0xff]
  %v1965 = vld [vmem:[%s3 + $0x38] sm:$0xff]
  %v1966 = vld [vmem:[%s3 + $0x40] sm:$0xff]
  %v1967 = vld [vmem:[%s3 + $0x48] sm:$0xff]
  %v1968 = vld [vmem:[%s3 + $0x50] sm:$0xff]
  %v1969 = vld [vmem:[%s3 + $0x58] sm:$0xff]
  %v1970 = vld [vmem:[%s3 + $0x60] sm:$0xff]
  %v1971 = vld [vmem:[%s3 + $0x68] sm:$0xff]
  %v1972 = vld [vmem:[%s3 + $0x70] sm:$0xff]
  %v1973 = vld [vmem:[%s3 + $0x78] sm:$0xff]
  %v1974 = vld [vmem:[%s3 + $0x80] sm:$0xff]
  %v1975 = vld [vmem:[%s3 + $0x88] sm:$0xff]
  %v1976 = vld [vmem:[%s3 + $0x90] sm:$0xff]
  %v1977 = vld [vmem:[%s3 + $0x98] sm:$0xff]
  %v1978 = vld [vmem:[%s3 + $0xa0] sm:$0xff]
  %v1979 = vld [vmem:[%s3 + $0xa8] sm:$0xff]
  %v1980 = vld [vmem:[%s3 + $0xb0] sm:$0xff]
  %v1981 = vld [vmem:[%s3 + $0xb8] sm:$0xff]
  %v1982 = vld [vmem:[%s3 + $0xc0] sm:$0xff]
  %v1983 = vld [vmem:[%s3 + $0xc8] sm:$0xff]
  %v1984 = vld [vmem:[%s3 + $0xd0] sm:$0xff]
  %vm1985 = vcmask 719872
  %v1987 = vsel %vm1985, %v1899, 0
  %v1990 = vsel %vm1985, %v1901, 0
  %v1993 = vsel %vm1985, %v1903, 0
  %v1996 = vsel %vm1985, %v1905, 0
  %v1999 = vsel %vm1985, %v1907, 0
  %v2002 = vsel %vm1985, %v1909, 0
  %v2005 = vsel %vm1985, %v1911, 0
  %v2008 = vsel %vm1985, %v1913, 0
  %v2011 = vsel %vm1985, %v1915, 0
  %v2014 = vsel %vm1985, %v1917, 0
  %v2017 = vsel %vm1985, %v1919, 0
  %v2020 = vsel %vm1985, %v1921, 0
  %v2023 = vsel %vm1985, %v1923, 0
  %v2026 = vsel %vm1985, %v1925, 0
  %v2029 = vsel %vm1985, %v1927, 0
  %v2032 = vsel %vm1985, %v1929, 0
  %v2035 = vsel %vm1985, %v1931, 0
  %v2038 = vsel %vm1985, %v1933, 0
  %v2041 = vsel %vm1985, %v1935, 0
  %v2044 = vsel %vm1985, %v1937, 0
  %v2047 = vsel %vm1985, %v1939, 0
  %v2050 = vsel %vm1985, %v1941, 0
  %v2053 = vsel %vm1985, %v1943, 0
  %v2056 = vsel %vm1985, %v1945, 0
  %v2059 = vsel %vm1985, %v1947, 0
  %v2062 = vsel %vm1985, %v1949, 0
  %v2065 = vsel %vm1985, %v1951, 0
  %v2068 = vsel %vm1985, %v1953, 0
  %v2071 = vsel %vm1985, %v1955, 0
  %v2074 = vsel %vm1985, %v1957, 0
  %2076 = vmatpush.msra.mxu0 %v1973
  %2077 = vmatpush.msra.mxu0 %v1972
  %2078 = vmatpush.msra.mxu0 %v1971
  %2079 = vmatpush.msra.mxu0 %v1970
  %2080 = vmatpush.msra.mxu0 %v1969
  %2081 = vmatpush.msra.mxu0 %v1968
  %2082 = vmatpush.msra.mxu0 %v1967
  %2083 = vmatpush.msra.mxu0 %v1966
  %2084 = vmatpush.msra.mxu0 %v1965
  %2085 = vmatpush.msra.mxu0 %v1964
  %2086 = vmatpush.msra.mxu0 %v1963
  %2087 = vmatpush.msra.mxu0 %v1962
  %2088 = vmatpush.msra.mxu0 %v1961
  %2089 = vmatpush.msra.mxu0 %v1960
  %2090 = vmatpush.msra.mxu0 %v1959
  %2091 = vmatpush.msra.mxu0 %v1958
  %2092 = vmatmul.f32.gmra.mxu0 %v1898
  %v2093 = vpop.f32.mrf.mxu0
  %v2094 = vadd.f32 0.0, %v2093
  %2095 = vmatmul.f32.gmra.mxu0 %v1900
  %v2096 = vpop.f32.mrf.mxu0
  %v2097 = vadd.f32 0.0, %v2096
  %2098 = vmatmul.f32.gmra.mxu0 %v1902
  %v2099 = vpop.f32.mrf.mxu0
  %v2100 = vadd.f32 0.0, %v2099
  %2101 = vmatmul.f32.gmra.mxu0 %v1904
  %v2102 = vpop.f32.mrf.mxu0
  %v2103 = vadd.f32 0.0, %v2102
  %2104 = vmatmul.f32.gmra.mxu0 %v1906
  %v2105 = vpop.f32.mrf.mxu0
  %v2106 = vadd.f32 0.0, %v2105
  %2107 = vmatmul.f32.gmra.mxu0 %v1908
  %v2108 = vpop.f32.mrf.mxu0
  %v2109 = vadd.f32 0.0, %v2108
  %2110 = vmatmul.f32.gmra.mxu0 %v1910
  %v2111 = vpop.f32.mrf.mxu0
  %v2112 = vadd.f32 0.0, %v2111
  %2113 = vmatmul.f32.gmra.mxu0 %v1912
  %v2114 = vpop.f32.mrf.mxu0
  %v2115 = vadd.f32 0.0, %v2114
  %2116 = vmatmul.f32.gmra.mxu0 %v1914
  %v2117 = vpop.f32.mrf.mxu0
  %v2118 = vadd.f32 0.0, %v2117
  %2119 = vmatmul.f32.gmra.mxu0 %v1916
  %v2120 = vpop.f32.mrf.mxu0
  %v2121 = vadd.f32 0.0, %v2120
  %2122 = vmatmul.f32.gmra.mxu0 %v1918
  %v2123 = vpop.f32.mrf.mxu0
  %v2124 = vadd.f32 0.0, %v2123
  %2125 = vmatmul.f32.gmra.mxu0 %v1920
  %v2126 = vpop.f32.mrf.mxu0
  %v2127 = vadd.f32 0.0, %v2126
  %2128 = vmatmul.f32.gmra.mxu0 %v1922
  %v2129 = vpop.f32.mrf.mxu0
  %v2130 = vadd.f32 0.0, %v2129
  %2131 = vmatmul.f32.gmra.mxu0 %v1924
  %v2132 = vpop.f32.mrf.mxu0
  %v2133 = vadd.f32 0.0, %v2132
  %2134 = vmatmul.f32.gmra.mxu0 %v1926
  %v2135 = vpop.f32.mrf.mxu0
  %v2136 = vadd.f32 0.0, %v2135
  %2137 = vmatmul.f32.gmra.mxu0 %v1928
  %v2138 = vpop.f32.mrf.mxu0
  %v2139 = vadd.f32 0.0, %v2138
  %2140 = vmatmul.f32.gmra.mxu0 %v1930
  %v2141 = vpop.f32.mrf.mxu0
  %v2142 = vadd.f32 0.0, %v2141
  %2143 = vmatmul.f32.gmra.mxu0 %v1932
  %v2144 = vpop.f32.mrf.mxu0
  %v2145 = vadd.f32 0.0, %v2144
  %2146 = vmatmul.f32.gmra.mxu0 %v1934
  %v2147 = vpop.f32.mrf.mxu0
  %v2148 = vadd.f32 0.0, %v2147
  %2149 = vmatmul.f32.gmra.mxu0 %v1936
  %v2150 = vpop.f32.mrf.mxu0
  %v2151 = vadd.f32 0.0, %v2150
  %2152 = vmatmul.f32.gmra.mxu0 %v1938
  %v2153 = vpop.f32.mrf.mxu0
  %v2154 = vadd.f32 0.0, %v2153
  %2155 = vmatmul.f32.gmra.mxu0 %v1940
  %v2156 = vpop.f32.mrf.mxu0
  %v2157 = vadd.f32 0.0, %v2156
  %2158 = vmatmul.f32.gmra.mxu0 %v1942
  %v2159 = vpop.f32.mrf.mxu0
  %v2160 = vadd.f32 0.0, %v2159
  %2161 = vmatmul.f32.gmra.mxu0 %v1944
  %v2162 = vpop.f32.mrf.mxu0
  %v2163 = vadd.f32 0.0, %v2162
  %2164 = vmatmul.f32.gmra.mxu0 %v1946
  %v2165 = vpop.f32.mrf.mxu0
  %v2166 = vadd.f32 0.0, %v2165
  %2167 = vmatmul.f32.gmra.mxu0 %v1948
  %v2168 = vpop.f32.mrf.mxu0
  %v2169 = vadd.f32 0.0, %v2168
  %2170 = vmatmul.f32.gmra.mxu0 %v1950
  %v2171 = vpop.f32.mrf.mxu0
  %v2172 = vadd.f32 0.0, %v2171
  %2173 = vmatmul.f32.gmra.mxu0 %v1952
  %v2174 = vpop.f32.mrf.mxu0
  %v2175 = vadd.f32 0.0, %v2174
  %2176 = vmatmul.f32.gmra.mxu0 %v1954
  %v2177 = vpop.f32.mrf.mxu0
  %v2178 = vadd.f32 0.0, %v2177
  %2179 = vmatmul.f32.gmra.mxu0 %v1956
  %v2180 = vpop.f32.mrf.mxu0
  %v2181 = vadd.f32 0.0, %v2180
  %2182 = vdwg.mxu0
  %2183 = vmatpush.msra.mxu0 0.0
  %2184 = vmatpush.msra.mxu0 0.0
  %2185 = vmatpush.msra.mxu0 0.0
  %2186 = vmatpush.msra.mxu0 0.0
  %2187 = vmatpush.msra.mxu0 0.0
  %2188 = vmatpush.msra.mxu0 %v1984
  %2189 = vmatpush.msra.mxu0 %v1983
  %2190 = vmatpush.msra.mxu0 %v1982
  %2191 = vmatpush.msra.mxu0 %v1981
  %2192 = vmatpush.msra.mxu0 %v1980
  %2193 = vmatpush.msra.mxu0 %v1979
  %2194 = vmatpush.msra.mxu0 %v1978
  %2195 = vmatpush.msra.mxu0 %v1977
  %2196 = vmatpush.msra.mxu0 %v1976
  %2197 = vmatpush.msra.mxu0 %v1975
  %2198 = vmatpush.msra.mxu0 %v1974
  %2199 = vmatmul.f32.gmra.mxu0 %v1987
  %v2200 = vpop.f32.mrf.mxu0
  %v2201 = vadd.f32 %v2094, %v2200
  %2202 = vmatmul.f32.gmra.mxu0 %v1990
  %v2203 = vpop.f32.mrf.mxu0
  %v2204 = vadd.f32 %v2097, %v2203
  %2205 = vmatmul.f32.gmra.mxu0 %v1993
  %v2206 = vpop.f32.mrf.mxu0
  %v2207 = vadd.f32 %v2100, %v2206
  %2208 = vmatmul.f32.gmra.mxu0 %v1996
  %v2209 = vpop.f32.mrf.mxu0
  %v2210 = vadd.f32 %v2103, %v2209
  %2211 = vmatmul.f32.gmra.mxu0 %v1999
  %v2212 = vpop.f32.mrf.mxu0
  %v2213 = vadd.f32 %v2106, %v2212
  %2214 = vmatmul.f32.gmra.mxu0 %v2002
  %v2215 = vpop.f32.mrf.mxu0
  %v2216 = vadd.f32 %v2109, %v2215
  %2217 = vmatmul.f32.gmra.mxu0 %v2005
  %v2218 = vpop.f32.mrf.mxu0
  %v2219 = vadd.f32 %v2112, %v2218
  %2220 = vmatmul.f32.gmra.mxu0 %v2008
  %v2221 = vpop.f32.mrf.mxu0
  %v2222 = vadd.f32 %v2115, %v2221
  %2223 = vmatmul.f32.gmra.mxu0 %v2011
  %v2224 = vpop.f32.mrf.mxu0
  %v2225 = vadd.f32 %v2118, %v2224
  %2226 = vmatmul.f32.gmra.mxu0 %v2014
  %v2227 = vpop.f32.mrf.mxu0
  %v2228 = vadd.f32 %v2121, %v2227
  %2229 = vmatmul.f32.gmra.mxu0 %v2017
  %v2230 = vpop.f32.mrf.mxu0
  %v2231 = vadd.f32 %v2124, %v2230
  %2232 = vmatmul.f32.gmra.mxu0 %v2020
  %v2233 = vpop.f32.mrf.mxu0
  %v2234 = vadd.f32 %v2127, %v2233
  %2235 = vmatmul.f32.gmra.mxu0 %v2023
  %v2236 = vpop.f32.mrf.mxu0
  %v2237 = vadd.f32 %v2130, %v2236
  %2238 = vmatmul.f32.gmra.mxu0 %v2026
  %v2239 = vpop.f32.mrf.mxu0
  %v2240 = vadd.f32 %v2133, %v2239
  %2241 = vmatmul.f32.gmra.mxu0 %v2029
  %v2242 = vpop.f32.mrf.mxu0
  %v2243 = vadd.f32 %v2136, %v2242
  %2244 = vmatmul.f32.gmra.mxu0 %v2032
  %v2245 = vpop.f32.mrf.mxu0
  %v2246 = vadd.f32 %v2139, %v2245
  %2247 = vmatmul.f32.gmra.mxu0 %v2035
  %v2248 = vpop.f32.mrf.mxu0
  %v2249 = vadd.f32 %v2142, %v2248
  %2250 = vmatmul.f32.gmra.mxu0 %v2038
  %v2251 = vpop.f32.mrf.mxu0
  %v2252 = vadd.f32 %v2145, %v2251
  %2253 = vmatmul.f32.gmra.mxu0 %v2041
  %v2254 = vpop.f32.mrf.mxu0
  %v2255 = vadd.f32 %v2148, %v2254
  %2256 = vmatmul.f32.gmra.mxu0 %v2044
  %v2257 = vpop.f32.mrf.mxu0
  %v2258 = vadd.f32 %v2151, %v2257
  %2259 = vmatmul.f32.gmra.mxu0 %v2047
  %v2260 = vpop.f32.mrf.mxu0
  %v2261 = vadd.f32 %v2154, %v2260
  %2262 = vmatmul.f32.gmra.mxu0 %v2050
  %v2263 = vpop.f32.mrf.mxu0
  %v2264 = vadd.f32 %v2157, %v2263
  %2265 = vmatmul.f32.gmra.mxu0 %v2053
  %v2266 = vpop.f32.mrf.mxu0
  %v2267 = vadd.f32 %v2160, %v2266
  %2268 = vmatmul.f32.gmra.mxu0 %v2056
  %v2269 = vpop.f32.mrf.mxu0
  %v2270 = vadd.f32 %v2163, %v2269
  %2271 = vmatmul.f32.gmra.mxu0 %v2059
  %v2272 = vpop.f32.mrf.mxu0
  %v2273 = vadd.f32 %v2166, %v2272
  %2274 = vmatmul.f32.gmra.mxu0 %v2062
  %v2275 = vpop.f32.mrf.mxu0
  %v2276 = vadd.f32 %v2169, %v2275
  %2277 = vmatmul.f32.gmra.mxu0 %v2065
  %v2278 = vpop.f32.mrf.mxu0
  %v2279 = vadd.f32 %v2172, %v2278
  %2280 = vmatmul.f32.gmra.mxu0 %v2068
  %v2281 = vpop.f32.mrf.mxu0
  %v2282 = vadd.f32 %v2175, %v2281
  %2283 = vmatmul.f32.gmra.mxu0 %v2071
  %v2284 = vpop.f32.mrf.mxu0
  %v2285 = vadd.f32 %v2178, %v2284
  %2286 = vmatmul.f32.gmra.mxu0 %v2074
  %v2287 = vpop.f32.mrf.mxu0
  %v2288 = vadd.f32 %v2181, %v2287
  %2289 = vdwg.mxu0
  %vm2290 = vcmask 908288
  %v2292 = vsel %vm2290, %v1296, 0
  %v2295 = vsel %vm2290, %v1298, 0
  %v2298 = vsel %vm2290, %v1300, 0
  %v2301 = vsel %vm2290, %v1302, 0
  %v2304 = vsel %vm2290, %v1304, 0
  %v2307 = vsel %vm2290, %v1306, 0
  %v2310 = vsel %vm2290, %v1308, 0
  %v2313 = vsel %vm2290, %v1310, 0
  %v2316 = vsel %vm2290, %v1312, 0
  %v2319 = vsel %vm2290, %v1314, 0
  %v2322 = vsel %vm2290, %v1316, 0
  %v2325 = vsel %vm2290, %v1318, 0
  %v2328 = vsel %vm2290, %v1320, 0
  %v2331 = vsel %vm2290, %v1322, 0
  %v2334 = vsel %vm2290, %v1324, 0
  %v2337 = vsel %vm2290, %v1326, 0
  %v2340 = vsel %vm2290, %v1328, 0
  %v2343 = vsel %vm135, %v2288, 0
  %2345 = vmatpush.msra.mxu0 %v2246
  %2346 = vmatpush.msra.mxu0 %v2243
  %2347 = vmatpush.msra.mxu0 %v2240
  %2348 = vmatpush.msra.mxu0 %v2237
  %2349 = vmatpush.msra.mxu0 %v2234
  %2350 = vmatpush.msra.mxu0 %v2231
  %2351 = vmatpush.msra.mxu0 %v2228
  %2352 = vmatpush.msra.mxu0 %v2225
  %2353 = vmatpush.msra.mxu0 %v2222
  %2354 = vmatpush.msra.mxu0 %v2219
  %2355 = vmatpush.msra.mxu0 %v2216
  %2356 = vmatpush.msra.mxu0 %v2213
  %2357 = vmatpush.msra.mxu0 %v2210
  %2358 = vmatpush.msra.mxu0 %v2207
  %2359 = vmatpush.msra.mxu0 %v2204
  %2360 = vmatpush.msra.mxu0 %v2201
  %2361 = vmatmul.f32.gmra.mxu0 %v1295
  %v2362 = vpop.f32.mrf.mxu0
  %v2363 = vadd.f32 0.0, %v2362
  %2364 = vmatmul.f32.gmra.mxu0 %v1297
  %v2365 = vpop.f32.mrf.mxu0
  %v2366 = vadd.f32 0.0, %v2365
  %2367 = vmatmul.f32.gmra.mxu0 %v1299
  %v2368 = vpop.f32.mrf.mxu0
  %v2369 = vadd.f32 0.0, %v2368
  %2370 = vmatmul.f32.gmra.mxu0 %v1301
  %v2371 = vpop.f32.mrf.mxu0
  %v2372 = vadd.f32 0.0, %v2371
  %2373 = vmatmul.f32.gmra.mxu0 %v1303
  %v2374 = vpop.f32.mrf.mxu0
  %v2375 = vadd.f32 0.0, %v2374
  %2376 = vmatmul.f32.gmra.mxu0 %v1305
  %v2377 = vpop.f32.mrf.mxu0
  %v2378 = vadd.f32 0.0, %v2377
  %2379 = vmatmul.f32.gmra.mxu0 %v1307
  %v2380 = vpop.f32.mrf.mxu0
  %v2381 = vadd.f32 0.0, %v2380
  %2382 = vmatmul.f32.gmra.mxu0 %v1309
  %v2383 = vpop.f32.mrf.mxu0
  %v2384 = vadd.f32 0.0, %v2383
  %2385 = vmatmul.f32.gmra.mxu0 %v1311
  %v2386 = vpop.f32.mrf.mxu0
  %v2387 = vadd.f32 0.0, %v2386
  %2388 = vmatmul.f32.gmra.mxu0 %v1313
  %v2389 = vpop.f32.mrf.mxu0
  %v2390 = vadd.f32 0.0, %v2389
  %2391 = vmatmul.f32.gmra.mxu0 %v1315
  %v2392 = vpop.f32.mrf.mxu0
  %v2393 = vadd.f32 0.0, %v2392
  %2394 = vmatmul.f32.gmra.mxu0 %v1317
  %v2395 = vpop.f32.mrf.mxu0
  %v2396 = vadd.f32 0.0, %v2395
  %2397 = vmatmul.f32.gmra.mxu0 %v1319
  %v2398 = vpop.f32.mrf.mxu0
  %v2399 = vadd.f32 0.0, %v2398
  %2400 = vmatmul.f32.gmra.mxu0 %v1321
  %v2401 = vpop.f32.mrf.mxu0
  %v2402 = vadd.f32 0.0, %v2401
  %2403 = vmatmul.f32.gmra.mxu0 %v1323
  %v2404 = vpop.f32.mrf.mxu0
  %v2405 = vadd.f32 0.0, %v2404
  %2406 = vmatmul.f32.gmra.mxu0 %v1325
  %v2407 = vpop.f32.mrf.mxu0
  %v2408 = vadd.f32 0.0, %v2407
  %2409 = vmatmul.f32.gmra.mxu0 %v1327
  %v2410 = vpop.f32.mrf.mxu0
  %v2411 = vadd.f32 0.0, %v2410
  %2412 = vdwg.mxu0
  %2413 = vmatpush.msra.mxu0 0.0
  %2414 = vmatpush.msra.mxu0 0.0
  %2415 = vmatpush.msra.mxu0 %v2343
  %2416 = vmatpush.msra.mxu0 %v2285
  %2417 = vmatpush.msra.mxu0 %v2282
  %2418 = vmatpush.msra.mxu0 %v2279
  %2419 = vmatpush.msra.mxu0 %v2276
  %2420 = vmatpush.msra.mxu0 %v2273
  %2421 = vmatpush.msra.mxu0 %v2270
  %2422 = vmatpush.msra.mxu0 %v2267
  %2423 = vmatpush.msra.mxu0 %v2264
  %2424 = vmatpush.msra.mxu0 %v2261
  %2425 = vmatpush.msra.mxu0 %v2258
  %2426 = vmatpush.msra.mxu0 %v2255
  %2427 = vmatpush.msra.mxu0 %v2252
  %2428 = vmatpush.msra.mxu0 %v2249
  %2429 = vmatmul.f32.gmra.mxu0 %v2292
  %v2430 = vpop.f32.mrf.mxu0
  %v2431 = vadd.f32 %v2363, %v2430
  %2432 = vmatmul.f32.gmra.mxu0 %v2295
  %v2433 = vpop.f32.mrf.mxu0
  %v2434 = vadd.f32 %v2366, %v2433
  %2435 = vmatmul.f32.gmra.mxu0 %v2298
  %v2436 = vpop.f32.mrf.mxu0
  %v2437 = vadd.f32 %v2369, %v2436
  %2438 = vmatmul.f32.gmra.mxu0 %v2301
  %v2439 = vpop.f32.mrf.mxu0
  %v2440 = vadd.f32 %v2372, %v2439
  %2441 = vmatmul.f32.gmra.mxu0 %v2304
  %v2442 = vpop.f32.mrf.mxu0
  %v2443 = vadd.f32 %v2375, %v2442
  %2444 = vmatmul.f32.gmra.mxu0 %v2307
  %v2445 = vpop.f32.mrf.mxu0
  %v2446 = vadd.f32 %v2378, %v2445
  %2447 = vmatmul.f32.gmra.mxu0 %v2310
  %v2448 = vpop.f32.mrf.mxu0
  %v2449 = vadd.f32 %v2381, %v2448
  %2450 = vmatmul.f32.gmra.mxu0 %v2313
  %v2451 = vpop.f32.mrf.mxu0
  %v2452 = vadd.f32 %v2384, %v2451
  %2453 = vmatmul.f32.gmra.mxu0 %v2316
  %v2454 = vpop.f32.mrf.mxu0
  %v2455 = vadd.f32 %v2387, %v2454
  %2456 = vmatmul.f32.gmra.mxu0 %v2319
  %v2457 = vpop.f32.mrf.mxu0
  %v2458 = vadd.f32 %v2390, %v2457
  %2459 = vmatmul.f32.gmra.mxu0 %v2322
  %v2460 = vpop.f32.mrf.mxu0
  %v2461 = vadd.f32 %v2393, %v2460
  %2462 = vmatmul.f32.gmra.mxu0 %v2325
  %v2463 = vpop.f32.mrf.mxu0
  %v2464 = vadd.f32 %v2396, %v2463
  %2465 = vmatmul.f32.gmra.mxu0 %v2328
  %v2466 = vpop.f32.mrf.mxu0
  %v2467 = vadd.f32 %v2399, %v2466
  %2468 = vmatmul.f32.gmra.mxu0 %v2331
  %v2469 = vpop.f32.mrf.mxu0
  %v2470 = vadd.f32 %v2402, %v2469
  %2471 = vmatmul.f32.gmra.mxu0 %v2334
  %v2472 = vpop.f32.mrf.mxu0
  %v2473 = vadd.f32 %v2405, %v2472
  %2474 = vmatmul.f32.gmra.mxu0 %v2337
  %v2475 = vpop.f32.mrf.mxu0
  %v2476 = vadd.f32 %v2408, %v2475
  %2477 = vmatmul.f32.gmra.mxu0 %v2340
  %v2478 = vpop.f32.mrf.mxu0
  %v2479 = vadd.f32 %v2411, %v2478
  %2480 = vdwg.mxu0
  %v2481 = vld [vmem:[%s5] sm:$0xff]
  %v2482 = vld [vmem:[%s5 + $0x8] sm:$0xff]
  %v2483 = vld [vmem:[%s5 + $0x10] sm:$0xff]
  %v2484 = vld [vmem:[%s5 + $0x18] sm:$0xff]
  %v2485 = vld [vmem:[%s5 + $0x20] sm:$0xff]
  %v2486 = vld [vmem:[%s5 + $0x28] sm:$0xff]
  %v2487 = vld [vmem:[%s5 + $0x30] sm:$0xff]
  %v2488 = vld [vmem:[%s5 + $0x38] sm:$0xff]
  %v2489 = vld [vmem:[%s5 + $0x40] sm:$0xff]
  %v2490 = vld [vmem:[%s5 + $0x48] sm:$0xff]
  %v2491 = vld [vmem:[%s5 + $0x50] sm:$0xff]
  %v2492 = vld [vmem:[%s5 + $0x58] sm:$0xff]
  %v2493 = vld [vmem:[%s5 + $0x60] sm:$0xff]
  %v2494 = vld [vmem:[%s5 + $0x68] sm:$0xff]
  %v2495 = vld [vmem:[%s5 + $0x70] sm:$0xff]
  %v2496 = vld [vmem:[%s5 + $0x78] sm:$0xff]
  %v2497 = vld [vmem:[%s5 + $0x80] sm:$0xff]
  %v2498 = vld [vmem:[%s5 + $0x88] sm:$0xff]
  %v2499 = vld [vmem:[%s5 + $0x90] sm:$0xff]
  %v2500 = vld [vmem:[%s5 + $0x98] sm:$0xff]
  %v2501 = vld [vmem:[%s5 + $0xa0] sm:$0xff]
  %v2502 = vld [vmem:[%s5 + $0xa8] sm:$0xff]
  %v2503 = vld [vmem:[%s5 + $0xb0] sm:$0xff]
  %v2504 = vld [vmem:[%s5 + $0xb8] sm:$0xff]
  %v2505 = vld [vmem:[%s5 + $0xc0] sm:$0xff]
  %v2506 = vld [vmem:[%s5 + $0xc8] sm:$0xff]
  %v2507 = vld [vmem:[%s5 + $0xd0] sm:$0xff]
  %v2508 = vld [vmem:[%s5 + $0xd8] sm:$0xff]
  %v2509 = vld [vmem:[%s5 + $0xe0] sm:$0xff]
  %v2510 = vld [vmem:[%s5 + $0xe8] sm:$0xff]
  %v2511 = vld [vmem:[%s5 + $0xf0] sm:$0xff]
  %v2512 = vld [vmem:[%s5 + $0xf8] sm:$0xff]
  %s2513 = scalar_lea.vmem %s5, 256
  %v2514 = vld [vmem:[%s2513] sm:$0xff]
  %v2515 = vld [vmem:[%s2513 + $0x8] sm:$0xff]
  %v2516 = vld [vmem:[%s2513 + $0x10] sm:$0xff]
  %v2517 = vld [vmem:[%s2513 + $0x18] sm:$0xff]
  %v2518 = vld [vmem:[%s2513 + $0x20] sm:$0xff]
  %v2519 = vld [vmem:[%s2513 + $0x28] sm:$0xff]
  %v2520 = vld [vmem:[%s2513 + $0x30] sm:$0xff]
  %v2521 = vld [vmem:[%s2513 + $0x38] sm:$0xff]
  %v2522 = vld [vmem:[%s2513 + $0x40] sm:$0xff]
  %v2523 = vld [vmem:[%s2513 + $0x48] sm:$0xff]
  %v2524 = vld [vmem:[%s2513 + $0x50] sm:$0xff]
  %v2525 = vld [vmem:[%s2513 + $0x58] sm:$0xff]
  %v2526 = vld [vmem:[%s2513 + $0x60] sm:$0xff]
  %v2527 = vld [vmem:[%s2513 + $0x68] sm:$0xff]
  %v2528 = vld [vmem:[%s2513 + $0x70] sm:$0xff]
  %v2529 = vld [vmem:[%s2513 + $0x78] sm:$0xff]
  %v2530 = vld [vmem:[%s2513 + $0x80] sm:$0xff]
  %v2531 = vld [vmem:[%s2513 + $0x88] sm:$0xff]
  %v2532 = vld [vmem:[%s2513 + $0x90] sm:$0xff]
  %v2533 = vld [vmem:[%s2513 + $0x98] sm:$0xff]
  %v2534 = vld [vmem:[%s2513 + $0xa0] sm:$0xff]
  %v2535 = vld [vmem:[%s2513 + $0xa8] sm:$0xff]
  %v2536 = vld [vmem:[%s2513 + $0xb0] sm:$0xff]
  %v2537 = vld [vmem:[%s2513 + $0xb8] sm:$0xff]
  %v2538 = vld [vmem:[%s2513 + $0xc0] sm:$0xff]
  %v2539 = vld [vmem:[%s2513 + $0xc8] sm:$0xff]
  %v2540 = vld [vmem:[%s2513 + $0xd0] sm:$0xff]
  %v2541 = vld [vmem:[%s2513 + $0xd8] sm:$0xff]
  %v2542 = vld [vmem:[%s2513 + $0xe0] sm:$0xff]
  %v2543 = vld [vmem:[%s2513 + $0xe8] sm:$0xff]
  %v2544 = vld [vmem:[%s2513 + $0xf0] sm:$0xff]
  %v2545 = vld [vmem:[%s2513 + $0xf8] sm:$0xff]
  %v2563 = vrot.slane %v2431, 1
  %v2564 = vrot.slane %v2434, 1
  %v2565 = vsel %vm135, %v2563, %v2564
  %v2566 = vrot.slane %v2437, 1
  %v2567 = vsel %vm135, %v2564, %v2566
  %v2568 = vrot.slane %v2440, 1
  %v2569 = vsel %vm135, %v2566, %v2568
  %v2570 = vrot.slane %v2443, 1
  %v2571 = vsel %vm135, %v2568, %v2570
  %v2572 = vrot.slane %v2446, 1
  %v2573 = vsel %vm135, %v2570, %v2572
  %v2574 = vrot.slane %v2449, 1
  %v2575 = vsel %vm135, %v2572, %v2574
  %v2576 = vrot.slane %v2452, 1
  %v2577 = vsel %vm135, %v2574, %v2576
  %v2578 = vrot.slane %v2455, 1
  %v2579 = vsel %vm135, %v2576, %v2578
  %v2580 = vrot.slane %v2458, 1
  %v2581 = vsel %vm135, %v2578, %v2580
  %v2582 = vrot.slane %v2461, 1
  %v2583 = vsel %vm135, %v2580, %v2582
  %v2584 = vrot.slane %v2464, 1
  %v2585 = vsel %vm135, %v2582, %v2584
  %v2586 = vrot.slane %v2467, 1
  %v2587 = vsel %vm135, %v2584, %v2586
  %v2588 = vrot.slane %v2470, 1
  %v2589 = vsel %vm135, %v2586, %v2588
  %v2590 = vrot.slane %v2473, 1
  %v2591 = vsel %vm135, %v2588, %v2590
  %v2592 = vrot.slane %v2476, 1
  %v2593 = vsel %vm135, %v2590, %v2592
  %v2594 = vrot.slane %v2479, 1
  %v2595 = vsel %vm135, %v2592, %v2594
  %2612 = vmatpush.msra.mxu0 %v2544
  %2613 = vmatpush.msra.mxu0 %v2542
  %2614 = vmatpush.msra.mxu0 %v2540
  %2615 = vmatpush.msra.mxu0 %v2538
  %2616 = vmatpush.msra.mxu0 %v2536
  %2617 = vmatpush.msra.mxu0 %v2534
  %2618 = vmatpush.msra.mxu0 %v2532
  %2619 = vmatpush.msra.mxu0 %v2530
  %2620 = vmatpush.msra.mxu0 %v2528
  %2621 = vmatpush.msra.mxu0 %v2526
  %2622 = vmatpush.msra.mxu0 %v2524
  %2623 = vmatpush.msra.mxu0 %v2522
  %2624 = vmatpush.msra.mxu0 %v2520
  %2625 = vmatpush.msra.mxu0 %v2518
  %2626 = vmatpush.msra.mxu0 %v2516
  %2627 = vmatpush.msra.mxu0 %v2514
  %2628 = vmatmul.f32.gmra.mxu0 %v2565
  %v2629 = vpop.f32.mrf.mxu0
  %v2630 = vadd.f32 0.0, %v2629
  %2631 = vmatmul.f32.gmra.mxu0 %v2567
  %v2632 = vpop.f32.mrf.mxu0
  %v2633 = vadd.f32 0.0, %v2632
  %2634 = vmatmul.f32.gmra.mxu0 %v2569
  %v2635 = vpop.f32.mrf.mxu0
  %v2636 = vadd.f32 0.0, %v2635
  %2637 = vmatmul.f32.gmra.mxu0 %v2571
  %v2638 = vpop.f32.mrf.mxu0
  %v2639 = vadd.f32 0.0, %v2638
  %2640 = vmatmul.f32.gmra.mxu0 %v2573
  %v2641 = vpop.f32.mrf.mxu0
  %v2642 = vadd.f32 0.0, %v2641
  %2643 = vmatmul.f32.gmra.mxu0 %v2575
  %v2644 = vpop.f32.mrf.mxu0
  %v2645 = vadd.f32 0.0, %v2644
  %2646 = vmatmul.f32.gmra.mxu0 %v2577
  %v2647 = vpop.f32.mrf.mxu0
  %v2648 = vadd.f32 0.0, %v2647
  %2649 = vmatmul.f32.gmra.mxu0 %v2579
  %v2650 = vpop.f32.mrf.mxu0
  %v2651 = vadd.f32 0.0, %v2650
  %2652 = vmatmul.f32.gmra.mxu0 %v2581
  %v2653 = vpop.f32.mrf.mxu0
  %v2654 = vadd.f32 0.0, %v2653
  %2655 = vmatmul.f32.gmra.mxu0 %v2583
  %v2656 = vpop.f32.mrf.mxu0
  %v2657 = vadd.f32 0.0, %v2656
  %2658 = vmatmul.f32.gmra.mxu0 %v2585
  %v2659 = vpop.f32.mrf.mxu0
  %v2660 = vadd.f32 0.0, %v2659
  %2661 = vmatmul.f32.gmra.mxu0 %v2587
  %v2662 = vpop.f32.mrf.mxu0
  %v2663 = vadd.f32 0.0, %v2662
  %2664 = vmatmul.f32.gmra.mxu0 %v2589
  %v2665 = vpop.f32.mrf.mxu0
  %v2666 = vadd.f32 0.0, %v2665
  %2667 = vmatmul.f32.gmra.mxu0 %v2591
  %v2668 = vpop.f32.mrf.mxu0
  %v2669 = vadd.f32 0.0, %v2668
  %2670 = vmatmul.f32.gmra.mxu0 %v2593
  %v2671 = vpop.f32.mrf.mxu0
  %v2672 = vadd.f32 0.0, %v2671
  %2673 = vmatmul.f32.gmra.mxu0 %v2595
  %v2674 = vpop.f32.mrf.mxu0
  %v2675 = vadd.f32 0.0, %v2674
  %2676 = vdwg.mxu0
  %2677 = vmatpush.msra.mxu0 %v2545
  %2678 = vmatpush.msra.mxu0 %v2543
  %2679 = vmatpush.msra.mxu0 %v2541
  %2680 = vmatpush.msra.mxu0 %v2539
  %2681 = vmatpush.msra.mxu0 %v2537
  %2682 = vmatpush.msra.mxu0 %v2535
  %2683 = vmatpush.msra.mxu0 %v2533
  %2684 = vmatpush.msra.mxu0 %v2531
  %2685 = vmatpush.msra.mxu0 %v2529
  %2686 = vmatpush.msra.mxu0 %v2527
  %2687 = vmatpush.msra.mxu0 %v2525
  %2688 = vmatpush.msra.mxu0 %v2523
  %2689 = vmatpush.msra.mxu0 %v2521
  %2690 = vmatpush.msra.mxu0 %v2519
  %2691 = vmatpush.msra.mxu0 %v2517
  %2692 = vmatpush.msra.mxu0 %v2515
  %2693 = vmatmul.f32.gmra.mxu0 %v2565
  %v2694 = vpop.f32.mrf.mxu0
  %v2695 = vadd.f32 0.0, %v2694
  %2696 = vmatmul.f32.gmra.mxu0 %v2567
  %v2697 = vpop.f32.mrf.mxu0
  %v2698 = vadd.f32 0.0, %v2697
  %2699 = vmatmul.f32.gmra.mxu0 %v2569
  %v2700 = vpop.f32.mrf.mxu0
  %v2701 = vadd.f32 0.0, %v2700
  %2702 = vmatmul.f32.gmra.mxu0 %v2571
  %v2703 = vpop.f32.mrf.mxu0
  %v2704 = vadd.f32 0.0, %v2703
  %2705 = vmatmul.f32.gmra.mxu0 %v2573
  %v2706 = vpop.f32.mrf.mxu0
  %v2707 = vadd.f32 0.0, %v2706
  %2708 = vmatmul.f32.gmra.mxu0 %v2575
  %v2709 = vpop.f32.mrf.mxu0
  %v2710 = vadd.f32 0.0, %v2709
  %2711 = vmatmul.f32.gmra.mxu0 %v2577
  %v2712 = vpop.f32.mrf.mxu0
  %v2713 = vadd.f32 0.0, %v2712
  %2714 = vmatmul.f32.gmra.mxu0 %v2579
  %v2715 = vpop.f32.mrf.mxu0
  %v2716 = vadd.f32 0.0, %v2715
  %2717 = vmatmul.f32.gmra.mxu0 %v2581
  %v2718 = vpop.f32.mrf.mxu0
  %v2719 = vadd.f32 0.0, %v2718
  %2720 = vmatmul.f32.gmra.mxu0 %v2583
  %v2721 = vpop.f32.mrf.mxu0
  %v2722 = vadd.f32 0.0, %v2721
  %2723 = vmatmul.f32.gmra.mxu0 %v2585
  %v2724 = vpop.f32.mrf.mxu0
  %v2725 = vadd.f32 0.0, %v2724
  %2726 = vmatmul.f32.gmra.mxu0 %v2587
  %v2727 = vpop.f32.mrf.mxu0
  %v2728 = vadd.f32 0.0, %v2727
  %2729 = vmatmul.f32.gmra.mxu0 %v2589
  %v2730 = vpop.f32.mrf.mxu0
  %v2731 = vadd.f32 0.0, %v2730
  %2732 = vmatmul.f32.gmra.mxu0 %v2591
  %v2733 = vpop.f32.mrf.mxu0
  %v2734 = vadd.f32 0.0, %v2733
  %2735 = vmatmul.f32.gmra.mxu0 %v2593
  %v2736 = vpop.f32.mrf.mxu0
  %v2737 = vadd.f32 0.0, %v2736
  %2738 = vmatmul.f32.gmra.mxu0 %v2595
  %v2739 = vpop.f32.mrf.mxu0
  %v2740 = vadd.f32 0.0, %v2739
  %2741 = vdwg.mxu0
  %2742 = vmatpush.msra.mxu0 %v2511
  %2743 = vmatpush.msra.mxu0 %v2509
  %2744 = vmatpush.msra.mxu0 %v2507
  %2745 = vmatpush.msra.mxu0 %v2505
  %2746 = vmatpush.msra.mxu0 %v2503
  %2747 = vmatpush.msra.mxu0 %v2501
  %2748 = vmatpush.msra.mxu0 %v2499
  %2749 = vmatpush.msra.mxu0 %v2497
  %2750 = vmatpush.msra.mxu0 %v2495
  %2751 = vmatpush.msra.mxu0 %v2493
  %2752 = vmatpush.msra.mxu0 %v2491
  %2753 = vmatpush.msra.mxu0 %v2489
  %2754 = vmatpush.msra.mxu0 %v2487
  %2755 = vmatpush.msra.mxu0 %v2485
  %2756 = vmatpush.msra.mxu0 %v2483
  %2757 = vmatpush.msra.mxu0 %v2481
  %2758 = vmatmul.f32.gmra.mxu0 %v2431
  %v2759 = vpop.f32.mrf.mxu0
  %v2760 = vadd.f32 %v2630, %v2759
  %2761 = vmatmul.f32.gmra.mxu0 %v2434
  %v2762 = vpop.f32.mrf.mxu0
  %v2763 = vadd.f32 %v2633, %v2762
  %2764 = vmatmul.f32.gmra.mxu0 %v2437
  %v2765 = vpop.f32.mrf.mxu0
  %v2766 = vadd.f32 %v2636, %v2765
  %2767 = vmatmul.f32.gmra.mxu0 %v2440
  %v2768 = vpop.f32.mrf.mxu0
  %v2769 = vadd.f32 %v2639, %v2768
  %2770 = vmatmul.f32.gmra.mxu0 %v2443
  %v2771 = vpop.f32.mrf.mxu0
  %v2772 = vadd.f32 %v2642, %v2771
  %2773 = vmatmul.f32.gmra.mxu0 %v2446
  %v2774 = vpop.f32.mrf.mxu0
  %v2775 = vadd.f32 %v2645, %v2774
  %2776 = vmatmul.f32.gmra.mxu0 %v2449
  %v2777 = vpop.f32.mrf.mxu0
  %v2778 = vadd.f32 %v2648, %v2777
  %2779 = vmatmul.f32.gmra.mxu0 %v2452
  %v2780 = vpop.f32.mrf.mxu0
  %v2781 = vadd.f32 %v2651, %v2780
  %2782 = vmatmul.f32.gmra.mxu0 %v2455
  %v2783 = vpop.f32.mrf.mxu0
  %v2784 = vadd.f32 %v2654, %v2783
  %2785 = vmatmul.f32.gmra.mxu0 %v2458
  %v2786 = vpop.f32.mrf.mxu0
  %v2787 = vadd.f32 %v2657, %v2786
  %2788 = vmatmul.f32.gmra.mxu0 %v2461
  %v2789 = vpop.f32.mrf.mxu0
  %v2790 = vadd.f32 %v2660, %v2789
  %2791 = vmatmul.f32.gmra.mxu0 %v2464
  %v2792 = vpop.f32.mrf.mxu0
  %v2793 = vadd.f32 %v2663, %v2792
  %2794 = vmatmul.f32.gmra.mxu0 %v2467
  %v2795 = vpop.f32.mrf.mxu0
  %v2796 = vadd.f32 %v2666, %v2795
  %2797 = vmatmul.f32.gmra.mxu0 %v2470
  %v2798 = vpop.f32.mrf.mxu0
  %v2799 = vadd.f32 %v2669, %v2798
  %2800 = vmatmul.f32.gmra.mxu0 %v2473
  %v2801 = vpop.f32.mrf.mxu0
  %v2802 = vadd.f32 %v2672, %v2801
  %2803 = vmatmul.f32.gmra.mxu0 %v2476
  %v2804 = vpop.f32.mrf.mxu0
  %v2805 = vadd.f32 %v2675, %v2804
  %2806 = vdwg.mxu0
  %2807 = vmatpush.msra.mxu0 %v2512
  %2808 = vmatpush.msra.mxu0 %v2510
  %2809 = vmatpush.msra.mxu0 %v2508
  %2810 = vmatpush.msra.mxu0 %v2506
  %2811 = vmatpush.msra.mxu0 %v2504
  %2812 = vmatpush.msra.mxu0 %v2502
  %2813 = vmatpush.msra.mxu0 %v2500
  %2814 = vmatpush.msra.mxu0 %v2498
  %2815 = vmatpush.msra.mxu0 %v2496
  %2816 = vmatpush.msra.mxu0 %v2494
  %2817 = vmatpush.msra.mxu0 %v2492
  %2818 = vmatpush.msra.mxu0 %v2490
  %2819 = vmatpush.msra.mxu0 %v2488
  %2820 = vmatpush.msra.mxu0 %v2486
  %2821 = vmatpush.msra.mxu0 %v2484
  %2822 = vmatpush.msra.mxu0 %v2482
  %2823 = vmatmul.f32.gmra.mxu0 %v2431
  %v2824 = vpop.f32.mrf.mxu0
  %v2825 = vadd.f32 %v2695, %v2824
  %2826 = vmatmul.f32.gmra.mxu0 %v2434
  %v2827 = vpop.f32.mrf.mxu0
  %v2828 = vadd.f32 %v2698, %v2827
  %2829 = vmatmul.f32.gmra.mxu0 %v2437
  %v2830 = vpop.f32.mrf.mxu0
  %v2831 = vadd.f32 %v2701, %v2830
  %2832 = vmatmul.f32.gmra.mxu0 %v2440
  %v2833 = vpop.f32.mrf.mxu0
  %v2834 = vadd.f32 %v2704, %v2833
  %2835 = vmatmul.f32.gmra.mxu0 %v2443
  %v2836 = vpop.f32.mrf.mxu0
  %v2837 = vadd.f32 %v2707, %v2836
  %2838 = vmatmul.f32.gmra.mxu0 %v2446
  %v2839 = vpop.f32.mrf.mxu0
  %v2840 = vadd.f32 %v2710, %v2839
  %2841 = vmatmul.f32.gmra.mxu0 %v2449
  %v2842 = vpop.f32.mrf.mxu0
  %v2843 = vadd.f32 %v2713, %v2842
  %2844 = vmatmul.f32.gmra.mxu0 %v2452
  %v2845 = vpop.f32.mrf.mxu0
  %v2846 = vadd.f32 %v2716, %v2845
  %2847 = vmatmul.f32.gmra.mxu0 %v2455
  %v2848 = vpop.f32.mrf.mxu0
  %v2849 = vadd.f32 %v2719, %v2848
  %2850 = vmatmul.f32.gmra.mxu0 %v2458
  %v2851 = vpop.f32.mrf.mxu0
  %v2852 = vadd.f32 %v2722, %v2851
  %2853 = vmatmul.f32.gmra.mxu0 %v2461
  %v2854 = vpop.f32.mrf.mxu0
  %v2855 = vadd.f32 %v2725, %v2854
  %2856 = vmatmul.f32.gmra.mxu0 %v2464
  %v2857 = vpop.f32.mrf.mxu0
  %v2858 = vadd.f32 %v2728, %v2857
  %2859 = vmatmul.f32.gmra.mxu0 %v2467
  %v2860 = vpop.f32.mrf.mxu0
  %v2861 = vadd.f32 %v2731, %v2860
  %2862 = vmatmul.f32.gmra.mxu0 %v2470
  %v2863 = vpop.f32.mrf.mxu0
  %v2864 = vadd.f32 %v2734, %v2863
  %2865 = vmatmul.f32.gmra.mxu0 %v2473
  %v2866 = vpop.f32.mrf.mxu0
  %v2867 = vadd.f32 %v2737, %v2866
  %2868 = vmatmul.f32.gmra.mxu0 %v2476
  %v2869 = vpop.f32.mrf.mxu0
  %v2870 = vadd.f32 %v2740, %v2869
  %2871 = vdwg.mxu0
  %s2872 = scalar_lea.vmem %s5, 512
  %v2873 = vld [vmem:[%s2872] sm:$0xff]
  %v2874 = vld [vmem:[%s2872 + $0x8] sm:$0xff]
  %v2875 = vld [vmem:[%s2872 + $0x10] sm:$0xff]
  %v2876 = vld [vmem:[%s2872 + $0x18] sm:$0xff]
  %v2877 = vld [vmem:[%s2872 + $0x20] sm:$0xff]
  %v2878 = vld [vmem:[%s2872 + $0x28] sm:$0xff]
  %v2879 = vld [vmem:[%s2872 + $0x30] sm:$0xff]
  %v2880 = vld [vmem:[%s2872 + $0x38] sm:$0xff]
  %v2881 = vld [vmem:[%s2872 + $0x40] sm:$0xff]
  %v2882 = vld [vmem:[%s2872 + $0x48] sm:$0xff]
  %v2883 = vld [vmem:[%s2872 + $0x50] sm:$0xff]
  %v2884 = vld [vmem:[%s2872 + $0x58] sm:$0xff]
  %v2885 = vld [vmem:[%s2872 + $0x60] sm:$0xff]
  %v2886 = vld [vmem:[%s2872 + $0x68] sm:$0xff]
  %v2887 = vld [vmem:[%s2872 + $0x70] sm:$0xff]
  %v2888 = vld [vmem:[%s2872 + $0x78] sm:$0xff]
  %v2889 = vld [vmem:[%s2872 + $0x80] sm:$0xff]
  %v2890 = vld [vmem:[%s2872 + $0x88] sm:$0xff]
  %v2891 = vld [vmem:[%s2872 + $0x90] sm:$0xff]
  %v2892 = vld [vmem:[%s2872 + $0x98] sm:$0xff]
  %v2893 = vld [vmem:[%s2872 + $0xa0] sm:$0xff]
  %v2894 = vld [vmem:[%s2872 + $0xa8] sm:$0xff]
  %v2895 = vld [vmem:[%s2872 + $0xb0] sm:$0xff]
  %v2896 = vld [vmem:[%s2872 + $0xb8] sm:$0xff]
  %v2897 = vld [vmem:[%s2872 + $0xc0] sm:$0xff]
  %v2898 = vld [vmem:[%s2872 + $0xc8] sm:$0xff]
  %v2899 = vld [vmem:[%s2872 + $0xd0] sm:$0xff]
  %v2900 = vld [vmem:[%s2872 + $0xd8] sm:$0xff]
  %v2901 = vld [vmem:[%s2872 + $0xe0] sm:$0xff]
  %v2902 = vld [vmem:[%s2872 + $0xe8] sm:$0xff]
  %v2903 = vld [vmem:[%s2872 + $0xf0] sm:$0xff]
  %v2904 = vld [vmem:[%s2872 + $0xf8] sm:$0xff]
  %v2905 = vrot.slane %v2431, 2
  %v2906 = vrot.slane %v2434, 2
  %v2907 = vsel %vm258, %v2905, %v2906
  %v2908 = vrot.slane %v2437, 2
  %v2909 = vsel %vm258, %v2906, %v2908
  %v2910 = vrot.slane %v2440, 2
  %v2911 = vsel %vm258, %v2908, %v2910
  %v2912 = vrot.slane %v2443, 2
  %v2913 = vsel %vm258, %v2910, %v2912
  %v2914 = vrot.slane %v2446, 2
  %v2915 = vsel %vm258, %v2912, %v2914
  %v2916 = vrot.slane %v2449, 2
  %v2917 = vsel %vm258, %v2914, %v2916
  %v2918 = vrot.slane %v2452, 2
  %v2919 = vsel %vm258, %v2916, %v2918
  %v2920 = vrot.slane %v2455, 2
  %v2921 = vsel %vm258, %v2918, %v2920
  %v2922 = vrot.slane %v2458, 2
  %v2923 = vsel %vm258, %v2920, %v2922
  %v2924 = vrot.slane %v2461, 2
  %v2925 = vsel %vm258, %v2922, %v2924
  %v2926 = vrot.slane %v2464, 2
  %v2927 = vsel %vm258, %v2924, %v2926
  %v2928 = vrot.slane %v2467, 2
  %v2929 = vsel %vm258, %v2926, %v2928
  %v2930 = vrot.slane %v2470, 2
  %v2931 = vsel %vm258, %v2928, %v2930
  %v2932 = vrot.slane %v2473, 2
  %v2933 = vsel %vm258, %v2930, %v2932
  %v2934 = vrot.slane %v2476, 2
  %v2935 = vsel %vm258, %v2932, %v2934
  %v2936 = vrot.slane %v2479, 2
  %v2937 = vsel %vm258, %v2934, %v2936
  %2954 = vmatpush.msra.mxu0 %v2903
  %2955 = vmatpush.msra.mxu0 %v2901
  %2956 = vmatpush.msra.mxu0 %v2899
  %2957 = vmatpush.msra.mxu0 %v2897
  %2958 = vmatpush.msra.mxu0 %v2895
  %2959 = vmatpush.msra.mxu0 %v2893
  %2960 = vmatpush.msra.mxu0 %v2891
  %2961 = vmatpush.msra.mxu0 %v2889
  %2962 = vmatpush.msra.mxu0 %v2887
  %2963 = vmatpush.msra.mxu0 %v2885
  %2964 = vmatpush.msra.mxu0 %v2883
  %2965 = vmatpush.msra.mxu0 %v2881
  %2966 = vmatpush.msra.mxu0 %v2879
  %2967 = vmatpush.msra.mxu0 %v2877
  %2968 = vmatpush.msra.mxu0 %v2875
  %2969 = vmatpush.msra.mxu0 %v2873
  %2970 = vmatmul.f32.gmra.mxu0 %v2907
  %v2971 = vpop.f32.mrf.mxu0
  %v2972 = vadd.f32 0.0, %v2971
  %2973 = vmatmul.f32.gmra.mxu0 %v2909
  %v2974 = vpop.f32.mrf.mxu0
  %v2975 = vadd.f32 0.0, %v2974
  %2976 = vmatmul.f32.gmra.mxu0 %v2911
  %v2977 = vpop.f32.mrf.mxu0
  %v2978 = vadd.f32 0.0, %v2977
  %2979 = vmatmul.f32.gmra.mxu0 %v2913
  %v2980 = vpop.f32.mrf.mxu0
  %v2981 = vadd.f32 0.0, %v2980
  %2982 = vmatmul.f32.gmra.mxu0 %v2915
  %v2983 = vpop.f32.mrf.mxu0
  %v2984 = vadd.f32 0.0, %v2983
  %2985 = vmatmul.f32.gmra.mxu0 %v2917
  %v2986 = vpop.f32.mrf.mxu0
  %v2987 = vadd.f32 0.0, %v2986
  %2988 = vmatmul.f32.gmra.mxu0 %v2919
  %v2989 = vpop.f32.mrf.mxu0
  %v2990 = vadd.f32 0.0, %v2989
  %2991 = vmatmul.f32.gmra.mxu0 %v2921
  %v2992 = vpop.f32.mrf.mxu0
  %v2993 = vadd.f32 0.0, %v2992
  %2994 = vmatmul.f32.gmra.mxu0 %v2923
  %v2995 = vpop.f32.mrf.mxu0
  %v2996 = vadd.f32 0.0, %v2995
  %2997 = vmatmul.f32.gmra.mxu0 %v2925
  %v2998 = vpop.f32.mrf.mxu0
  %v2999 = vadd.f32 0.0, %v2998
  %3000 = vmatmul.f32.gmra.mxu0 %v2927
  %v3001 = vpop.f32.mrf.mxu0
  %v3002 = vadd.f32 0.0, %v3001
  %3003 = vmatmul.f32.gmra.mxu0 %v2929
  %v3004 = vpop.f32.mrf.mxu0
  %v3005 = vadd.f32 0.0, %v3004
  %3006 = vmatmul.f32.gmra.mxu0 %v2931
  %v3007 = vpop.f32.mrf.mxu0
  %v3008 = vadd.f32 0.0, %v3007
  %3009 = vmatmul.f32.gmra.mxu0 %v2933
  %v3010 = vpop.f32.mrf.mxu0
  %v3011 = vadd.f32 0.0, %v3010
  %3012 = vmatmul.f32.gmra.mxu0 %v2935
  %v3013 = vpop.f32.mrf.mxu0
  %v3014 = vadd.f32 0.0, %v3013
  %3015 = vmatmul.f32.gmra.mxu0 %v2937
  %v3016 = vpop.f32.mrf.mxu0
  %v3017 = vadd.f32 0.0, %v3016
  %3018 = vdwg.mxu0
  %3019 = vmatpush.msra.mxu0 %v2904
  %3020 = vmatpush.msra.mxu0 %v2902
  %3021 = vmatpush.msra.mxu0 %v2900
  %3022 = vmatpush.msra.mxu0 %v2898
  %3023 = vmatpush.msra.mxu0 %v2896
  %3024 = vmatpush.msra.mxu0 %v2894
  %3025 = vmatpush.msra.mxu0 %v2892
  %3026 = vmatpush.msra.mxu0 %v2890
  %3027 = vmatpush.msra.mxu0 %v2888
  %3028 = vmatpush.msra.mxu0 %v2886
  %3029 = vmatpush.msra.mxu0 %v2884
  %3030 = vmatpush.msra.mxu0 %v2882
  %3031 = vmatpush.msra.mxu0 %v2880
  %3032 = vmatpush.msra.mxu0 %v2878
  %3033 = vmatpush.msra.mxu0 %v2876
  %3034 = vmatpush.msra.mxu0 %v2874
  %3035 = vmatmul.f32.gmra.mxu0 %v2907
  %v3036 = vpop.f32.mrf.mxu0
  %v3037 = vadd.f32 0.0, %v3036
  %3038 = vmatmul.f32.gmra.mxu0 %v2909
  %v3039 = vpop.f32.mrf.mxu0
  %v3040 = vadd.f32 0.0, %v3039
  %3041 = vmatmul.f32.gmra.mxu0 %v2911
  %v3042 = vpop.f32.mrf.mxu0
  %v3043 = vadd.f32 0.0, %v3042
  %3044 = vmatmul.f32.gmra.mxu0 %v2913
  %v3045 = vpop.f32.mrf.mxu0
  %v3046 = vadd.f32 0.0, %v3045
  %3047 = vmatmul.f32.gmra.mxu0 %v2915
  %v3048 = vpop.f32.mrf.mxu0
  %v3049 = vadd.f32 0.0, %v3048
  %3050 = vmatmul.f32.gmra.mxu0 %v2917
  %v3051 = vpop.f32.mrf.mxu0
  %v3052 = vadd.f32 0.0, %v3051
  %3053 = vmatmul.f32.gmra.mxu0 %v2919
  %v3054 = vpop.f32.mrf.mxu0
  %v3055 = vadd.f32 0.0, %v3054
  %3056 = vmatmul.f32.gmra.mxu0 %v2921
  %v3057 = vpop.f32.mrf.mxu0
  %v3058 = vadd.f32 0.0, %v3057
  %3059 = vmatmul.f32.gmra.mxu0 %v2923
  %v3060 = vpop.f32.mrf.mxu0
  %v3061 = vadd.f32 0.0, %v3060
  %3062 = vmatmul.f32.gmra.mxu0 %v2925
  %v3063 = vpop.f32.mrf.mxu0
  %v3064 = vadd.f32 0.0, %v3063
  %3065 = vmatmul.f32.gmra.mxu0 %v2927
  %v3066 = vpop.f32.mrf.mxu0
  %v3067 = vadd.f32 0.0, %v3066
  %3068 = vmatmul.f32.gmra.mxu0 %v2929
  %v3069 = vpop.f32.mrf.mxu0
  %v3070 = vadd.f32 0.0, %v3069
  %3071 = vmatmul.f32.gmra.mxu0 %v2931
  %v3072 = vpop.f32.mrf.mxu0
  %v3073 = vadd.f32 0.0, %v3072
  %3074 = vmatmul.f32.gmra.mxu0 %v2933
  %v3075 = vpop.f32.mrf.mxu0
  %v3076 = vadd.f32 0.0, %v3075
  %3077 = vmatmul.f32.gmra.mxu0 %v2935
  %v3078 = vpop.f32.mrf.mxu0
  %v3079 = vadd.f32 0.0, %v3078
  %3080 = vmatmul.f32.gmra.mxu0 %v2937
  %v3081 = vpop.f32.mrf.mxu0
  %v3082 = vadd.f32 0.0, %v3081
  %3083 = vdwg.mxu0
  %v3084 = vadd.f32 %v2760, %v2972
  %v3085 = vadd.f32 %v2825, %v3037
  %v3086 = vadd.f32 %v2763, %v2975
  %v3087 = vadd.f32 %v2828, %v3040
  %v3088 = vadd.f32 %v2766, %v2978
  %v3089 = vadd.f32 %v2831, %v3043
  %v3090 = vadd.f32 %v2769, %v2981
  %v3091 = vadd.f32 %v2834, %v3046
  %v3092 = vadd.f32 %v2772, %v2984
  %v3093 = vadd.f32 %v2837, %v3049
  %v3094 = vadd.f32 %v2775, %v2987
  %v3095 = vadd.f32 %v2840, %v3052
  %v3096 = vadd.f32 %v2778, %v2990
  %v3097 = vadd.f32 %v2843, %v3055
  %v3098 = vadd.f32 %v2781, %v2993
  %v3099 = vadd.f32 %v2846, %v3058
  %v3100 = vadd.f32 %v2784, %v2996
  %v3101 = vadd.f32 %v2849, %v3061
  %v3102 = vadd.f32 %v2787, %v2999
  %v3103 = vadd.f32 %v2852, %v3064
  %v3104 = vadd.f32 %v2790, %v3002
  %v3105 = vadd.f32 %v2855, %v3067
  %v3106 = vadd.f32 %v2793, %v3005
  %v3107 = vadd.f32 %v2858, %v3070
  %v3108 = vadd.f32 %v2796, %v3008
  %v3109 = vadd.f32 %v2861, %v3073
  %v3110 = vadd.f32 %v2799, %v3011
  %v3111 = vadd.f32 %v2864, %v3076
  %v3112 = vadd.f32 %v2802, %v3014
  %v3113 = vadd.f32 %v2867, %v3079
  %v3114 = vadd.f32 %v2805, %v3017
  %v3115 = vadd.f32 %v2870, %v3082
  %v3116 = vld [vmem:[%s6] sm:$0x3]
  %v3118 = vperm.slane %v3116, 0
  %v3119 = vperm.slane %v3116, 1
  %v3122 = vadd.f32 %v3084, %v3118
  %v3123 = vadd.f32 %v3085, %v3119
  %v3124 = vadd.f32 %v3086, %v3118
  %v3125 = vadd.f32 %v3087, %v3119
  %v3126 = vadd.f32 %v3088, %v3118
  %v3127 = vadd.f32 %v3089, %v3119
  %v3128 = vadd.f32 %v3090, %v3118
  %v3129 = vadd.f32 %v3091, %v3119
  %v3130 = vadd.f32 %v3092, %v3118
  %v3131 = vadd.f32 %v3093, %v3119
  %v3132 = vadd.f32 %v3094, %v3118
  %v3133 = vadd.f32 %v3095, %v3119
  %v3134 = vadd.f32 %v3096, %v3118
  %v3135 = vadd.f32 %v3097, %v3119
  %v3136 = vadd.f32 %v3098, %v3118
  %v3137 = vadd.f32 %v3099, %v3119
  %v3138 = vadd.f32 %v3100, %v3118
  %v3139 = vadd.f32 %v3101, %v3119
  %v3140 = vadd.f32 %v3102, %v3118
  %v3141 = vadd.f32 %v3103, %v3119
  %v3142 = vadd.f32 %v3104, %v3118
  %v3143 = vadd.f32 %v3105, %v3119
  %v3144 = vadd.f32 %v3106, %v3118
  %v3145 = vadd.f32 %v3107, %v3119
  %v3146 = vadd.f32 %v3108, %v3118
  %v3147 = vadd.f32 %v3109, %v3119
  %v3148 = vadd.f32 %v3110, %v3118
  %v3149 = vadd.f32 %v3111, %v3119
  %v3150 = vadd.f32 %v3112, %v3118
  %v3151 = vadd.f32 %v3113, %v3119
  %v3152 = vadd.f32 %v3114, %v3118
  %v3153 = vadd.f32 %v3115, %v3119
  %v3154 = vmax.f32 %v3122, 0.0
  %v3155 = vmax.f32 %v3123, 0.0
  %v3156 = vmax.f32 %v3124, 0.0
  %v3157 = vmax.f32 %v3125, 0.0
  %v3158 = vmax.f32 %v3126, 0.0
  %v3159 = vmax.f32 %v3127, 0.0
  %v3160 = vmax.f32 %v3128, 0.0
  %v3161 = vmax.f32 %v3129, 0.0
  %v3162 = vmax.f32 %v3130, 0.0
  %v3163 = vmax.f32 %v3131, 0.0
  %v3164 = vmax.f32 %v3132, 0.0
  %v3165 = vmax.f32 %v3133, 0.0
  %v3166 = vmax.f32 %v3134, 0.0
  %v3167 = vmax.f32 %v3135, 0.0
  %v3168 = vmax.f32 %v3136, 0.0
  %v3169 = vmax.f32 %v3137, 0.0
  %v3170 = vmax.f32 %v3138, 0.0
  %v3171 = vmax.f32 %v3139, 0.0
  %v3172 = vmax.f32 %v3140, 0.0
  %v3173 = vmax.f32 %v3141, 0.0
  %v3174 = vmax.f32 %v3142, 0.0
  %v3175 = vmax.f32 %v3143, 0.0
  %v3176 = vmax.f32 %v3144, 0.0
  %v3177 = vmax.f32 %v3145, 0.0
  %v3178 = vmax.f32 %v3146, 0.0
  %v3179 = vmax.f32 %v3147, 0.0
  %v3180 = vmax.f32 %v3148, 0.0
  %v3181 = vmax.f32 %v3149, 0.0
  %v3182 = vmax.f32 %v3150, 0.0
  %v3183 = vmax.f32 %v3151, 0.0
  %v3184 = vmax.f32 %v3152, 0.0
  %v3185 = vmax.f32 %v3153, 0.0
  %v3186 = vld [vmem:[%s8] sm:$0xff]
  %v3187 = vld [vmem:[%s8 + $0x8] sm:$0xff]
  %v3188 = vld [vmem:[%s8 + $0x10] sm:$0xff]
  %v3189 = vld [vmem:[%s8 + $0x18] sm:$0xff]
  %v3190 = vld [vmem:[%s8 + $0x20] sm:$0xff]
  %v3191 = vld [vmem:[%s8 + $0x28] sm:$0xff]
  %v3192 = vld [vmem:[%s8 + $0x30] sm:$0xff]
  %v3193 = vld [vmem:[%s8 + $0x38] sm:$0xff]
  %v3194 = vld [vmem:[%s8 + $0x40] sm:$0xff]
  %v3195 = vld [vmem:[%s8 + $0x48] sm:$0x3]
  %v3228 = vrot.slane %v3154, 1
  %v3229 = vrot.slane %v3156, 1
  %v3230 = vsel %vm135, %v3228, %v3229
  %v3231 = vrot.slane %v3155, 1
  %v3232 = vrot.slane %v3157, 1
  %v3233 = vsel %vm135, %v3231, %v3232
  %v3234 = vrot.slane %v3158, 1
  %v3235 = vsel %vm135, %v3229, %v3234
  %v3236 = vrot.slane %v3159, 1
  %v3237 = vsel %vm135, %v3232, %v3236
  %v3238 = vrot.slane %v3160, 1
  %v3239 = vsel %vm135, %v3234, %v3238
  %v3240 = vrot.slane %v3161, 1
  %v3241 = vsel %vm135, %v3236, %v3240
  %v3242 = vrot.slane %v3162, 1
  %v3243 = vsel %vm135, %v3238, %v3242
  %v3244 = vrot.slane %v3163, 1
  %v3245 = vsel %vm135, %v3240, %v3244
  %v3246 = vrot.slane %v3164, 1
  %v3247 = vsel %vm135, %v3242, %v3246
  %v3248 = vrot.slane %v3165, 1
  %v3249 = vsel %vm135, %v3244, %v3248
  %v3250 = vrot.slane %v3166, 1
  %v3251 = vsel %vm135, %v3246, %v3250
  %v3252 = vrot.slane %v3167, 1
  %v3253 = vsel %vm135, %v3248, %v3252
  %v3254 = vrot.slane %v3168, 1
  %v3255 = vsel %vm135, %v3250, %v3254
  %v3256 = vrot.slane %v3169, 1
  %v3257 = vsel %vm135, %v3252, %v3256
  %v3258 = vrot.slane %v3170, 1
  %v3259 = vsel %vm135, %v3254, %v3258
  %v3260 = vrot.slane %v3171, 1
  %v3261 = vsel %vm135, %v3256, %v3260
  %v3262 = vrot.slane %v3172, 1
  %v3263 = vsel %vm135, %v3258, %v3262
  %v3264 = vrot.slane %v3173, 1
  %v3265 = vsel %vm135, %v3260, %v3264
  %v3266 = vrot.slane %v3174, 1
  %v3267 = vsel %vm135, %v3262, %v3266
  %v3268 = vrot.slane %v3175, 1
  %v3269 = vsel %vm135, %v3264, %v3268
  %v3270 = vrot.slane %v3176, 1
  %v3271 = vsel %vm135, %v3266, %v3270
  %v3272 = vrot.slane %v3177, 1
  %v3273 = vsel %vm135, %v3268, %v3272
  %v3274 = vrot.slane %v3178, 1
  %v3275 = vsel %vm135, %v3270, %v3274
  %v3276 = vrot.slane %v3179, 1
  %v3277 = vsel %vm135, %v3272, %v3276
  %v3278 = vrot.slane %v3180, 1
  %v3279 = vsel %vm135, %v3274, %v3278
  %v3280 = vrot.slane %v3181, 1
  %v3281 = vsel %vm135, %v3276, %v3280
  %v3282 = vrot.slane %v3182, 1
  %v3283 = vsel %vm135, %v3278, %v3282
  %v3284 = vrot.slane %v3183, 1
  %v3285 = vsel %vm135, %v3280, %v3284
  %v3286 = vrot.slane %v3184, 1
  %v3287 = vsel %vm135, %v3282, %v3286
  %v3288 = vrot.slane %v3185, 1
  %v3289 = vsel %vm135, %v3284, %v3288
  %v3322 = vmax.f32 %v3154, %v3230
  %v3323 = vmax.f32 %v3155, %v3233
  %v3324 = vmax.f32 %v3156, %v3235
  %v3325 = vmax.f32 %v3157, %v3237
  %v3326 = vmax.f32 %v3158, %v3239
  %v3327 = vmax.f32 %v3159, %v3241
  %v3328 = vmax.f32 %v3160, %v3243
  %v3329 = vmax.f32 %v3161, %v3245
  %v3330 = vmax.f32 %v3162, %v3247
  %v3331 = vmax.f32 %v3163, %v3249
  %v3332 = vmax.f32 %v3164, %v3251
  %v3333 = vmax.f32 %v3165, %v3253
  %v3334 = vmax.f32 %v3166, %v3255
  %v3335 = vmax.f32 %v3167, %v3257
  %v3336 = vmax.f32 %v3168, %v3259
  %v3337 = vmax.f32 %v3169, %v3261
  %v3338 = vmax.f32 %v3170, %v3263
  %v3339 = vmax.f32 %v3171, %v3265
  %v3340 = vmax.f32 %v3172, %v3267
  %v3341 = vmax.f32 %v3173, %v3269
  %v3342 = vmax.f32 %v3174, %v3271
  %v3343 = vmax.f32 %v3175, %v3273
  %v3344 = vmax.f32 %v3176, %v3275
  %v3345 = vmax.f32 %v3177, %v3277
  %v3346 = vmax.f32 %v3178, %v3279
  %v3347 = vmax.f32 %v3179, %v3281
  %v3348 = vmax.f32 %v3180, %v3283
  %v3349 = vmax.f32 %v3181, %v3285
  %v3350 = vmax.f32 %v3182, %v3287
  %v3351 = vmax.f32 %v3183, %v3289
  %v3352 = vmax.f32 %v3184, %v3286
  %v3353 = vmax.f32 %v3185, %v3288
  %3386 = vrot.lane.b32.xlu0 %v3322, 112
  %v3387 = vpop.permute.xlu0 %3386
  %3388 = vrot.lane.b32.xlu0 %v3323, 112
  %v3389 = vpop.permute.xlu0 %3388
  %3390 = vrot.lane.b32.xlu0 %v3324, 112
  %v3391 = vpop.permute.xlu0 %3390
  %3392 = vrot.lane.b32.xlu0 %v3325, 112
  %v3393 = vpop.permute.xlu0 %3392
  %3394 = vrot.lane.b32.xlu0 %v3326, 112
  %v3395 = vpop.permute.xlu0 %3394
  %3396 = vrot.lane.b32.xlu0 %v3327, 112
  %v3397 = vpop.permute.xlu0 %3396
  %3398 = vrot.lane.b32.xlu0 %v3328, 112
  %v3399 = vpop.permute.xlu0 %3398
  %3400 = vrot.lane.b32.xlu0 %v3329, 112
  %v3401 = vpop.permute.xlu0 %3400
  %3402 = vrot.lane.b32.xlu0 %v3330, 112
  %v3403 = vpop.permute.xlu0 %3402
  %3404 = vrot.lane.b32.xlu0 %v3331, 112
  %v3405 = vpop.permute.xlu0 %3404
  %3406 = vrot.lane.b32.xlu0 %v3332, 112
  %v3407 = vpop.permute.xlu0 %3406
  %3408 = vrot.lane.b32.xlu0 %v3333, 112
  %v3409 = vpop.permute.xlu0 %3408
  %3410 = vrot.lane.b32.xlu0 %v3334, 112
  %v3411 = vpop.permute.xlu0 %3410
  %3412 = vrot.lane.b32.xlu0 %v3335, 112
  %v3413 = vpop.permute.xlu0 %3412
  %3414 = vrot.lane.b32.xlu0 %v3336, 112
  %v3415 = vpop.permute.xlu0 %3414
  %3416 = vrot.lane.b32.xlu0 %v3337, 112
  %v3417 = vpop.permute.xlu0 %3416
  %3418 = vrot.lane.b32.xlu0 %v3338, 112
  %v3419 = vpop.permute.xlu0 %3418
  %3420 = vrot.lane.b32.xlu0 %v3339, 112
  %v3421 = vpop.permute.xlu0 %3420
  %3422 = vrot.lane.b32.xlu0 %v3340, 112
  %v3423 = vpop.permute.xlu0 %3422
  %3424 = vrot.lane.b32.xlu0 %v3341, 112
  %v3425 = vpop.permute.xlu0 %3424
  %3426 = vrot.lane.b32.xlu0 %v3342, 112
  %v3427 = vpop.permute.xlu0 %3426
  %3428 = vrot.lane.b32.xlu0 %v3343, 112
  %v3429 = vpop.permute.xlu0 %3428
  %3430 = vrot.lane.b32.xlu0 %v3344, 112
  %v3431 = vpop.permute.xlu0 %3430
  %3432 = vrot.lane.b32.xlu0 %v3345, 112
  %v3433 = vpop.permute.xlu0 %3432
  %3434 = vrot.lane.b32.xlu0 %v3346, 112
  %v3435 = vpop.permute.xlu0 %3434
  %3436 = vrot.lane.b32.xlu0 %v3347, 112
  %v3437 = vpop.permute.xlu0 %3436
  %3438 = vrot.lane.b32.xlu0 %v3348, 112
  %v3439 = vpop.permute.xlu0 %3438
  %3440 = vrot.lane.b32.xlu0 %v3349, 112
  %v3441 = vpop.permute.xlu0 %3440
  %3442 = vrot.lane.b32.xlu0 %v3350, 112
  %v3443 = vpop.permute.xlu0 %3442
  %3444 = vrot.lane.b32.xlu0 %v3351, 112
  %v3445 = vpop.permute.xlu0 %3444
  %3446 = vrot.lane.b32.xlu0 %v3352, 112
  %v3447 = vpop.permute.xlu0 %3446
  %3448 = vrot.lane.b32.xlu0 %v3353, 112
  %v3449 = vpop.permute.xlu0 %3448
  %vm3450 = vcmask 916480
  %v3451 = vsel %vm3450, %v3387, %v3389
  %v3452 = vsel %vm3450, %v3391, %v3393
  %v3453 = vsel %vm3450, %v3395, %v3397
  %v3454 = vsel %vm3450, %v3399, %v3401
  %v3455 = vsel %vm3450, %v3403, %v3405
  %v3456 = vsel %vm3450, %v3407, %v3409
  %v3457 = vsel %vm3450, %v3411, %v3413
  %v3458 = vsel %vm3450, %v3415, %v3417
  %v3459 = vsel %vm3450, %v3419, %v3421
  %v3460 = vsel %vm3450, %v3423, %v3425
  %v3461 = vsel %vm3450, %v3427, %v3429
  %v3462 = vsel %vm3450, %v3431, %v3433
  %v3463 = vsel %vm3450, %v3435, %v3437
  %v3464 = vsel %vm3450, %v3439, %v3441
  %v3465 = vsel %vm3450, %v3443, %v3445
  %v3466 = vsel %vm3450, %v3447, %v3449
  %v3499 = vmax.f32 %v3322, %v3451
  %v3500 = vmax.f32 %v3323, %v3389
  %v3501 = vmax.f32 %v3324, %v3452
  %v3502 = vmax.f32 %v3325, %v3393
  %v3503 = vmax.f32 %v3326, %v3453
  %v3504 = vmax.f32 %v3327, %v3397
  %v3505 = vmax.f32 %v3328, %v3454
  %v3506 = vmax.f32 %v3329, %v3401
  %v3507 = vmax.f32 %v3330, %v3455
  %v3508 = vmax.f32 %v3331, %v3405
  %v3509 = vmax.f32 %v3332, %v3456
  %v3510 = vmax.f32 %v3333, %v3409
  %v3511 = vmax.f32 %v3334, %v3457
  %v3512 = vmax.f32 %v3335, %v3413
  %v3513 = vmax.f32 %v3336, %v3458
  %v3514 = vmax.f32 %v3337, %v3417
  %v3515 = vmax.f32 %v3338, %v3459
  %v3516 = vmax.f32 %v3339, %v3421
  %v3517 = vmax.f32 %v3340, %v3460
  %v3518 = vmax.f32 %v3341, %v3425
  %v3519 = vmax.f32 %v3342, %v3461
  %v3520 = vmax.f32 %v3343, %v3429
  %v3521 = vmax.f32 %v3344, %v3462
  %v3522 = vmax.f32 %v3345, %v3433
  %v3523 = vmax.f32 %v3346, %v3463
  %v3524 = vmax.f32 %v3347, %v3437
  %v3525 = vmax.f32 %v3348, %v3464
  %v3526 = vmax.f32 %v3349, %v3441
  %v3527 = vmax.f32 %v3350, %v3465
  %v3528 = vmax.f32 %v3351, %v3445
  %v3529 = vmax.f32 %v3352, %v3466
  %v3530 = vmax.f32 %v3353, %v3449
  %v3531 = vld [vmem:[%s7] sm:$0xff]
  %v3532 = vld [vmem:[%s7 + $0x8] sm:$0xff]
  %v3533 = vld [vmem:[%s7 + $0x10] sm:$0xff]
  %v3534 = vld [vmem:[%s7 + $0x18] sm:$0xff]
  %v3535 = vld [vmem:[%s7 + $0x20] sm:$0xff]
  %v3536 = vld [vmem:[%s7 + $0x28] sm:$0xff]
  %v3537 = vld [vmem:[%s7 + $0x30] sm:$0xff]
  %v3538 = vld [vmem:[%s7 + $0x38] sm:$0xff]
  %v3539 = vld [vmem:[%s7 + $0x40] sm:$0xff]
  %v3540 = vld [vmem:[%s7 + $0x48] sm:$0xff]
  %v3541 = vld [vmem:[%s7 + $0x50] sm:$0xff]
  %v3542 = vld [vmem:[%s7 + $0x58] sm:$0xff]
  %v3543 = vld [vmem:[%s7 + $0x60] sm:$0xff]
  %v3544 = vld [vmem:[%s7 + $0x68] sm:$0xff]
  %v3545 = vld [vmem:[%s7 + $0x70] sm:$0xff]
  %v3546 = vld [vmem:[%s7 + $0x78] sm:$0xff]
  %v3547 = vld [vmem:[%s7 + $0x80] sm:$0xff]
  %v3548 = vld [vmem:[%s7 + $0x88] sm:$0xff]
  %v3549 = vld [vmem:[%s7 + $0x90] sm:$0xff]
  %v3550 = vld [vmem:[%s7 + $0x98] sm:$0xff]
  %v3551 = vld [vmem:[%s7 + $0xa0] sm:$0xff]
  %v3552 = vld [vmem:[%s7 + $0xa8] sm:$0xff]
  %v3553 = vld [vmem:[%s7 + $0xb0] sm:$0xff]
  %v3554 = vld [vmem:[%s7 + $0xb8] sm:$0xff]
  %v3555 = vld [vmem:[%s7 + $0xc0] sm:$0xff]
  %v3556 = vld [vmem:[%s7 + $0xc8] sm:$0xff]
  %v3557 = vld [vmem:[%s7 + $0xd0] sm:$0xff]
  %v3558 = vld [vmem:[%s7 + $0xd8] sm:$0xff]
  %v3559 = vld [vmem:[%s7 + $0xe0] sm:$0xff]
  %v3560 = vld [vmem:[%s7 + $0xe8] sm:$0xff]
  %v3561 = vld [vmem:[%s7 + $0xf0] sm:$0xff]
  %v3562 = vld [vmem:[%s7 + $0xf8] sm:$0xff]
  %v3563 = vld [vmem:[%s7 + $0x100] sm:$0xff]
  %v3564 = vld [vmem:[%s7 + $0x108] sm:$0xff]
  %v3565 = vld [vmem:[%s7 + $0x110] sm:$0xff]
  %v3566 = vld [vmem:[%s7 + $0x118] sm:$0xff]
  %v3567 = vld [vmem:[%s7 + $0x120] sm:$0xff]
  %v3568 = vld [vmem:[%s7 + $0x128] sm:$0xff]
  %v3569 = vld [vmem:[%s7 + $0x130] sm:$0xff]
  %v3570 = vld [vmem:[%s7 + $0x138] sm:$0xff]
  %v3571 = vld [vmem:[%s7 + $0x140] sm:$0xff]
  %v3572 = vld [vmem:[%s7 + $0x148] sm:$0xff]
  %v3573 = vld [vmem:[%s7 + $0x150] sm:$0xff]
  %v3574 = vld [vmem:[%s7 + $0x158] sm:$0xff]
  %v3575 = vld [vmem:[%s7 + $0x160] sm:$0xff]
  %v3576 = vld [vmem:[%s7 + $0x168] sm:$0xff]
  %v3577 = vld [vmem:[%s7 + $0x170] sm:$0xff]
  %v3578 = vld [vmem:[%s7 + $0x178] sm:$0xff]
  %v3579 = vld [vmem:[%s7 + $0x180] sm:$0xff]
  %v3580 = vld [vmem:[%s7 + $0x188] sm:$0xff]
  %v3581 = vld [vmem:[%s7 + $0x190] sm:$0xff]
  %v3582 = vld [vmem:[%s7 + $0x198] sm:$0xff]
  %vm3583 = vcmask 654336
  %v3585 = vsel %vm3583, %v3500, 0
  %v3588 = vsel %vm3583, %v3502, 0
  %v3591 = vsel %vm3583, %v3504, 0
  %v3594 = vsel %vm3583, %v3506, 0
  %v3597 = vsel %vm3583, %v3508, 0
  %v3600 = vsel %vm3583, %v3510, 0
  %v3603 = vsel %vm3583, %v3512, 0
  %v3606 = vsel %vm3583, %v3514, 0
  %v3609 = vsel %vm3583, %v3516, 0
  %v3612 = vsel %vm3583, %v3518, 0
  %v3615 = vsel %vm3583, %v3520, 0
  %v3618 = vsel %vm3583, %v3522, 0
  %v3621 = vsel %vm3583, %v3524, 0
  %v3624 = vsel %vm3583, %v3526, 0
  %v3627 = vsel %vm3583, %v3528, 0
  %v3630 = vsel %vm3583, %v3530, 0
  %3632 = vmatpush.msra.mxu0 %v3561
  %3633 = vmatpush.msra.mxu0 %v3559
  %3634 = vmatpush.msra.mxu0 %v3557
  %3635 = vmatpush.msra.mxu0 %v3555
  %3636 = vmatpush.msra.mxu0 %v3553
  %3637 = vmatpush.msra.mxu0 %v3551
  %3638 = vmatpush.msra.mxu0 %v3549
  %3639 = vmatpush.msra.mxu0 %v3547
  %3640 = vmatpush.msra.mxu0 %v3545
  %3641 = vmatpush.msra.mxu0 %v3543
  %3642 = vmatpush.msra.mxu0 %v3541
  %3643 = vmatpush.msra.mxu0 %v3539
  %3644 = vmatpush.msra.mxu0 %v3537
  %3645 = vmatpush.msra.mxu0 %v3535
  %3646 = vmatpush.msra.mxu0 %v3533
  %3647 = vmatpush.msra.mxu0 %v3531
  %3648 = vmatmul.f32.gmra.mxu0 %v3499
  %v3649 = vpop.f32.mrf.mxu0
  %v3650 = vadd.f32 0.0, %v3649
  %3651 = vmatmul.f32.gmra.mxu0 %v3501
  %v3652 = vpop.f32.mrf.mxu0
  %v3653 = vadd.f32 0.0, %v3652
  %3654 = vmatmul.f32.gmra.mxu0 %v3503
  %v3655 = vpop.f32.mrf.mxu0
  %v3656 = vadd.f32 0.0, %v3655
  %3657 = vmatmul.f32.gmra.mxu0 %v3505
  %v3658 = vpop.f32.mrf.mxu0
  %v3659 = vadd.f32 0.0, %v3658
  %3660 = vmatmul.f32.gmra.mxu0 %v3507
  %v3661 = vpop.f32.mrf.mxu0
  %v3662 = vadd.f32 0.0, %v3661
  %3663 = vmatmul.f32.gmra.mxu0 %v3509
  %v3664 = vpop.f32.mrf.mxu0
  %v3665 = vadd.f32 0.0, %v3664
  %3666 = vmatmul.f32.gmra.mxu0 %v3511
  %v3667 = vpop.f32.mrf.mxu0
  %v3668 = vadd.f32 0.0, %v3667
  %3669 = vmatmul.f32.gmra.mxu0 %v3513
  %v3670 = vpop.f32.mrf.mxu0
  %v3671 = vadd.f32 0.0, %v3670
  %3672 = vmatmul.f32.gmra.mxu0 %v3515
  %v3673 = vpop.f32.mrf.mxu0
  %v3674 = vadd.f32 0.0, %v3673
  %3675 = vmatmul.f32.gmra.mxu0 %v3517
  %v3676 = vpop.f32.mrf.mxu0
  %v3677 = vadd.f32 0.0, %v3676
  %3678 = vmatmul.f32.gmra.mxu0 %v3519
  %v3679 = vpop.f32.mrf.mxu0
  %v3680 = vadd.f32 0.0, %v3679
  %3681 = vmatmul.f32.gmra.mxu0 %v3521
  %v3682 = vpop.f32.mrf.mxu0
  %v3683 = vadd.f32 0.0, %v3682
  %3684 = vmatmul.f32.gmra.mxu0 %v3523
  %v3685 = vpop.f32.mrf.mxu0
  %v3686 = vadd.f32 0.0, %v3685
  %3687 = vmatmul.f32.gmra.mxu0 %v3525
  %v3688 = vpop.f32.mrf.mxu0
  %v3689 = vadd.f32 0.0, %v3688
  %3690 = vmatmul.f32.gmra.mxu0 %v3527
  %v3691 = vpop.f32.mrf.mxu0
  %v3692 = vadd.f32 0.0, %v3691
  %3693 = vmatmul.f32.gmra.mxu0 %v3529
  %v3694 = vpop.f32.mrf.mxu0
  %v3695 = vadd.f32 0.0, %v3694
  %3696 = vdwg.mxu0
  %3697 = vmatpush.msra.mxu0 0.0
  %3698 = vmatpush.msra.mxu0 0.0
  %3699 = vmatpush.msra.mxu0 0.0
  %3700 = vmatpush.msra.mxu0 0.0
  %3701 = vmatpush.msra.mxu0 0.0
  %3702 = vmatpush.msra.mxu0 0.0
  %3703 = vmatpush.msra.mxu0 %v3581
  %3704 = vmatpush.msra.mxu0 %v3579
  %3705 = vmatpush.msra.mxu0 %v3577
  %3706 = vmatpush.msra.mxu0 %v3575
  %3707 = vmatpush.msra.mxu0 %v3573
  %3708 = vmatpush.msra.mxu0 %v3571
  %3709 = vmatpush.msra.mxu0 %v3569
  %3710 = vmatpush.msra.mxu0 %v3567
  %3711 = vmatpush.msra.mxu0 %v3565
  %3712 = vmatpush.msra.mxu0 %v3563
  %3713 = vmatmul.f32.gmra.mxu0 %v3585
  %v3714 = vpop.f32.mrf.mxu0
  %v3715 = vadd.f32 %v3650, %v3714
  %3716 = vmatmul.f32.gmra.mxu0 %v3588
  %v3717 = vpop.f32.mrf.mxu0
  %v3718 = vadd.f32 %v3653, %v3717
  %3719 = vmatmul.f32.gmra.mxu0 %v3591
  %v3720 = vpop.f32.mrf.mxu0
  %v3721 = vadd.f32 %v3656, %v3720
  %3722 = vmatmul.f32.gmra.mxu0 %v3594
  %v3723 = vpop.f32.mrf.mxu0
  %v3724 = vadd.f32 %v3659, %v3723
  %3725 = vmatmul.f32.gmra.mxu0 %v3597
  %v3726 = vpop.f32.mrf.mxu0
  %v3727 = vadd.f32 %v3662, %v3726
  %3728 = vmatmul.f32.gmra.mxu0 %v3600
  %v3729 = vpop.f32.mrf.mxu0
  %v3730 = vadd.f32 %v3665, %v3729
  %3731 = vmatmul.f32.gmra.mxu0 %v3603
  %v3732 = vpop.f32.mrf.mxu0
  %v3733 = vadd.f32 %v3668, %v3732
  %3734 = vmatmul.f32.gmra.mxu0 %v3606
  %v3735 = vpop.f32.mrf.mxu0
  %v3736 = vadd.f32 %v3671, %v3735
  %3737 = vmatmul.f32.gmra.mxu0 %v3609
  %v3738 = vpop.f32.mrf.mxu0
  %v3739 = vadd.f32 %v3674, %v3738
  %3740 = vmatmul.f32.gmra.mxu0 %v3612
  %v3741 = vpop.f32.mrf.mxu0
  %v3742 = vadd.f32 %v3677, %v3741
  %3743 = vmatmul.f32.gmra.mxu0 %v3615
  %v3744 = vpop.f32.mrf.mxu0
  %v3745 = vadd.f32 %v3680, %v3744
  %3746 = vmatmul.f32.gmra.mxu0 %v3618
  %v3747 = vpop.f32.mrf.mxu0
  %v3748 = vadd.f32 %v3683, %v3747
  %3749 = vmatmul.f32.gmra.mxu0 %v3621
  %v3750 = vpop.f32.mrf.mxu0
  %v3751 = vadd.f32 %v3686, %v3750
  %3752 = vmatmul.f32.gmra.mxu0 %v3624
  %v3753 = vpop.f32.mrf.mxu0
  %v3754 = vadd.f32 %v3689, %v3753
  %3755 = vmatmul.f32.gmra.mxu0 %v3627
  %v3756 = vpop.f32.mrf.mxu0
  %v3757 = vadd.f32 %v3692, %v3756
  %3758 = vmatmul.f32.gmra.mxu0 %v3630
  %v3759 = vpop.f32.mrf.mxu0
  %v3760 = vadd.f32 %v3695, %v3759
  %3761 = vdwg.mxu0
  %3762 = vmatpush.msra.mxu0 %v3562
  %3763 = vmatpush.msra.mxu0 %v3560
  %3764 = vmatpush.msra.mxu0 %v3558
  %3765 = vmatpush.msra.mxu0 %v3556
  %3766 = vmatpush.msra.mxu0 %v3554
  %3767 = vmatpush.msra.mxu0 %v3552
  %3768 = vmatpush.msra.mxu0 %v3550
  %3769 = vmatpush.msra.mxu0 %v3548
  %3770 = vmatpush.msra.mxu0 %v3546
  %3771 = vmatpush.msra.mxu0 %v3544
  %3772 = vmatpush.msra.mxu0 %v3542
  %3773 = vmatpush.msra.mxu0 %v3540
  %3774 = vmatpush.msra.mxu0 %v3538
  %3775 = vmatpush.msra.mxu0 %v3536
  %3776 = vmatpush.msra.mxu0 %v3534
  %3777 = vmatpush.msra.mxu0 %v3532
  %3778 = vmatmul.f32.gmra.mxu0 %v3499
  %v3779 = vpop.f32.mrf.mxu0
  %v3780 = vadd.f32 0.0, %v3779
  %3781 = vmatmul.f32.gmra.mxu0 %v3501
  %v3782 = vpop.f32.mrf.mxu0
  %v3783 = vadd.f32 0.0, %v3782
  %3784 = vmatmul.f32.gmra.mxu0 %v3503
  %v3785 = vpop.f32.mrf.mxu0
  %v3786 = vadd.f32 0.0, %v3785
  %3787 = vmatmul.f32.gmra.mxu0 %v3505
  %v3788 = vpop.f32.mrf.mxu0
  %v3789 = vadd.f32 0.0, %v3788
  %3790 = vmatmul.f32.gmra.mxu0 %v3507
  %v3791 = vpop.f32.mrf.mxu0
  %v3792 = vadd.f32 0.0, %v3791
  %3793 = vmatmul.f32.gmra.mxu0 %v3509
  %v3794 = vpop.f32.mrf.mxu0
  %v3795 = vadd.f32 0.0, %v3794
  %3796 = vmatmul.f32.gmra.mxu0 %v3511
  %v3797 = vpop.f32.mrf.mxu0
  %v3798 = vadd.f32 0.0, %v3797
  %3799 = vmatmul.f32.gmra.mxu0 %v3513
  %v3800 = vpop.f32.mrf.mxu0
  %v3801 = vadd.f32 0.0, %v3800
  %3802 = vmatmul.f32.gmra.mxu0 %v3515
  %v3803 = vpop.f32.mrf.mxu0
  %v3804 = vadd.f32 0.0, %v3803
  %3805 = vmatmul.f32.gmra.mxu0 %v3517
  %v3806 = vpop.f32.mrf.mxu0
  %v3807 = vadd.f32 0.0, %v3806
  %3808 = vmatmul.f32.gmra.mxu0 %v3519
  %v3809 = vpop.f32.mrf.mxu0
  %v3810 = vadd.f32 0.0, %v3809
  %3811 = vmatmul.f32.gmra.mxu0 %v3521
  %v3812 = vpop.f32.mrf.mxu0
  %v3813 = vadd.f32 0.0, %v3812
  %3814 = vmatmul.f32.gmra.mxu0 %v3523
  %v3815 = vpop.f32.mrf.mxu0
  %v3816 = vadd.f32 0.0, %v3815
  %3817 = vmatmul.f32.gmra.mxu0 %v3525
  %v3818 = vpop.f32.mrf.mxu0
  %v3819 = vadd.f32 0.0, %v3818
  %3820 = vmatmul.f32.gmra.mxu0 %v3527
  %v3821 = vpop.f32.mrf.mxu0
  %v3822 = vadd.f32 0.0, %v3821
  %3823 = vmatmul.f32.gmra.mxu0 %v3529
  %v3824 = vpop.f32.mrf.mxu0
  %v3825 = vadd.f32 0.0, %v3824
  %3826 = vdwg.mxu0
  %3827 = vmatpush.msra.mxu0 0.0
  %3828 = vmatpush.msra.mxu0 0.0
  %3829 = vmatpush.msra.mxu0 0.0
  %3830 = vmatpush.msra.mxu0 0.0
  %3831 = vmatpush.msra.mxu0 0.0
  %3832 = vmatpush.msra.mxu0 0.0
  %3833 = vmatpush.msra.mxu0 %v3582
  %3834 = vmatpush.msra.mxu0 %v3580
  %3835 = vmatpush.msra.mxu0 %v3578
  %3836 = vmatpush.msra.mxu0 %v3576
  %3837 = vmatpush.msra.mxu0 %v3574
  %3838 = vmatpush.msra.mxu0 %v3572
  %3839 = vmatpush.msra.mxu0 %v3570
  %3840 = vmatpush.msra.mxu0 %v3568
  %3841 = vmatpush.msra.mxu0 %v3566
  %3842 = vmatpush.msra.mxu0 %v3564
  %3843 = vmatmul.f32.gmra.mxu0 %v3585
  %v3844 = vpop.f32.mrf.mxu0
  %v3845 = vadd.f32 %v3780, %v3844
  %3846 = vmatmul.f32.gmra.mxu0 %v3588
  %v3847 = vpop.f32.mrf.mxu0
  %v3848 = vadd.f32 %v3783, %v3847
  %3849 = vmatmul.f32.gmra.mxu0 %v3591
  %v3850 = vpop.f32.mrf.mxu0
  %v3851 = vadd.f32 %v3786, %v3850
  %3852 = vmatmul.f32.gmra.mxu0 %v3594
  %v3853 = vpop.f32.mrf.mxu0
  %v3854 = vadd.f32 %v3789, %v3853
  %3855 = vmatmul.f32.gmra.mxu0 %v3597
  %v3856 = vpop.f32.mrf.mxu0
  %v3857 = vadd.f32 %v3792, %v3856
  %3858 = vmatmul.f32.gmra.mxu0 %v3600
  %v3859 = vpop.f32.mrf.mxu0
  %v3860 = vadd.f32 %v3795, %v3859
  %3861 = vmatmul.f32.gmra.mxu0 %v3603
  %v3862 = vpop.f32.mrf.mxu0
  %v3863 = vadd.f32 %v3798, %v3862
  %3864 = vmatmul.f32.gmra.mxu0 %v3606
  %v3865 = vpop.f32.mrf.mxu0
  %v3866 = vadd.f32 %v3801, %v3865
  %3867 = vmatmul.f32.gmra.mxu0 %v3609
  %v3868 = vpop.f32.mrf.mxu0
  %v3869 = vadd.f32 %v3804, %v3868
  %3870 = vmatmul.f32.gmra.mxu0 %v3612
  %v3871 = vpop.f32.mrf.mxu0
  %v3872 = vadd.f32 %v3807, %v3871
  %3873 = vmatmul.f32.gmra.mxu0 %v3615
  %v3874 = vpop.f32.mrf.mxu0
  %v3875 = vadd.f32 %v3810, %v3874
  %3876 = vmatmul.f32.gmra.mxu0 %v3618
  %v3877 = vpop.f32.mrf.mxu0
  %v3878 = vadd.f32 %v3813, %v3877
  %3879 = vmatmul.f32.gmra.mxu0 %v3621
  %v3880 = vpop.f32.mrf.mxu0
  %v3881 = vadd.f32 %v3816, %v3880
  %3882 = vmatmul.f32.gmra.mxu0 %v3624
  %v3883 = vpop.f32.mrf.mxu0
  %v3884 = vadd.f32 %v3819, %v3883
  %3885 = vmatmul.f32.gmra.mxu0 %v3627
  %v3886 = vpop.f32.mrf.mxu0
  %v3887 = vadd.f32 %v3822, %v3886
  %3888 = vmatmul.f32.gmra.mxu0 %v3630
  %v3889 = vpop.f32.mrf.mxu0
  %v3890 = vadd.f32 %v3825, %v3889
  %3891 = vdwg.mxu0
  %vm3892 = vcmask 1039360
  %v3894 = vsel %vm3892, %v3186, 0
  %v3897 = vsel %vm3892, %v3187, 0
  %v3900 = vsel %vm3892, %v3188, 0
  %v3903 = vsel %vm3892, %v3189, 0
  %v3906 = vsel %vm3892, %v3190, 0
  %v3909 = vsel %vm3892, %v3191, 0
  %v3912 = vsel %vm3892, %v3192, 0
  %v3915 = vsel %vm3892, %v3193, 0
  %v3918 = vsel %vm3892, %v3194, 0
  %v3921 = vsel %vm3892, %v3195, 0
  %v3924 = vsel %vm135, %v3760, 0
  %v3927 = vsel %vm135, %v3890, 0
  %3929 = vmatpush.msra.mxu0 %v3924
  %3930 = vmatpush.msra.mxu0 %v3757
  %3931 = vmatpush.msra.mxu0 %v3754
  %3932 = vmatpush.msra.mxu0 %v3751
  %3933 = vmatpush.msra.mxu0 %v3748
  %3934 = vmatpush.msra.mxu0 %v3745
  %3935 = vmatpush.msra.mxu0 %v3742
  %3936 = vmatpush.msra.mxu0 %v3739
  %3937 = vmatpush.msra.mxu0 %v3736
  %3938 = vmatpush.msra.mxu0 %v3733
  %3939 = vmatpush.msra.mxu0 %v3730
  %3940 = vmatpush.msra.mxu0 %v3727
  %3941 = vmatpush.msra.mxu0 %v3724
  %3942 = vmatpush.msra.mxu0 %v3721
  %3943 = vmatpush.msra.mxu0 %v3718
  %3944 = vmatpush.msra.mxu0 %v3715
  %3945 = vmatmul.f32.gmra.mxu0 %v3894
  %v3946 = vpop.f32.mrf.mxu0
  %v3947 = vadd.f32 0.0, %v3946
  %3948 = vmatmul.f32.gmra.mxu0 %v3897
  %v3949 = vpop.f32.mrf.mxu0
  %v3950 = vadd.f32 0.0, %v3949
  %3951 = vmatmul.f32.gmra.mxu0 %v3900
  %v3952 = vpop.f32.mrf.mxu0
  %v3953 = vadd.f32 0.0, %v3952
  %3954 = vmatmul.f32.gmra.mxu0 %v3903
  %v3955 = vpop.f32.mrf.mxu0
  %v3956 = vadd.f32 0.0, %v3955
  %3957 = vmatmul.f32.gmra.mxu0 %v3906
  %v3958 = vpop.f32.mrf.mxu0
  %v3959 = vadd.f32 0.0, %v3958
  %3960 = vmatmul.f32.gmra.mxu0 %v3909
  %v3961 = vpop.f32.mrf.mxu0
  %v3962 = vadd.f32 0.0, %v3961
  %3963 = vmatmul.f32.gmra.mxu0 %v3912
  %v3964 = vpop.f32.mrf.mxu0
  %v3965 = vadd.f32 0.0, %v3964
  %3966 = vmatmul.f32.gmra.mxu0 %v3915
  %v3967 = vpop.f32.mrf.mxu0
  %v3968 = vadd.f32 0.0, %v3967
  %3969 = vmatmul.f32.gmra.mxu0 %v3918
  %v3970 = vpop.f32.mrf.mxu0
  %v3971 = vadd.f32 0.0, %v3970
  %3972 = vmatmul.f32.gmra.mxu0 %v3921
  %v3973 = vpop.f32.mrf.mxu0
  %v3974 = vadd.f32 0.0, %v3973
  %3975 = vdwg.mxu0
  %3976 = vmatpush.msra.mxu0 %v3927
  %3977 = vmatpush.msra.mxu0 %v3887
  %3978 = vmatpush.msra.mxu0 %v3884
  %3979 = vmatpush.msra.mxu0 %v3881
  %3980 = vmatpush.msra.mxu0 %v3878
  %3981 = vmatpush.msra.mxu0 %v3875
  %3982 = vmatpush.msra.mxu0 %v3872
  %3983 = vmatpush.msra.mxu0 %v3869
  %3984 = vmatpush.msra.mxu0 %v3866
  %3985 = vmatpush.msra.mxu0 %v3863
  %3986 = vmatpush.msra.mxu0 %v3860
  %3987 = vmatpush.msra.mxu0 %v3857
  %3988 = vmatpush.msra.mxu0 %v3854
  %3989 = vmatpush.msra.mxu0 %v3851
  %3990 = vmatpush.msra.mxu0 %v3848
  %3991 = vmatpush.msra.mxu0 %v3845
  %3992 = vmatmul.f32.gmra.mxu0 %v3894
  %v3993 = vpop.f32.mrf.mxu0
  %v3994 = vadd.f32 0.0, %v3993
  %3995 = vmatmul.f32.gmra.mxu0 %v3897
  %v3996 = vpop.f32.mrf.mxu0
  %v3997 = vadd.f32 0.0, %v3996
  %3998 = vmatmul.f32.gmra.mxu0 %v3900
  %v3999 = vpop.f32.mrf.mxu0
  %v4000 = vadd.f32 0.0, %v3999
  %4001 = vmatmul.f32.gmra.mxu0 %v3903
  %v4002 = vpop.f32.mrf.mxu0
  %v4003 = vadd.f32 0.0, %v4002
  %4004 = vmatmul.f32.gmra.mxu0 %v3906
  %v4005 = vpop.f32.mrf.mxu0
  %v4006 = vadd.f32 0.0, %v4005
  %4007 = vmatmul.f32.gmra.mxu0 %v3909
  %v4008 = vpop.f32.mrf.mxu0
  %v4009 = vadd.f32 0.0, %v4008
  %4010 = vmatmul.f32.gmra.mxu0 %v3912
  %v4011 = vpop.f32.mrf.mxu0
  %v4012 = vadd.f32 0.0, %v4011
  %4013 = vmatmul.f32.gmra.mxu0 %v3915
  %v4014 = vpop.f32.mrf.mxu0
  %v4015 = vadd.f32 0.0, %v4014
  %4016 = vmatmul.f32.gmra.mxu0 %v3918
  %v4017 = vpop.f32.mrf.mxu0
  %v4018 = vadd.f32 0.0, %v4017
  %4019 = vmatmul.f32.gmra.mxu0 %v3921
  %v4020 = vpop.f32.mrf.mxu0
  %v4021 = vadd.f32 0.0, %v4020
  %4022 = vdwg.mxu0
  %v4023 = vld [vmem:[%s9] sm:$0xff]
  %v4024 = vld [vmem:[%s9 + $0x8] sm:$0xff]
  %v4025 = vld [vmem:[%s9 + $0x10] sm:$0xff]
  %v4026 = vld [vmem:[%s9 + $0x18] sm:$0xff]
  %v4027 = vld [vmem:[%s9 + $0x20] sm:$0xff]
  %v4028 = vld [vmem:[%s9 + $0x28] sm:$0xff]
  %v4029 = vld [vmem:[%s9 + $0x30] sm:$0xff]
  %v4030 = vld [vmem:[%s9 + $0x38] sm:$0xff]
  %v4031 = vld [vmem:[%s9 + $0x40] sm:$0xff]
  %v4032 = vld [vmem:[%s9 + $0x48] sm:$0xff]
  %v4033 = vld [vmem:[%s9 + $0x50] sm:$0xff]
  %v4034 = vld [vmem:[%s9 + $0x58] sm:$0xff]
  %v4035 = vld [vmem:[%s9 + $0x60] sm:$0xff]
  %v4036 = vld [vmem:[%s9 + $0x68] sm:$0xff]
  %v4037 = vld [vmem:[%s9 + $0x70] sm:$0xff]
  %v4038 = vld [vmem:[%s9 + $0x78] sm:$0xff]
  %v4039 = vld [vmem:[%s9 + $0x80] sm:$0xff]
  %v4040 = vld [vmem:[%s9 + $0x88] sm:$0xff]
  %v4041 = vld [vmem:[%s9 + $0x90] sm:$0xff]
  %v4042 = vld [vmem:[%s9 + $0x98] sm:$0xff]
  %v4043 = vld [vmem:[%s9 + $0xa0] sm:$0xff]
  %v4044 = vld [vmem:[%s9 + $0xa8] sm:$0xff]
  %v4045 = vld [vmem:[%s9 + $0xb0] sm:$0xff]
  %v4046 = vld [vmem:[%s9 + $0xb8] sm:$0xff]
  %v4047 = vld [vmem:[%s9 + $0xc0] sm:$0xff]
  %v4048 = vld [vmem:[%s9 + $0xc8] sm:$0xff]
  %v4049 = vld [vmem:[%s9 + $0xd0] sm:$0xff]
  %v4050 = vld [vmem:[%s9 + $0xd8] sm:$0xff]
  %v4051 = vld [vmem:[%s9 + $0xe0] sm:$0xff]
  %v4052 = vld [vmem:[%s9 + $0xe8] sm:$0xff]
  %v4053 = vld [vmem:[%s9 + $0xf0] sm:$0xff]
  %v4054 = vld [vmem:[%s9 + $0xf8] sm:$0xff]
  %v4055 = vld [vmem:[%s9 + $0x100] sm:$0xff]
  %v4056 = vld [vmem:[%s9 + $0x108] sm:$0xff]
  %v4057 = vld [vmem:[%s9 + $0x110] sm:$0xff]
  %v4058 = vld [vmem:[%s9 + $0x118] sm:$0xff]
  %s4059 = scalar_lea.vmem %s9, 288
  %v4060 = vld [vmem:[%s4059] sm:$0xff]
  %v4061 = vld [vmem:[%s4059 + $0x8] sm:$0xff]
  %v4062 = vld [vmem:[%s4059 + $0x10] sm:$0xff]
  %v4063 = vld [vmem:[%s4059 + $0x18] sm:$0xff]
  %v4064 = vld [vmem:[%s4059 + $0x20] sm:$0xff]
  %v4065 = vld [vmem:[%s4059 + $0x28] sm:$0xff]
  %v4066 = vld [vmem:[%s4059 + $0x30] sm:$0xff]
  %v4067 = vld [vmem:[%s4059 + $0x38] sm:$0xff]
  %v4068 = vld [vmem:[%s4059 + $0x40] sm:$0xff]
  %v4069 = vld [vmem:[%s4059 + $0x48] sm:$0xff]
  %v4070 = vld [vmem:[%s4059 + $0x50] sm:$0xff]
  %v4071 = vld [vmem:[%s4059 + $0x58] sm:$0xff]
  %v4072 = vld [vmem:[%s4059 + $0x60] sm:$0xff]
  %v4073 = vld [vmem:[%s4059 + $0x68] sm:$0xff]
  %v4074 = vld [vmem:[%s4059 + $0x70] sm:$0xff]
  %v4075 = vld [vmem:[%s4059 + $0x78] sm:$0xff]
  %v4076 = vld [vmem:[%s4059 + $0x80] sm:$0xff]
  %v4077 = vld [vmem:[%s4059 + $0x88] sm:$0xff]
  %v4078 = vld [vmem:[%s4059 + $0x90] sm:$0xff]
  %v4079 = vld [vmem:[%s4059 + $0x98] sm:$0xff]
  %v4080 = vld [vmem:[%s4059 + $0xa0] sm:$0xff]
  %v4081 = vld [vmem:[%s4059 + $0xa8] sm:$0xff]
  %v4082 = vld [vmem:[%s4059 + $0xb0] sm:$0xff]
  %v4083 = vld [vmem:[%s4059 + $0xb8] sm:$0xff]
  %v4084 = vld [vmem:[%s4059 + $0xc0] sm:$0xff]
  %v4085 = vld [vmem:[%s4059 + $0xc8] sm:$0xff]
  %v4086 = vld [vmem:[%s4059 + $0xd0] sm:$0xff]
  %v4087 = vld [vmem:[%s4059 + $0xd8] sm:$0xff]
  %v4088 = vld [vmem:[%s4059 + $0xe0] sm:$0xff]
  %v4089 = vld [vmem:[%s4059 + $0xe8] sm:$0xff]
  %v4090 = vld [vmem:[%s4059 + $0xf0] sm:$0xff]
  %v4091 = vld [vmem:[%s4059 + $0xf8] sm:$0xff]
  %v4092 = vld [vmem:[%s4059 + $0x100] sm:$0xff]
  %v4093 = vld [vmem:[%s4059 + $0x108] sm:$0xff]
  %v4094 = vld [vmem:[%s4059 + $0x110] sm:$0xff]
  %v4095 = vld [vmem:[%s4059 + $0x118] sm:$0xff]
  %v4116 = vrot.slane %v3947, 1
  %v4117 = vrot.slane %v3950, 1
  %v4118 = vsel %vm135, %v4116, %v4117
  %v4119 = vrot.slane %v3994, 1
  %v4120 = vrot.slane %v3997, 1
  %v4121 = vsel %vm135, %v4119, %v4120
  %v4122 = vrot.slane %v3953, 1
  %v4123 = vsel %vm135, %v4117, %v4122
  %v4124 = vrot.slane %v4000, 1
  %v4125 = vsel %vm135, %v4120, %v4124
  %v4126 = vrot.slane %v3956, 1
  %v4127 = vsel %vm135, %v4122, %v4126
  %v4128 = vrot.slane %v4003, 1
  %v4129 = vsel %vm135, %v4124, %v4128
  %v4130 = vrot.slane %v3959, 1
  %v4131 = vsel %vm135, %v4126, %v4130
  %v4132 = vrot.slane %v4006, 1
  %v4133 = vsel %vm135, %v4128, %v4132
  %v4134 = vrot.slane %v3962, 1
  %v4135 = vsel %vm135, %v4130, %v4134
  %v4136 = vrot.slane %v4009, 1
  %v4137 = vsel %vm135, %v4132, %v4136
  %v4138 = vrot.slane %v3965, 1
  %v4139 = vsel %vm135, %v4134, %v4138
  %v4140 = vrot.slane %v4012, 1
  %v4141 = vsel %vm135, %v4136, %v4140
  %v4142 = vrot.slane %v3968, 1
  %v4143 = vsel %vm135, %v4138, %v4142
  %v4144 = vrot.slane %v4015, 1
  %v4145 = vsel %vm135, %v4140, %v4144
  %v4146 = vrot.slane %v3971, 1
  %v4147 = vsel %vm135, %v4142, %v4146
  %v4148 = vrot.slane %v4018, 1
  %v4149 = vsel %vm135, %v4144, %v4148
  %v4150 = vrot.slane %v3974, 1
  %v4151 = vsel %vm135, %v4146, %v4150
  %v4152 = vrot.slane %v4021, 1
  %v4153 = vsel %vm135, %v4148, %v4152
  %vm4163 = vcmask 130048
  %v4164 = vsel %vm4163, %v4121, 0
  %v4166 = vsel %vm4163, %v4125, 0
  %v4168 = vsel %vm4163, %v4129, 0
  %v4170 = vsel %vm4163, %v4133, 0
  %v4172 = vsel %vm4163, %v4137, 0
  %v4174 = vsel %vm4163, %v4141, 0
  %v4176 = vsel %vm4163, %v4145, 0
  %v4178 = vsel %vm4163, %v4149, 0
  %v4180 = vsel %vm4163, %v4153, 0
  %4182 = vmatpush.msra.mxu0 %v4090
  %4183 = vmatpush.msra.mxu0 %v4088
  %4184 = vmatpush.msra.mxu0 %v4086
  %4185 = vmatpush.msra.mxu0 %v4084
  %4186 = vmatpush.msra.mxu0 %v4082
  %4187 = vmatpush.msra.mxu0 %v4080
  %4188 = vmatpush.msra.mxu0 %v4078
  %4189 = vmatpush.msra.mxu0 %v4076
  %4190 = vmatpush.msra.mxu0 %v4074
  %4191 = vmatpush.msra.mxu0 %v4072
  %4192 = vmatpush.msra.mxu0 %v4070
  %4193 = vmatpush.msra.mxu0 %v4068
  %4194 = vmatpush.msra.mxu0 %v4066
  %4195 = vmatpush.msra.mxu0 %v4064
  %4196 = vmatpush.msra.mxu0 %v4062
  %4197 = vmatpush.msra.mxu0 %v4060
  %4198 = vmatmul.f32.gmra.mxu0 %v4118
  %v4199 = vpop.f32.mrf.mxu0
  %v4200 = vadd.f32 0.0, %v4199
  %4201 = vmatmul.f32.gmra.mxu0 %v4123
  %v4202 = vpop.f32.mrf.mxu0
  %v4203 = vadd.f32 0.0, %v4202
  %4204 = vmatmul.f32.gmra.mxu0 %v4127
  %v4205 = vpop.f32.mrf.mxu0
  %v4206 = vadd.f32 0.0, %v4205
  %4207 = vmatmul.f32.gmra.mxu0 %v4131
  %v4208 = vpop.f32.mrf.mxu0
  %v4209 = vadd.f32 0.0, %v4208
  %4210 = vmatmul.f32.gmra.mxu0 %v4135
  %v4211 = vpop.f32.mrf.mxu0
  %v4212 = vadd.f32 0.0, %v4211
  %4213 = vmatmul.f32.gmra.mxu0 %v4139
  %v4214 = vpop.f32.mrf.mxu0
  %v4215 = vadd.f32 0.0, %v4214
  %4216 = vmatmul.f32.gmra.mxu0 %v4143
  %v4217 = vpop.f32.mrf.mxu0
  %v4218 = vadd.f32 0.0, %v4217
  %4219 = vmatmul.f32.gmra.mxu0 %v4147
  %v4220 = vpop.f32.mrf.mxu0
  %v4221 = vadd.f32 0.0, %v4220
  %4222 = vmatmul.f32.gmra.mxu0 %v4151
  %v4223 = vpop.f32.mrf.mxu0
  %v4224 = vadd.f32 0.0, %v4223
  %4225 = vdwg.mxu0
  %4226 = vmatpush.msra.mxu0 0.0
  %4227 = vmatpush.msra.mxu0 0.0
  %4228 = vmatpush.msra.mxu0 0.0
  %4229 = vmatpush.msra.mxu0 0.0
  %4230 = vmatpush.msra.mxu0 0.0
  %4231 = vmatpush.msra.mxu0 0.0
  %4232 = vmatpush.msra.mxu0 0.0
  %4233 = vmatpush.msra.mxu0 0.0
  %4234 = vmatpush.msra.mxu0 0.0
  %4235 = vmatpush.msra.mxu0 0.0
  %4236 = vmatpush.msra.mxu0 0.0
  %4237 = vmatpush.msra.mxu0 0.0
  %4238 = vmatpush.msra.mxu0 0.0
  %4239 = vmatpush.msra.mxu0 0.0
  %4240 = vmatpush.msra.mxu0 %v4094
  %4241 = vmatpush.msra.mxu0 %v4092
  %4242 = vmatmul.f32.gmra.mxu0 %v4164
  %v4243 = vpop.f32.mrf.mxu0
  %v4244 = vadd.f32 %v4200, %v4243
  %4245 = vmatmul.f32.gmra.mxu0 %v4166
  %v4246 = vpop.f32.mrf.mxu0
  %v4247 = vadd.f32 %v4203, %v4246
  %4248 = vmatmul.f32.gmra.mxu0 %v4168
  %v4249 = vpop.f32.mrf.mxu0
  %v4250 = vadd.f32 %v4206, %v4249
  %4251 = vmatmul.f32.gmra.mxu0 %v4170
  %v4252 = vpop.f32.mrf.mxu0
  %v4253 = vadd.f32 %v4209, %v4252
  %4254 = vmatmul.f32.gmra.mxu0 %v4172
  %v4255 = vpop.f32.mrf.mxu0
  %v4256 = vadd.f32 %v4212, %v4255
  %4257 = vmatmul.f32.gmra.mxu0 %v4174
  %v4258 = vpop.f32.mrf.mxu0
  %v4259 = vadd.f32 %v4215, %v4258
  %4260 = vmatmul.f32.gmra.mxu0 %v4176
  %v4261 = vpop.f32.mrf.mxu0
  %v4262 = vadd.f32 %v4218, %v4261
  %4263 = vmatmul.f32.gmra.mxu0 %v4178
  %v4264 = vpop.f32.mrf.mxu0
  %v4265 = vadd.f32 %v4221, %v4264
  %4266 = vmatmul.f32.gmra.mxu0 %v4180
  %v4267 = vpop.f32.mrf.mxu0
  %v4268 = vadd.f32 %v4224, %v4267
  %4269 = vdwg.mxu0
  %4270 = vmatpush.msra.mxu0 %v4091
  %4271 = vmatpush.msra.mxu0 %v4089
  %4272 = vmatpush.msra.mxu0 %v4087
  %4273 = vmatpush.msra.mxu0 %v4085
  %4274 = vmatpush.msra.mxu0 %v4083
  %4275 = vmatpush.msra.mxu0 %v4081
  %4276 = vmatpush.msra.mxu0 %v4079
  %4277 = vmatpush.msra.mxu0 %v4077
  %4278 = vmatpush.msra.mxu0 %v4075
  %4279 = vmatpush.msra.mxu0 %v4073
  %4280 = vmatpush.msra.mxu0 %v4071
  %4281 = vmatpush.msra.mxu0 %v4069
  %4282 = vmatpush.msra.mxu0 %v4067
  %4283 = vmatpush.msra.mxu0 %v4065
  %4284 = vmatpush.msra.mxu0 %v4063
  %4285 = vmatpush.msra.mxu0 %v4061
  %4286 = vmatmul.f32.gmra.mxu0 %v4118
  %v4287 = vpop.f32.mrf.mxu0
  %v4288 = vadd.f32 0.0, %v4287
  %4289 = vmatmul.f32.gmra.mxu0 %v4123
  %v4290 = vpop.f32.mrf.mxu0
  %v4291 = vadd.f32 0.0, %v4290
  %4292 = vmatmul.f32.gmra.mxu0 %v4127
  %v4293 = vpop.f32.mrf.mxu0
  %v4294 = vadd.f32 0.0, %v4293
  %4295 = vmatmul.f32.gmra.mxu0 %v4131
  %v4296 = vpop.f32.mrf.mxu0
  %v4297 = vadd.f32 0.0, %v4296
  %4298 = vmatmul.f32.gmra.mxu0 %v4135
  %v4299 = vpop.f32.mrf.mxu0
  %v4300 = vadd.f32 0.0, %v4299
  %4301 = vmatmul.f32.gmra.mxu0 %v4139
  %v4302 = vpop.f32.mrf.mxu0
  %v4303 = vadd.f32 0.0, %v4302
  %4304 = vmatmul.f32.gmra.mxu0 %v4143
  %v4305 = vpop.f32.mrf.mxu0
  %v4306 = vadd.f32 0.0, %v4305
  %4307 = vmatmul.f32.gmra.mxu0 %v4147
  %v4308 = vpop.f32.mrf.mxu0
  %v4309 = vadd.f32 0.0, %v4308
  %4310 = vmatmul.f32.gmra.mxu0 %v4151
  %v4311 = vpop.f32.mrf.mxu0
  %v4312 = vadd.f32 0.0, %v4311
  %4313 = vdwg.mxu0
  %4314 = vmatpush.msra.mxu0 0.0
  %4315 = vmatpush.msra.mxu0 0.0
  %4316 = vmatpush.msra.mxu0 0.0
  %4317 = vmatpush.msra.mxu0 0.0
  %4318 = vmatpush.msra.mxu0 0.0
  %4319 = vmatpush.msra.mxu0 0.0
  %4320 = vmatpush.msra.mxu0 0.0
  %4321 = vmatpush.msra.mxu0 0.0
  %4322 = vmatpush.msra.mxu0 0.0
  %4323 = vmatpush.msra.mxu0 0.0
  %4324 = vmatpush.msra.mxu0 0.0
  %4325 = vmatpush.msra.mxu0 0.0
  %4326 = vmatpush.msra.mxu0 0.0
  %4327 = vmatpush.msra.mxu0 0.0
  %4328 = vmatpush.msra.mxu0 %v4095
  %4329 = vmatpush.msra.mxu0 %v4093
  %4330 = vmatmul.f32.gmra.mxu0 %v4164
  %v4331 = vpop.f32.mrf.mxu0
  %v4332 = vadd.f32 %v4288, %v4331
  %4333 = vmatmul.f32.gmra.mxu0 %v4166
  %v4334 = vpop.f32.mrf.mxu0
  %v4335 = vadd.f32 %v4291, %v4334
  %4336 = vmatmul.f32.gmra.mxu0 %v4168
  %v4337 = vpop.f32.mrf.mxu0
  %v4338 = vadd.f32 %v4294, %v4337
  %4339 = vmatmul.f32.gmra.mxu0 %v4170
  %v4340 = vpop.f32.mrf.mxu0
  %v4341 = vadd.f32 %v4297, %v4340
  %4342 = vmatmul.f32.gmra.mxu0 %v4172
  %v4343 = vpop.f32.mrf.mxu0
  %v4344 = vadd.f32 %v4300, %v4343
  %4345 = vmatmul.f32.gmra.mxu0 %v4174
  %v4346 = vpop.f32.mrf.mxu0
  %v4347 = vadd.f32 %v4303, %v4346
  %4348 = vmatmul.f32.gmra.mxu0 %v4176
  %v4349 = vpop.f32.mrf.mxu0
  %v4350 = vadd.f32 %v4306, %v4349
  %4351 = vmatmul.f32.gmra.mxu0 %v4178
  %v4352 = vpop.f32.mrf.mxu0
  %v4353 = vadd.f32 %v4309, %v4352
  %4354 = vmatmul.f32.gmra.mxu0 %v4180
  %v4355 = vpop.f32.mrf.mxu0
  %v4356 = vadd.f32 %v4312, %v4355
  %4357 = vdwg.mxu0
  %v4358 = vsel %vm4163, %v3994, 0
  %v4360 = vsel %vm4163, %v3997, 0
  %v4362 = vsel %vm4163, %v4000, 0
  %v4364 = vsel %vm4163, %v4003, 0
  %v4366 = vsel %vm4163, %v4006, 0
  %v4368 = vsel %vm4163, %v4009, 0
  %v4370 = vsel %vm4163, %v4012, 0
  %v4372 = vsel %vm4163, %v4015, 0
  %v4374 = vsel %vm4163, %v4018, 0
  %4376 = vmatpush.msra.mxu0 %v4053
  %4377 = vmatpush.msra.mxu0 %v4051
  %4378 = vmatpush.msra.mxu0 %v4049
  %4379 = vmatpush.msra.mxu0 %v4047
  %4380 = vmatpush.msra.mxu0 %v4045
  %4381 = vmatpush.msra.mxu0 %v4043
  %4382 = vmatpush.msra.mxu0 %v4041
  %4383 = vmatpush.msra.mxu0 %v4039
  %4384 = vmatpush.msra.mxu0 %v4037
  %4385 = vmatpush.msra.mxu0 %v4035
  %4386 = vmatpush.msra.mxu0 %v4033
  %4387 = vmatpush.msra.mxu0 %v4031
  %4388 = vmatpush.msra.mxu0 %v4029
  %4389 = vmatpush.msra.mxu0 %v4027
  %4390 = vmatpush.msra.mxu0 %v4025
  %4391 = vmatpush.msra.mxu0 %v4023
  %4392 = vmatmul.f32.gmra.mxu0 %v3947
  %v4393 = vpop.f32.mrf.mxu0
  %v4394 = vadd.f32 %v4244, %v4393
  %4395 = vmatmul.f32.gmra.mxu0 %v3950
  %v4396 = vpop.f32.mrf.mxu0
  %v4397 = vadd.f32 %v4247, %v4396
  %4398 = vmatmul.f32.gmra.mxu0 %v3953
  %v4399 = vpop.f32.mrf.mxu0
  %v4400 = vadd.f32 %v4250, %v4399
  %4401 = vmatmul.f32.gmra.mxu0 %v3956
  %v4402 = vpop.f32.mrf.mxu0
  %v4403 = vadd.f32 %v4253, %v4402
  %4404 = vmatmul.f32.gmra.mxu0 %v3959
  %v4405 = vpop.f32.mrf.mxu0
  %v4406 = vadd.f32 %v4256, %v4405
  %4407 = vmatmul.f32.gmra.mxu0 %v3962
  %v4408 = vpop.f32.mrf.mxu0
  %v4409 = vadd.f32 %v4259, %v4408
  %4410 = vmatmul.f32.gmra.mxu0 %v3965
  %v4411 = vpop.f32.mrf.mxu0
  %v4412 = vadd.f32 %v4262, %v4411
  %4413 = vmatmul.f32.gmra.mxu0 %v3968
  %v4414 = vpop.f32.mrf.mxu0
  %v4415 = vadd.f32 %v4265, %v4414
  %4416 = vmatmul.f32.gmra.mxu0 %v3971
  %v4417 = vpop.f32.mrf.mxu0
  %v4418 = vadd.f32 %v4268, %v4417
  %4419 = vdwg.mxu0
  %4420 = vmatpush.msra.mxu0 0.0
  %4421 = vmatpush.msra.mxu0 0.0
  %4422 = vmatpush.msra.mxu0 0.0
  %4423 = vmatpush.msra.mxu0 0.0
  %4424 = vmatpush.msra.mxu0 0.0
  %4425 = vmatpush.msra.mxu0 0.0
  %4426 = vmatpush.msra.mxu0 0.0
  %4427 = vmatpush.msra.mxu0 0.0
  %4428 = vmatpush.msra.mxu0 0.0
  %4429 = vmatpush.msra.mxu0 0.0
  %4430 = vmatpush.msra.mxu0 0.0
  %4431 = vmatpush.msra.mxu0 0.0
  %4432 = vmatpush.msra.mxu0 0.0
  %4433 = vmatpush.msra.mxu0 0.0
  %4434 = vmatpush.msra.mxu0 %v4057
  %4435 = vmatpush.msra.mxu0 %v4055
  %4436 = vmatmul.f32.gmra.mxu0 %v4358
  %v4437 = vpop.f32.mrf.mxu0
  %v4438 = vadd.f32 %v4394, %v4437
  %4439 = vmatmul.f32.gmra.mxu0 %v4360
  %v4440 = vpop.f32.mrf.mxu0
  %v4441 = vadd.f32 %v4397, %v4440
  %4442 = vmatmul.f32.gmra.mxu0 %v4362
  %v4443 = vpop.f32.mrf.mxu0
  %v4444 = vadd.f32 %v4400, %v4443
  %4445 = vmatmul.f32.gmra.mxu0 %v4364
  %v4446 = vpop.f32.mrf.mxu0
  %v4447 = vadd.f32 %v4403, %v4446
  %4448 = vmatmul.f32.gmra.mxu0 %v4366
  %v4449 = vpop.f32.mrf.mxu0
  %v4450 = vadd.f32 %v4406, %v4449
  %4451 = vmatmul.f32.gmra.mxu0 %v4368
  %v4452 = vpop.f32.mrf.mxu0
  %v4453 = vadd.f32 %v4409, %v4452
  %4454 = vmatmul.f32.gmra.mxu0 %v4370
  %v4455 = vpop.f32.mrf.mxu0
  %v4456 = vadd.f32 %v4412, %v4455
  %4457 = vmatmul.f32.gmra.mxu0 %v4372
  %v4458 = vpop.f32.mrf.mxu0
  %v4459 = vadd.f32 %v4415, %v4458
  %4460 = vmatmul.f32.gmra.mxu0 %v4374
  %v4461 = vpop.f32.mrf.mxu0
  %v4462 = vadd.f32 %v4418, %v4461
  %4463 = vdwg.mxu0
  %4464 = vmatpush.msra.mxu0 %v4054
  %4465 = vmatpush.msra.mxu0 %v4052
  %4466 = vmatpush.msra.mxu0 %v4050
  %4467 = vmatpush.msra.mxu0 %v4048
  %4468 = vmatpush.msra.mxu0 %v4046
  %4469 = vmatpush.msra.mxu0 %v4044
  %4470 = vmatpush.msra.mxu0 %v4042
  %4471 = vmatpush.msra.mxu0 %v4040
  %4472 = vmatpush.msra.mxu0 %v4038
  %4473 = vmatpush.msra.mxu0 %v4036
  %4474 = vmatpush.msra.mxu0 %v4034
  %4475 = vmatpush.msra.mxu0 %v4032
  %4476 = vmatpush.msra.mxu0 %v4030
  %4477 = vmatpush.msra.mxu0 %v4028
  %4478 = vmatpush.msra.mxu0 %v4026
  %4479 = vmatpush.msra.mxu0 %v4024
  %4480 = vmatmul.f32.gmra.mxu0 %v3947
  %v4481 = vpop.f32.mrf.mxu0
  %v4482 = vadd.f32 %v4332, %v4481
  %4483 = vmatmul.f32.gmra.mxu0 %v3950
  %v4484 = vpop.f32.mrf.mxu0
  %v4485 = vadd.f32 %v4335, %v4484
  %4486 = vmatmul.f32.gmra.mxu0 %v3953
  %v4487 = vpop.f32.mrf.mxu0
  %v4488 = vadd.f32 %v4338, %v4487
  %4489 = vmatmul.f32.gmra.mxu0 %v3956
  %v4490 = vpop.f32.mrf.mxu0
  %v4491 = vadd.f32 %v4341, %v4490
  %4492 = vmatmul.f32.gmra.mxu0 %v3959
  %v4493 = vpop.f32.mrf.mxu0
  %v4494 = vadd.f32 %v4344, %v4493
  %4495 = vmatmul.f32.gmra.mxu0 %v3962
  %v4496 = vpop.f32.mrf.mxu0
  %v4497 = vadd.f32 %v4347, %v4496
  %4498 = vmatmul.f32.gmra.mxu0 %v3965
  %v4499 = vpop.f32.mrf.mxu0
  %v4500 = vadd.f32 %v4350, %v4499
  %4501 = vmatmul.f32.gmra.mxu0 %v3968
  %v4502 = vpop.f32.mrf.mxu0
  %v4503 = vadd.f32 %v4353, %v4502
  %4504 = vmatmul.f32.gmra.mxu0 %v3971
  %v4505 = vpop.f32.mrf.mxu0
  %v4506 = vadd.f32 %v4356, %v4505
  %4507 = vdwg.mxu0
  %4508 = vmatpush.msra.mxu0 0.0
  %4509 = vmatpush.msra.mxu0 0.0
  %4510 = vmatpush.msra.mxu0 0.0
  %4511 = vmatpush.msra.mxu0 0.0
  %4512 = vmatpush.msra.mxu0 0.0
  %4513 = vmatpush.msra.mxu0 0.0
  %4514 = vmatpush.msra.mxu0 0.0
  %4515 = vmatpush.msra.mxu0 0.0
  %4516 = vmatpush.msra.mxu0 0.0
  %4517 = vmatpush.msra.mxu0 0.0
  %4518 = vmatpush.msra.mxu0 0.0
  %4519 = vmatpush.msra.mxu0 0.0
  %4520 = vmatpush.msra.mxu0 0.0
  %4521 = vmatpush.msra.mxu0 0.0
  %4522 = vmatpush.msra.mxu0 %v4058
  %4523 = vmatpush.msra.mxu0 %v4056
  %4524 = vmatmul.f32.gmra.mxu0 %v4358
  %v4525 = vpop.f32.mrf.mxu0
  %v4526 = vadd.f32 %v4482, %v4525
  %4527 = vmatmul.f32.gmra.mxu0 %v4360
  %v4528 = vpop.f32.mrf.mxu0
  %v4529 = vadd.f32 %v4485, %v4528
  %4530 = vmatmul.f32.gmra.mxu0 %v4362
  %v4531 = vpop.f32.mrf.mxu0
  %v4532 = vadd.f32 %v4488, %v4531
  %4533 = vmatmul.f32.gmra.mxu0 %v4364
  %v4534 = vpop.f32.mrf.mxu0
  %v4535 = vadd.f32 %v4491, %v4534
  %4536 = vmatmul.f32.gmra.mxu0 %v4366
  %v4537 = vpop.f32.mrf.mxu0
  %v4538 = vadd.f32 %v4494, %v4537
  %4539 = vmatmul.f32.gmra.mxu0 %v4368
  %v4540 = vpop.f32.mrf.mxu0
  %v4541 = vadd.f32 %v4497, %v4540
  %4542 = vmatmul.f32.gmra.mxu0 %v4370
  %v4543 = vpop.f32.mrf.mxu0
  %v4544 = vadd.f32 %v4500, %v4543
  %4545 = vmatmul.f32.gmra.mxu0 %v4372
  %v4546 = vpop.f32.mrf.mxu0
  %v4547 = vadd.f32 %v4503, %v4546
  %4548 = vmatmul.f32.gmra.mxu0 %v4374
  %v4549 = vpop.f32.mrf.mxu0
  %v4550 = vadd.f32 %v4506, %v4549
  %4551 = vdwg.mxu0
  %s4552 = scalar_lea.vmem %s9, 576
  %v4553 = vld [vmem:[%s4552] sm:$0xff]
  %v4554 = vld [vmem:[%s4552 + $0x8] sm:$0xff]
  %v4555 = vld [vmem:[%s4552 + $0x10] sm:$0xff]
  %v4556 = vld [vmem:[%s4552 + $0x18] sm:$0xff]
  %v4557 = vld [vmem:[%s4552 + $0x20] sm:$0xff]
  %v4558 = vld [vmem:[%s4552 + $0x28] sm:$0xff]
  %v4559 = vld [vmem:[%s4552 + $0x30] sm:$0xff]
  %v4560 = vld [vmem:[%s4552 + $0x38] sm:$0xff]
  %v4561 = vld [vmem:[%s4552 + $0x40] sm:$0xff]
  %v4562 = vld [vmem:[%s4552 + $0x48] sm:$0xff]
  %v4563 = vld [vmem:[%s4552 + $0x50] sm:$0xff]
  %v4564 = vld [vmem:[%s4552 + $0x58] sm:$0xff]
  %v4565 = vld [vmem:[%s4552 + $0x60] sm:$0xff]
  %v4566 = vld [vmem:[%s4552 + $0x68] sm:$0xff]
  %v4567 = vld [vmem:[%s4552 + $0x70] sm:$0xff]
  %v4568 = vld [vmem:[%s4552 + $0x78] sm:$0xff]
  %v4569 = vld [vmem:[%s4552 + $0x80] sm:$0xff]
  %v4570 = vld [vmem:[%s4552 + $0x88] sm:$0xff]
  %v4571 = vld [vmem:[%s4552 + $0x90] sm:$0xff]
  %v4572 = vld [vmem:[%s4552 + $0x98] sm:$0xff]
  %v4573 = vld [vmem:[%s4552 + $0xa0] sm:$0xff]
  %v4574 = vld [vmem:[%s4552 + $0xa8] sm:$0xff]
  %v4575 = vld [vmem:[%s4552 + $0xb0] sm:$0xff]
  %v4576 = vld [vmem:[%s4552 + $0xb8] sm:$0xff]
  %v4577 = vld [vmem:[%s4552 + $0xc0] sm:$0xff]
  %v4578 = vld [vmem:[%s4552 + $0xc8] sm:$0xff]
  %v4579 = vld [vmem:[%s4552 + $0xd0] sm:$0xff]
  %v4580 = vld [vmem:[%s4552 + $0xd8] sm:$0xff]
  %v4581 = vld [vmem:[%s4552 + $0xe0] sm:$0xff]
  %v4582 = vld [vmem:[%s4552 + $0xe8] sm:$0xff]
  %v4583 = vld [vmem:[%s4552 + $0xf0] sm:$0xff]
  %v4584 = vld [vmem:[%s4552 + $0xf8] sm:$0xff]
  %v4585 = vld [vmem:[%s4552 + $0x100] sm:$0xff]
  %v4586 = vld [vmem:[%s4552 + $0x108] sm:$0xff]
  %v4587 = vld [vmem:[%s4552 + $0x110] sm:$0xff]
  %v4588 = vld [vmem:[%s4552 + $0x118] sm:$0xff]
  %v4589 = vrot.slane %v3947, 2
  %v4590 = vrot.slane %v3950, 2
  %v4591 = vsel %vm258, %v4589, %v4590
  %v4592 = vrot.slane %v3994, 2
  %v4593 = vrot.slane %v3997, 2
  %v4594 = vsel %vm258, %v4592, %v4593
  %v4595 = vrot.slane %v3953, 2
  %v4596 = vsel %vm258, %v4590, %v4595
  %v4597 = vrot.slane %v4000, 2
  %v4598 = vsel %vm258, %v4593, %v4597
  %v4599 = vrot.slane %v3956, 2
  %v4600 = vsel %vm258, %v4595, %v4599
  %v4601 = vrot.slane %v4003, 2
  %v4602 = vsel %vm258, %v4597, %v4601
  %v4603 = vrot.slane %v3959, 2
  %v4604 = vsel %vm258, %v4599, %v4603
  %v4605 = vrot.slane %v4006, 2
  %v4606 = vsel %vm258, %v4601, %v4605
  %v4607 = vrot.slane %v3962, 2
  %v4608 = vsel %vm258, %v4603, %v4607
  %v4609 = vrot.slane %v4009, 2
  %v4610 = vsel %vm258, %v4605, %v4609
  %v4611 = vrot.slane %v3965, 2
  %v4612 = vsel %vm258, %v4607, %v4611
  %v4613 = vrot.slane %v4012, 2
  %v4614 = vsel %vm258, %v4609, %v4613
  %v4615 = vrot.slane %v3968, 2
  %v4616 = vsel %vm258, %v4611, %v4615
  %v4617 = vrot.slane %v4015, 2
  %v4618 = vsel %vm258, %v4613, %v4617
  %v4619 = vrot.slane %v3971, 2
  %v4620 = vsel %vm258, %v4615, %v4619
  %v4621 = vrot.slane %v4018, 2
  %v4622 = vsel %vm258, %v4617, %v4621
  %v4623 = vrot.slane %v3974, 2
  %v4624 = vsel %vm258, %v4619, %v4623
  %v4625 = vrot.slane %v4021, 2
  %v4626 = vsel %vm258, %v4621, %v4625
  %v4636 = vsel %vm4163, %v4594, 0
  %v4638 = vsel %vm4163, %v4598, 0
  %v4640 = vsel %vm4163, %v4602, 0
  %v4642 = vsel %vm4163, %v4606, 0
  %v4644 = vsel %vm4163, %v4610, 0
  %v4646 = vsel %vm4163, %v4614, 0
  %v4648 = vsel %vm4163, %v4618, 0
  %v4650 = vsel %vm4163, %v4622, 0
  %v4652 = vsel %vm4163, %v4626, 0
  %4654 = vmatpush.msra.mxu0 %v4583
  %4655 = vmatpush.msra.mxu0 %v4581
  %4656 = vmatpush.msra.mxu0 %v4579
  %4657 = vmatpush.msra.mxu0 %v4577
  %4658 = vmatpush.msra.mxu0 %v4575
  %4659 = vmatpush.msra.mxu0 %v4573
  %4660 = vmatpush.msra.mxu0 %v4571
  %4661 = vmatpush.msra.mxu0 %v4569
  %4662 = vmatpush.msra.mxu0 %v4567
  %4663 = vmatpush.msra.mxu0 %v4565
  %4664 = vmatpush.msra.mxu0 %v4563
  %4665 = vmatpush.msra.mxu0 %v4561
  %4666 = vmatpush.msra.mxu0 %v4559
  %4667 = vmatpush.msra.mxu0 %v4557
  %4668 = vmatpush.msra.mxu0 %v4555
  %4669 = vmatpush.msra.mxu0 %v4553
  %4670 = vmatmul.f32.gmra.mxu0 %v4591
  %v4671 = vpop.f32.mrf.mxu0
  %v4672 = vadd.f32 0.0, %v4671
  %4673 = vmatmul.f32.gmra.mxu0 %v4596
  %v4674 = vpop.f32.mrf.mxu0
  %v4675 = vadd.f32 0.0, %v4674
  %4676 = vmatmul.f32.gmra.mxu0 %v4600
  %v4677 = vpop.f32.mrf.mxu0
  %v4678 = vadd.f32 0.0, %v4677
  %4679 = vmatmul.f32.gmra.mxu0 %v4604
  %v4680 = vpop.f32.mrf.mxu0
  %v4681 = vadd.f32 0.0, %v4680
  %4682 = vmatmul.f32.gmra.mxu0 %v4608
  %v4683 = vpop.f32.mrf.mxu0
  %v4684 = vadd.f32 0.0, %v4683
  %4685 = vmatmul.f32.gmra.mxu0 %v4612
  %v4686 = vpop.f32.mrf.mxu0
  %v4687 = vadd.f32 0.0, %v4686
  %4688 = vmatmul.f32.gmra.mxu0 %v4616
  %v4689 = vpop.f32.mrf.mxu0
  %v4690 = vadd.f32 0.0, %v4689
  %4691 = vmatmul.f32.gmra.mxu0 %v4620
  %v4692 = vpop.f32.mrf.mxu0
  %v4693 = vadd.f32 0.0, %v4692
  %4694 = vmatmul.f32.gmra.mxu0 %v4624
  %v4695 = vpop.f32.mrf.mxu0
  %v4696 = vadd.f32 0.0, %v4695
  %4697 = vdwg.mxu0
  %4698 = vmatpush.msra.mxu0 0.0
  %4699 = vmatpush.msra.mxu0 0.0
  %4700 = vmatpush.msra.mxu0 0.0
  %4701 = vmatpush.msra.mxu0 0.0
  %4702 = vmatpush.msra.mxu0 0.0
  %4703 = vmatpush.msra.mxu0 0.0
  %4704 = vmatpush.msra.mxu0 0.0
  %4705 = vmatpush.msra.mxu0 0.0
  %4706 = vmatpush.msra.mxu0 0.0
  %4707 = vmatpush.msra.mxu0 0.0
  %4708 = vmatpush.msra.mxu0 0.0
  %4709 = vmatpush.msra.mxu0 0.0
  %4710 = vmatpush.msra.mxu0 0.0
  %4711 = vmatpush.msra.mxu0 0.0
  %4712 = vmatpush.msra.mxu0 %v4587
  %4713 = vmatpush.msra.mxu0 %v4585
  %4714 = vmatmul.f32.gmra.mxu0 %v4636
  %v4715 = vpop.f32.mrf.mxu0
  %v4716 = vadd.f32 %v4672, %v4715
  %4717 = vmatmul.f32.gmra.mxu0 %v4638
  %v4718 = vpop.f32.mrf.mxu0
  %v4719 = vadd.f32 %v4675, %v4718
  %4720 = vmatmul.f32.gmra.mxu0 %v4640
  %v4721 = vpop.f32.mrf.mxu0
  %v4722 = vadd.f32 %v4678, %v4721
  %4723 = vmatmul.f32.gmra.mxu0 %v4642
  %v4724 = vpop.f32.mrf.mxu0
  %v4725 = vadd.f32 %v4681, %v4724
  %4726 = vmatmul.f32.gmra.mxu0 %v4644
  %v4727 = vpop.f32.mrf.mxu0
  %v4728 = vadd.f32 %v4684, %v4727
  %4729 = vmatmul.f32.gmra.mxu0 %v4646
  %v4730 = vpop.f32.mrf.mxu0
  %v4731 = vadd.f32 %v4687, %v4730
  %4732 = vmatmul.f32.gmra.mxu0 %v4648
  %v4733 = vpop.f32.mrf.mxu0
  %v4734 = vadd.f32 %v4690, %v4733
  %4735 = vmatmul.f32.gmra.mxu0 %v4650
  %v4736 = vpop.f32.mrf.mxu0
  %v4737 = vadd.f32 %v4693, %v4736
  %4738 = vmatmul.f32.gmra.mxu0 %v4652
  %v4739 = vpop.f32.mrf.mxu0
  %v4740 = vadd.f32 %v4696, %v4739
  %4741 = vdwg.mxu0
  %4742 = vmatpush.msra.mxu0 %v4584
  %4743 = vmatpush.msra.mxu0 %v4582
  %4744 = vmatpush.msra.mxu0 %v4580
  %4745 = vmatpush.msra.mxu0 %v4578
  %4746 = vmatpush.msra.mxu0 %v4576
  %4747 = vmatpush.msra.mxu0 %v4574
  %4748 = vmatpush.msra.mxu0 %v4572
  %4749 = vmatpush.msra.mxu0 %v4570
  %4750 = vmatpush.msra.mxu0 %v4568
  %4751 = vmatpush.msra.mxu0 %v4566
  %4752 = vmatpush.msra.mxu0 %v4564
  %4753 = vmatpush.msra.mxu0 %v4562
  %4754 = vmatpush.msra.mxu0 %v4560
  %4755 = vmatpush.msra.mxu0 %v4558
  %4756 = vmatpush.msra.mxu0 %v4556
  %4757 = vmatpush.msra.mxu0 %v4554
  %4758 = vmatmul.f32.gmra.mxu0 %v4591
  %v4759 = vpop.f32.mrf.mxu0
  %v4760 = vadd.f32 0.0, %v4759
  %4761 = vmatmul.f32.gmra.mxu0 %v4596
  %v4762 = vpop.f32.mrf.mxu0
  %v4763 = vadd.f32 0.0, %v4762
  %4764 = vmatmul.f32.gmra.mxu0 %v4600
  %v4765 = vpop.f32.mrf.mxu0
  %v4766 = vadd.f32 0.0, %v4765
  %4767 = vmatmul.f32.gmra.mxu0 %v4604
  %v4768 = vpop.f32.mrf.mxu0
  %v4769 = vadd.f32 0.0, %v4768
  %4770 = vmatmul.f32.gmra.mxu0 %v4608
  %v4771 = vpop.f32.mrf.mxu0
  %v4772 = vadd.f32 0.0, %v4771
  %4773 = vmatmul.f32.gmra.mxu0 %v4612
  %v4774 = vpop.f32.mrf.mxu0
  %v4775 = vadd.f32 0.0, %v4774
  %4776 = vmatmul.f32.gmra.mxu0 %v4616
  %v4777 = vpop.f32.mrf.mxu0
  %v4778 = vadd.f32 0.0, %v4777
  %4779 = vmatmul.f32.gmra.mxu0 %v4620
  %v4780 = vpop.f32.mrf.mxu0
  %v4781 = vadd.f32 0.0, %v4780
  %4782 = vmatmul.f32.gmra.mxu0 %v4624
  %v4783 = vpop.f32.mrf.mxu0
  %v4784 = vadd.f32 0.0, %v4783
  %4785 = vdwg.mxu0
  %4786 = vmatpush.msra.mxu0 0.0
  %4787 = vmatpush.msra.mxu0 0.0
  %4788 = vmatpush.msra.mxu0 0.0
  %4789 = vmatpush.msra.mxu0 0.0
  %4790 = vmatpush.msra.mxu0 0.0
  %4791 = vmatpush.msra.mxu0 0.0
  %4792 = vmatpush.msra.mxu0 0.0
  %4793 = vmatpush.msra.mxu0 0.0
  %4794 = vmatpush.msra.mxu0 0.0
  %4795 = vmatpush.msra.mxu0 0.0
  %4796 = vmatpush.msra.mxu0 0.0
  %4797 = vmatpush.msra.mxu0 0.0
  %4798 = vmatpush.msra.mxu0 0.0
  %4799 = vmatpush.msra.mxu0 0.0
  %4800 = vmatpush.msra.mxu0 %v4588
  %4801 = vmatpush.msra.mxu0 %v4586
  %4802 = vmatmul.f32.gmra.mxu0 %v4636
  %v4803 = vpop.f32.mrf.mxu0
  %v4804 = vadd.f32 %v4760, %v4803
  %4805 = vmatmul.f32.gmra.mxu0 %v4638
  %v4806 = vpop.f32.mrf.mxu0
  %v4807 = vadd.f32 %v4763, %v4806
  %4808 = vmatmul.f32.gmra.mxu0 %v4640
  %v4809 = vpop.f32.mrf.mxu0
  %v4810 = vadd.f32 %v4766, %v4809
  %4811 = vmatmul.f32.gmra.mxu0 %v4642
  %v4812 = vpop.f32.mrf.mxu0
  %v4813 = vadd.f32 %v4769, %v4812
  %4814 = vmatmul.f32.gmra.mxu0 %v4644
  %v4815 = vpop.f32.mrf.mxu0
  %v4816 = vadd.f32 %v4772, %v4815
  %4817 = vmatmul.f32.gmra.mxu0 %v4646
  %v4818 = vpop.f32.mrf.mxu0
  %v4819 = vadd.f32 %v4775, %v4818
  %4820 = vmatmul.f32.gmra.mxu0 %v4648
  %v4821 = vpop.f32.mrf.mxu0
  %v4822 = vadd.f32 %v4778, %v4821
  %4823 = vmatmul.f32.gmra.mxu0 %v4650
  %v4824 = vpop.f32.mrf.mxu0
  %v4825 = vadd.f32 %v4781, %v4824
  %4826 = vmatmul.f32.gmra.mxu0 %v4652
  %v4827 = vpop.f32.mrf.mxu0
  %v4828 = vadd.f32 %v4784, %v4827
  %4829 = vdwg.mxu0
  %v4830 = vadd.f32 %v4438, %v4716
  %v4831 = vadd.f32 %v4526, %v4804
  %v4832 = vadd.f32 %v4441, %v4719
  %v4833 = vadd.f32 %v4529, %v4807
  %v4834 = vadd.f32 %v4444, %v4722
  %v4835 = vadd.f32 %v4532, %v4810
  %v4836 = vadd.f32 %v4447, %v4725
  %v4837 = vadd.f32 %v4535, %v4813
  %v4838 = vadd.f32 %v4450, %v4728
  %v4839 = vadd.f32 %v4538, %v4816
  %v4840 = vadd.f32 %v4453, %v4731
  %v4841 = vadd.f32 %v4541, %v4819
  %v4842 = vadd.f32 %v4456, %v4734
  %v4843 = vadd.f32 %v4544, %v4822
  %v4844 = vadd.f32 %v4459, %v4737
  %v4845 = vadd.f32 %v4547, %v4825
  %v4846 = vadd.f32 %v4462, %v4740
  %v4847 = vadd.f32 %v4550, %v4828
  %v4848 = vld [vmem:[%s10] sm:$0x3]
  %v4850 = vperm.slane %v4848, 0
  %v4851 = vperm.slane %v4848, 1
  %v4854 = vadd.f32 %v4830, %v4850
  %v4855 = vadd.f32 %v4831, %v4851
  %v4856 = vadd.f32 %v4832, %v4850
  %v4857 = vadd.f32 %v4833, %v4851
  %v4858 = vadd.f32 %v4834, %v4850
  %v4859 = vadd.f32 %v4835, %v4851
  %v4860 = vadd.f32 %v4836, %v4850
  %v4861 = vadd.f32 %v4837, %v4851
  %v4862 = vadd.f32 %v4838, %v4850
  %v4863 = vadd.f32 %v4839, %v4851
  %v4864 = vadd.f32 %v4840, %v4850
  %v4865 = vadd.f32 %v4841, %v4851
  %v4866 = vadd.f32 %v4842, %v4850
  %v4867 = vadd.f32 %v4843, %v4851
  %v4868 = vadd.f32 %v4844, %v4850
  %v4869 = vadd.f32 %v4845, %v4851
  %v4870 = vadd.f32 %v4846, %v4850
  %v4871 = vadd.f32 %v4847, %v4851
  %v4872 = vmax.f32 %v4854, 0.0
  %v4873 = vmax.f32 %v4855, 0.0
  %v4874 = vmax.f32 %v4856, 0.0
  %v4875 = vmax.f32 %v4857, 0.0
  %v4876 = vmax.f32 %v4858, 0.0
  %v4877 = vmax.f32 %v4859, 0.0
  %v4878 = vmax.f32 %v4860, 0.0
  %v4879 = vmax.f32 %v4861, 0.0
  %v4880 = vmax.f32 %v4862, 0.0
  %v4881 = vmax.f32 %v4863, 0.0
  %v4882 = vmax.f32 %v4864, 0.0
  %v4883 = vmax.f32 %v4865, 0.0
  %v4884 = vmax.f32 %v4866, 0.0
  %v4885 = vmax.f32 %v4867, 0.0
  %v4886 = vmax.f32 %v4868, 0.0
  %v4887 = vmax.f32 %v4869, 0.0
  %v4888 = vmax.f32 %v4870, 0.0
  %v4889 = vmax.f32 %v4871, 0.0
  %v4908 = vrot.slane %v4872, 1
  %v4909 = vrot.slane %v4874, 1
  %v4910 = vsel %vm135, %v4908, %v4909
  %v4911 = vrot.slane %v4873, 1
  %v4912 = vrot.slane %v4875, 1
  %v4913 = vsel %vm135, %v4911, %v4912
  %v4914 = vrot.slane %v4876, 1
  %v4915 = vsel %vm135, %v4909, %v4914
  %v4916 = vrot.slane %v4877, 1
  %v4917 = vsel %vm135, %v4912, %v4916
  %v4918 = vrot.slane %v4878, 1
  %v4919 = vsel %vm135, %v4914, %v4918
  %v4920 = vrot.slane %v4879, 1
  %v4921 = vsel %vm135, %v4916, %v4920
  %v4922 = vrot.slane %v4880, 1
  %v4923 = vsel %vm135, %v4918, %v4922
  %v4924 = vrot.slane %v4881, 1
  %v4925 = vsel %vm135, %v4920, %v4924
  %v4926 = vrot.slane %v4882, 1
  %v4927 = vsel %vm135, %v4922, %v4926
  %v4928 = vrot.slane %v4883, 1
  %v4929 = vsel %vm135, %v4924, %v4928
  %v4930 = vrot.slane %v4884, 1
  %v4931 = vsel %vm135, %v4926, %v4930
  %v4932 = vrot.slane %v4885, 1
  %v4933 = vsel %vm135, %v4928, %v4932
  %v4934 = vrot.slane %v4886, 1
  %v4935 = vsel %vm135, %v4930, %v4934
  %v4936 = vrot.slane %v4887, 1
  %v4937 = vsel %vm135, %v4932, %v4936
  %v4938 = vrot.slane %v4888, 1
  %v4939 = vsel %vm135, %v4934, %v4938
  %v4940 = vrot.slane %v4889, 1
  %v4941 = vsel %vm135, %v4936, %v4940
  %v4960 = vmax.f32 %v4872, %v4910
  %v4961 = vmax.f32 %v4873, %v4913
  %v4962 = vmax.f32 %v4874, %v4915
  %v4963 = vmax.f32 %v4875, %v4917
  %v4964 = vmax.f32 %v4876, %v4919
  %v4965 = vmax.f32 %v4877, %v4921
  %v4966 = vmax.f32 %v4878, %v4923
  %v4967 = vmax.f32 %v4879, %v4925
  %v4968 = vmax.f32 %v4880, %v4927
  %v4969 = vmax.f32 %v4881, %v4929
  %v4970 = vmax.f32 %v4882, %v4931
  %v4971 = vmax.f32 %v4883, %v4933
  %v4972 = vmax.f32 %v4884, %v4935
  %v4973 = vmax.f32 %v4885, %v4937
  %v4974 = vmax.f32 %v4886, %v4939
  %v4975 = vmax.f32 %v4887, %v4941
  %v4976 = vmax.f32 %v4888, %v4938
  %v4977 = vmax.f32 %v4889, %v4940
  %4996 = vrot.lane.b32.xlu0 %v4960, 104
  %v4997 = vpop.permute.xlu0 %4996
  %4998 = vrot.lane.b32.xlu0 %v4961, 104
  %v4999 = vpop.permute.xlu0 %4998
  %5000 = vrot.lane.b32.xlu0 %v4962, 104
  %v5001 = vpop.permute.xlu0 %5000
  %5002 = vrot.lane.b32.xlu0 %v4963, 104
  %v5003 = vpop.permute.xlu0 %5002
  %5004 = vrot.lane.b32.xlu0 %v4964, 104
  %v5005 = vpop.permute.xlu0 %5004
  %5006 = vrot.lane.b32.xlu0 %v4965, 104
  %v5007 = vpop.permute.xlu0 %5006
  %5008 = vrot.lane.b32.xlu0 %v4966, 104
  %v5009 = vpop.permute.xlu0 %5008
  %5010 = vrot.lane.b32.xlu0 %v4967, 104
  %v5011 = vpop.permute.xlu0 %5010
  %5012 = vrot.lane.b32.xlu0 %v4968, 104
  %v5013 = vpop.permute.xlu0 %5012
  %5014 = vrot.lane.b32.xlu0 %v4969, 104
  %v5015 = vpop.permute.xlu0 %5014
  %5016 = vrot.lane.b32.xlu0 %v4970, 104
  %v5017 = vpop.permute.xlu0 %5016
  %5018 = vrot.lane.b32.xlu0 %v4971, 104
  %v5019 = vpop.permute.xlu0 %5018
  %5020 = vrot.lane.b32.xlu0 %v4972, 104
  %v5021 = vpop.permute.xlu0 %5020
  %5022 = vrot.lane.b32.xlu0 %v4973, 104
  %v5023 = vpop.permute.xlu0 %5022
  %5024 = vrot.lane.b32.xlu0 %v4974, 104
  %v5025 = vpop.permute.xlu0 %5024
  %5026 = vrot.lane.b32.xlu0 %v4975, 104
  %v5027 = vpop.permute.xlu0 %5026
  %5028 = vrot.lane.b32.xlu0 %v4976, 104
  %v5029 = vpop.permute.xlu0 %5028
  %5030 = vrot.lane.b32.xlu0 %v4977, 104
  %v5031 = vpop.permute.xlu0 %5030
  %vm5032 = vcmask 850944
  %v5033 = vsel %vm5032, %v4997, %v4999
  %v5034 = vsel %vm5032, %v5001, %v5003
  %v5035 = vsel %vm5032, %v5005, %v5007
  %v5036 = vsel %vm5032, %v5009, %v5011
  %v5037 = vsel %vm5032, %v5013, %v5015
  %v5038 = vsel %vm5032, %v5017, %v5019
  %v5039 = vsel %vm5032, %v5021, %v5023
  %v5040 = vsel %vm5032, %v5025, %v5027
  %v5041 = vsel %vm5032, %v5029, %v5031
  %v5060 = vmax.f32 %v4960, %v5033
  %v5061 = vmax.f32 %v4961, %v4999
  %v5062 = vmax.f32 %v4962, %v5034
  %v5063 = vmax.f32 %v4963, %v5003
  %v5064 = vmax.f32 %v4964, %v5035
  %v5065 = vmax.f32 %v4965, %v5007
  %v5066 = vmax.f32 %v4966, %v5036
  %v5067 = vmax.f32 %v4967, %v5011
  %v5068 = vmax.f32 %v4968, %v5037
  %v5069 = vmax.f32 %v4969, %v5015
  %v5070 = vmax.f32 %v4970, %v5038
  %v5071 = vmax.f32 %v4971, %v5019
  %v5072 = vmax.f32 %v4972, %v5039
  %v5073 = vmax.f32 %v4973, %v5023
  %v5074 = vmax.f32 %v4974, %v5040
  %v5075 = vmax.f32 %v4975, %v5027
  %v5076 = vmax.f32 %v4976, %v5041
  %v5077 = vmax.f32 %v4977, %v5031
  %v5078 = vld [vmem:[%s11] sm:$0xff]
  %v5079 = vld [vmem:[%s11 + $0x8] sm:$0xff]
  %v5080 = vld [vmem:[%s11 + $0x10] sm:$0xff]
  %v5081 = vld [vmem:[%s11 + $0x18] sm:$0xff]
  %v5082 = vld [vmem:[%s11 + $0x20] sm:$0xff]
  %v5083 = vld [vmem:[%s11 + $0x28] sm:$0xff]
  %v5084 = vld [vmem:[%s11 + $0x30] sm:$0xff]
  %v5085 = vld [vmem:[%s11 + $0x38] sm:$0xff]
  %v5086 = vld [vmem:[%s11 + $0x40] sm:$0xff]
  %v5087 = vld [vmem:[%s11 + $0x48] sm:$0xff]
  %v5088 = vld [vmem:[%s11 + $0x50] sm:$0xff]
  %v5089 = vld [vmem:[%s11 + $0x58] sm:$0xff]
  %v5090 = vld [vmem:[%s11 + $0x60] sm:$0xff]
  %v5091 = vld [vmem:[%s11 + $0x68] sm:$0xff]
  %v5092 = vld [vmem:[%s11 + $0x70] sm:$0xff]
  %v5093 = vld [vmem:[%s11 + $0x78] sm:$0xff]
  %v5094 = vld [vmem:[%s11 + $0x80] sm:$0xff]
  %v5095 = vld [vmem:[%s11 + $0x88] sm:$0xff]
  %v5097 = vsel %vm4163, %v5061, 0
  %v5100 = vsel %vm4163, %v5063, 0
  %v5103 = vsel %vm4163, %v5065, 0
  %v5106 = vsel %vm4163, %v5067, 0
  %v5109 = vsel %vm4163, %v5069, 0
  %v5112 = vsel %vm4163, %v5071, 0
  %v5115 = vsel %vm4163, %v5073, 0
  %v5118 = vsel %vm4163, %v5075, 0
  %v5121 = vsel %vm4163, %v5077, 0
  %5123 = vmatpush.msra.mxu0 %v5093
  %5124 = vmatpush.msra.mxu0 %v5092
  %5125 = vmatpush.msra.mxu0 %v5091
  %5126 = vmatpush.msra.mxu0 %v5090
  %5127 = vmatpush.msra.mxu0 %v5089
  %5128 = vmatpush.msra.mxu0 %v5088
  %5129 = vmatpush.msra.mxu0 %v5087
  %5130 = vmatpush.msra.mxu0 %v5086
  %5131 = vmatpush.msra.mxu0 %v5085
  %5132 = vmatpush.msra.mxu0 %v5084
  %5133 = vmatpush.msra.mxu0 %v5083
  %5134 = vmatpush.msra.mxu0 %v5082
  %5135 = vmatpush.msra.mxu0 %v5081
  %5136 = vmatpush.msra.mxu0 %v5080
  %5137 = vmatpush.msra.mxu0 %v5079
  %5138 = vmatpush.msra.mxu0 %v5078
  %5139 = vmatmul.f32.gmra.mxu0 %v5060
  %v5140 = vpop.f32.mrf.mxu0
  %v5141 = vadd.f32 0.0, %v5140
  %5142 = vmatmul.f32.gmra.mxu0 %v5062
  %v5143 = vpop.f32.mrf.mxu0
  %v5144 = vadd.f32 0.0, %v5143
  %5145 = vmatmul.f32.gmra.mxu0 %v5064
  %v5146 = vpop.f32.mrf.mxu0
  %v5147 = vadd.f32 0.0, %v5146
  %5148 = vmatmul.f32.gmra.mxu0 %v5066
  %v5149 = vpop.f32.mrf.mxu0
  %v5150 = vadd.f32 0.0, %v5149
  %5151 = vmatmul.f32.gmra.mxu0 %v5068
  %v5152 = vpop.f32.mrf.mxu0
  %v5153 = vadd.f32 0.0, %v5152
  %5154 = vmatmul.f32.gmra.mxu0 %v5070
  %v5155 = vpop.f32.mrf.mxu0
  %v5156 = vadd.f32 0.0, %v5155
  %5157 = vmatmul.f32.gmra.mxu0 %v5072
  %v5158 = vpop.f32.mrf.mxu0
  %v5159 = vadd.f32 0.0, %v5158
  %5160 = vmatmul.f32.gmra.mxu0 %v5074
  %v5161 = vpop.f32.mrf.mxu0
  %v5162 = vadd.f32 0.0, %v5161
  %5163 = vmatmul.f32.gmra.mxu0 %v5076
  %v5164 = vpop.f32.mrf.mxu0
  %v5165 = vadd.f32 0.0, %v5164
  %5166 = vdwg.mxu0
  %5167 = vmatpush.msra.mxu0 0.0
  %5168 = vmatpush.msra.mxu0 0.0
  %5169 = vmatpush.msra.mxu0 0.0
  %5170 = vmatpush.msra.mxu0 0.0
  %5171 = vmatpush.msra.mxu0 0.0
  %5172 = vmatpush.msra.mxu0 0.0
  %5173 = vmatpush.msra.mxu0 0.0
  %5174 = vmatpush.msra.mxu0 0.0
  %5175 = vmatpush.msra.mxu0 0.0
  %5176 = vmatpush.msra.mxu0 0.0
  %5177 = vmatpush.msra.mxu0 0.0
  %5178 = vmatpush.msra.mxu0 0.0
  %5179 = vmatpush.msra.mxu0 0.0
  %5180 = vmatpush.msra.mxu0 0.0
  %5181 = vmatpush.msra.mxu0 %v5095
  %5182 = vmatpush.msra.mxu0 %v5094
  %5183 = vmatmul.f32.gmra.mxu0 %v5097
  %v5184 = vpop.f32.mrf.mxu0
  %v5185 = vadd.f32 %v5141, %v5184
  %5186 = vmatmul.f32.gmra.mxu0 %v5100
  %v5187 = vpop.f32.mrf.mxu0
  %v5188 = vadd.f32 %v5144, %v5187
  %5189 = vmatmul.f32.gmra.mxu0 %v5103
  %v5190 = vpop.f32.mrf.mxu0
  %v5191 = vadd.f32 %v5147, %v5190
  %5192 = vmatmul.f32.gmra.mxu0 %v5106
  %v5193 = vpop.f32.mrf.mxu0
  %v5194 = vadd.f32 %v5150, %v5193
  %5195 = vmatmul.f32.gmra.mxu0 %v5109
  %v5196 = vpop.f32.mrf.mxu0
  %v5197 = vadd.f32 %v5153, %v5196
  %5198 = vmatmul.f32.gmra.mxu0 %v5112
  %v5199 = vpop.f32.mrf.mxu0
  %v5200 = vadd.f32 %v5156, %v5199
  %5201 = vmatmul.f32.gmra.mxu0 %v5115
  %v5202 = vpop.f32.mrf.mxu0
  %v5203 = vadd.f32 %v5159, %v5202
  %5204 = vmatmul.f32.gmra.mxu0 %v5118
  %v5205 = vpop.f32.mrf.mxu0
  %v5206 = vadd.f32 %v5162, %v5205
  %5207 = vmatmul.f32.gmra.mxu0 %v5121
  %v5208 = vpop.f32.mrf.mxu0
  %v5209 = vadd.f32 %v5165, %v5208
  %5210 = vdwg.mxu0
  %v5211 = vld [vmem:[%s12] sm:$0xff]
  %v5212 = vld [vmem:[%s12 + $0x8] sm:$0xff]
  %v5213 = vld [vmem:[%s12 + $0x10] sm:$0xff]
  %v5214 = vld [vmem:[%s12 + $0x18] sm:$0xff]
  %v5215 = vld [vmem:[%s12 + $0x20] sm:$0xff]
  %v5216 = vld [vmem:[%s12 + $0x28] sm:$0xff]
  %v5217 = vld [vmem:[%s12 + $0x30] sm:$0xff]
  %v5218 = vld [vmem:[%s12 + $0x38] sm:$0xff]
  %v5219 = vld [vmem:[%s12 + $0x40] sm:$0xff]
  %vm5220 = vcmask 588800
  %v5222 = vsel %vm5220, %v5185, 0
  %v5225 = vsel %vm5220, %v5188, 0
  %v5228 = vsel %vm5220, %v5191, 0
  %v5231 = vsel %vm5220, %v5194, 0
  %v5234 = vsel %vm5220, %v5197, 0
  %v5237 = vsel %vm5220, %v5200, 0
  %v5240 = vsel %vm5220, %v5203, 0
  %v5243 = vsel %vm5220, %v5206, 0
  %v5246 = vsel %vm5220, %v5209, 0
  %5248 = vmatpush.msra.mxu0 0.0
  %5249 = vmatpush.msra.mxu0 0.0
  %5250 = vmatpush.msra.mxu0 0.0
  %5251 = vmatpush.msra.mxu0 0.0
  %5252 = vmatpush.msra.mxu0 0.0
  %5253 = vmatpush.msra.mxu0 0.0
  %5254 = vmatpush.msra.mxu0 0.0
  %5255 = vmatpush.msra.mxu0 %v5219
  %5256 = vmatpush.msra.mxu0 %v5218
  %5257 = vmatpush.msra.mxu0 %v5217
  %5258 = vmatpush.msra.mxu0 %v5216
  %5259 = vmatpush.msra.mxu0 %v5215
  %5260 = vmatpush.msra.mxu0 %v5214
  %5261 = vmatpush.msra.mxu0 %v5213
  %5262 = vmatpush.msra.mxu0 %v5212
  %5263 = vmatpush.msra.mxu0 %v5211
  %5264 = vmatmul.f32.gmra.mxu0 %v5222
  %v5265 = vpop.f32.mrf.mxu0
  %v5266 = vadd.f32 0.0, %v5265
  %5267 = vmatmul.f32.gmra.mxu0 %v5225
  %v5268 = vpop.f32.mrf.mxu0
  %v5269 = vadd.f32 0.0, %v5268
  %5270 = vmatmul.f32.gmra.mxu0 %v5228
  %v5271 = vpop.f32.mrf.mxu0
  %v5272 = vadd.f32 0.0, %v5271
  %5273 = vmatmul.f32.gmra.mxu0 %v5231
  %v5274 = vpop.f32.mrf.mxu0
  %v5275 = vadd.f32 0.0, %v5274
  %5276 = vmatmul.f32.gmra.mxu0 %v5234
  %v5277 = vpop.f32.mrf.mxu0
  %v5278 = vadd.f32 0.0, %v5277
  %5279 = vmatmul.f32.gmra.mxu0 %v5237
  %v5280 = vpop.f32.mrf.mxu0
  %v5281 = vadd.f32 0.0, %v5280
  %5282 = vmatmul.f32.gmra.mxu0 %v5240
  %v5283 = vpop.f32.mrf.mxu0
  %v5284 = vadd.f32 0.0, %v5283
  %5285 = vmatmul.f32.gmra.mxu0 %v5243
  %v5286 = vpop.f32.mrf.mxu0
  %v5287 = vadd.f32 0.0, %v5286
  %5288 = vmatmul.f32.gmra.mxu0 %v5246
  %v5289 = vpop.f32.mrf.mxu0
  %v5290 = vadd.f32 0.0, %v5289
  %5291 = vdwg.mxu0
  %v5292 = vld [vmem:[%s13] sm:$0xff]
  %s5293 = scalar_lea.vmem %s13, 8
  %v5294 = vld [vmem:[%s5293] sm:$0xff]
  %5304 = vrot.lane.b32.xlu0 %v5266, 96
  %v5305 = vpop.permute.xlu0 %5304
  %5306 = vrot.lane.b32.xlu0 %v5269, 96
  %v5307 = vpop.permute.xlu0 %5306
  %5308 = vrot.lane.b32.xlu0 %v5272, 96
  %v5309 = vpop.permute.xlu0 %5308
  %5310 = vrot.lane.b32.xlu0 %v5275, 96
  %v5311 = vpop.permute.xlu0 %5310
  %5312 = vrot.lane.b32.xlu0 %v5278, 96
  %v5313 = vpop.permute.xlu0 %5312
  %5314 = vrot.lane.b32.xlu0 %v5281, 96
  %v5315 = vpop.permute.xlu0 %5314
  %5316 = vrot.lane.b32.xlu0 %v5284, 96
  %v5317 = vpop.permute.xlu0 %5316
  %5318 = vrot.lane.b32.xlu0 %v5287, 96
  %v5319 = vpop.permute.xlu0 %5318
  %5320 = vrot.lane.b32.xlu0 %v5290, 96
  %v5321 = vpop.permute.xlu0 %5320
  %vm5330 = vcmask 580608
  %v5332 = vsel %vm5330, %v5294, 0
  %v5334 = vsel %vm135, %v5321, 0
  %5336 = vmatpush.msra.mxu0 0.0
  %5337 = vmatpush.msra.mxu0 0.0
  %5338 = vmatpush.msra.mxu0 0.0
  %5339 = vmatpush.msra.mxu0 0.0
  %5340 = vmatpush.msra.mxu0 0.0
  %5341 = vmatpush.msra.mxu0 0.0
  %5342 = vmatpush.msra.mxu0 0.0
  %5343 = vmatpush.msra.mxu0 %v5334
  %5344 = vmatpush.msra.mxu0 %v5319
  %5345 = vmatpush.msra.mxu0 %v5317
  %5346 = vmatpush.msra.mxu0 %v5315
  %5347 = vmatpush.msra.mxu0 %v5313
  %5348 = vmatpush.msra.mxu0 %v5311
  %5349 = vmatpush.msra.mxu0 %v5309
  %5350 = vmatpush.msra.mxu0 %v5307
  %5351 = vmatpush.msra.mxu0 %v5305
  %5352 = vmatmul.f32.gmra.mxu0 %v5332
  %v5353 = vpop.f32.mrf.mxu0
  %v5354 = vadd.f32 0.0, %v5353
  %5355 = vdwg.mxu0
  %v5357 = vsel %vm5330, %v5292, 0
  %v5359 = vsel %vm135, %v5290, 0
  %5361 = vmatpush.msra.mxu0 0.0
  %5362 = vmatpush.msra.mxu0 0.0
  %5363 = vmatpush.msra.mxu0 0.0
  %5364 = vmatpush.msra.mxu0 0.0
  %5365 = vmatpush.msra.mxu0 0.0
  %5366 = vmatpush.msra.mxu0 0.0
  %5367 = vmatpush.msra.mxu0 0.0
  %5368 = vmatpush.msra.mxu0 %v5359
  %5369 = vmatpush.msra.mxu0 %v5287
  %5370 = vmatpush.msra.mxu0 %v5284
  %5371 = vmatpush.msra.mxu0 %v5281
  %5372 = vmatpush.msra.mxu0 %v5278
  %5373 = vmatpush.msra.mxu0 %v5275
  %5374 = vmatpush.msra.mxu0 %v5272
  %5375 = vmatpush.msra.mxu0 %v5269
  %5376 = vmatpush.msra.mxu0 %v5266
  %5377 = vmatmul.f32.gmra.mxu0 %v5357
  %v5378 = vpop.f32.mrf.mxu0
  %v5379 = vadd.f32 %v5354, %v5378
  %5380 = vdwg.mxu0
  %s5381 = scalar_lea.vmem %s13, 16
  %v5382 = vld [vmem:[%s5381] sm:$0xff]
  %5383 = vrot.lane.b32.xlu0 %v5266, 64
  %v5384 = vpop.permute.xlu0 %5383
  %5385 = vrot.lane.b32.xlu0 %v5269, 64
  %v5386 = vpop.permute.xlu0 %5385
  %5387 = vrot.lane.b32.xlu0 %v5272, 64
  %v5388 = vpop.permute.xlu0 %5387
  %5389 = vrot.lane.b32.xlu0 %v5275, 64
  %v5390 = vpop.permute.xlu0 %5389
  %5391 = vrot.lane.b32.xlu0 %v5278, 64
  %v5392 = vpop.permute.xlu0 %5391
  %5393 = vrot.lane.b32.xlu0 %v5281, 64
  %v5394 = vpop.permute.xlu0 %5393
  %5395 = vrot.lane.b32.xlu0 %v5284, 64
  %v5396 = vpop.permute.xlu0 %5395
  %5397 = vrot.lane.b32.xlu0 %v5287, 64
  %v5398 = vpop.permute.xlu0 %5397
  %5399 = vrot.lane.b32.xlu0 %v5290, 64
  %v5400 = vpop.permute.xlu0 %5399
  %v5410 = vsel %vm5330, %v5382, 0
  %v5412 = vsel %vm135, %v5400, 0
  %5414 = vmatpush.msra.mxu0 0.0
  %5415 = vmatpush.msra.mxu0 0.0
  %5416 = vmatpush.msra.mxu0 0.0
  %5417 = vmatpush.msra.mxu0 0.0
  %5418 = vmatpush.msra.mxu0 0.0
  %5419 = vmatpush.msra.mxu0 0.0
  %5420 = vmatpush.msra.mxu0 0.0
  %5421 = vmatpush.msra.mxu0 %v5412
  %5422 = vmatpush.msra.mxu0 %v5398
  %5423 = vmatpush.msra.mxu0 %v5396
  %5424 = vmatpush.msra.mxu0 %v5394
  %5425 = vmatpush.msra.mxu0 %v5392
  %5426 = vmatpush.msra.mxu0 %v5390
  %5427 = vmatpush.msra.mxu0 %v5388
  %5428 = vmatpush.msra.mxu0 %v5386
  %5429 = vmatpush.msra.mxu0 %v5384
  %5430 = vmatmul.f32.gmra.mxu0 %v5410
  %v5431 = vpop.f32.mrf.mxu0
  %v5432 = vadd.f32 0.0, %v5431
  %5433 = vdwg.mxu0
  %v5434 = vadd.f32 %v5379, %v5432
  %v5435 = vld [vmem:[%s14] sm:$0x1]
  %v5437 = vperm.slane %v5435, 0
  %v5439 = vadd.f32 %v5434, %v5437
  %v5440 = vmax.f32 %v5439, 0.0
  %v5441 = vld [vmem:[%s15] sm:$0xff]
  %v5442 = vld [vmem:[%s15 + $0x8] sm:$0xff]
  %v5443 = vld [vmem:[%s15 + $0x10] sm:$0xff]
  %v5444 = vld [vmem:[%s15 + $0x18] sm:$0xff]
  %v5445 = vld [vmem:[%s16] sm:$0x1]
  %v5447 = vperm.slane %v5445, 0
  %vm5449 = vcmask 261120
  %v5451 = vsel %vm5449, %v5440, 0
  %5453 = vmatpush.msra.mxu0 0.0
  %5454 = vmatpush.msra.mxu0 0.0
  %5455 = vmatpush.msra.mxu0 0.0
  %5456 = vmatpush.msra.mxu0 0.0
  %5457 = vmatpush.msra.mxu0 0.0
  %5458 = vmatpush.msra.mxu0 0.0
  %5459 = vmatpush.msra.mxu0 0.0
  %5460 = vmatpush.msra.mxu0 0.0
  %5461 = vmatpush.msra.mxu0 0.0
  %5462 = vmatpush.msra.mxu0 0.0
  %5463 = vmatpush.msra.mxu0 0.0
  %5464 = vmatpush.msra.mxu0 0.0
  %5465 = vmatpush.msra.mxu0 %v5444
  %5466 = vmatpush.msra.mxu0 %v5443
  %5467 = vmatpush.msra.mxu0 %v5442
  %5468 = vmatpush.msra.mxu0 %v5441
  %5469 = vmatmul.f32.gmra.mxu0 %v5451
  %v5470 = vpop.f32.mrf.mxu0
  %v5471 = vadd.f32 %v5447, %v5470
  %5472 = vdwg.mxu0
  %5473 = vst [vmem:[%s17] sm:$0xff] %v5471
  // Predicated region
  $region70: #{mnist_cnn_forward.1} parent=0 // pred_check
    _
  $region71: #{mnist_cnn_forward.1} parent=0 // pred_check_branch
    %5475 = sbr.rel (0) target = $region73
  $region72: #{mnist_cnn_forward.1} parent=0 // pred_region
    _
  $region73: #{mnist_cnn_forward.1} parent=0 // pred_fallthru
    _
  // Predicated region
  $region74: #{mnist_cnn_forward.1} parent=0 // pred_check
    _
  $region75: #{mnist_cnn_forward.1} parent=0 // pred_check_branch
    %5477 = sbr.rel (0) target = $region77
  $region76: #{mnist_cnn_forward.1} parent=0 // pred_region
    _
  $region77: #{mnist_cnn_forward.1} parent=0 // pred_fallthru
    _

</llo_original>
